<compile_context>
chip_gen: v5e
topology: v5e:2x2
jax: 0.10.0
libtpu: 0.0.40
codegen_flags: <defaults>
</compile_context>

<pallas_src>
import jax
import jax.numpy as jnp
import numpy as np
from jax.experimental import pallas as pl
from jax.experimental.pallas import tpu as pltpu


def st_gcn_forward(x, A, params, *, interpret=False):
    """x: (N, Cin, T, V) float32 (PyTorch NCHW layout), A: (K, V, V)."""
    N, Cin, T, V = x.shape
    K = A.shape[0]
    wg, bg = params['wg'], params['bg']
    wt, bt = params['wt'], params['bt']
    KC = wg.shape[0]
    Cout = KC // K
    Kt = wt.shape[0]
    pad = (Kt - 1) // 2
    assert Cin == Cout, "identity-residual config requires in_channels == out_channels"

    f32 = jnp.float32
    bf16 = jnp.bfloat16
    NT = N * T
    CV = Cout * V
    CinV = Cin * V

    # ---- fold eval-mode BatchNorm into per-channel scale/shift ----
    eps = 1e-5
    s1 = params['g1'] / jnp.sqrt(params['v1'] + eps)
    h1 = params['b1'] - params['m1'] * s1
    s2 = params['g2'] / jnp.sqrt(params['v2'] + eps)
    h2 = params['b2'] - params['m2'] * s2

    # ---- fuse 1x1 conv + adjacency contraction + BN1 into one matrix ----
    # M[(ci,v),(co,w)] = sum_k wg[k*Cout+co, ci] * A[k, v, w] * s1[co]
    wg3 = wg.reshape(K, Cout, Cin)
    M = jnp.einsum('koc,kvw->cvow', wg3, A) * s1[None, None, :, None]
    M = M.reshape(CinV, CV).astype(bf16)
    bg3 = bg.reshape(K, Cout)
    b1v = (jnp.einsum('ko,kvw->ow', bg3, A) * s1[:, None] + h1[:, None])
    b1v = b1v.reshape(1, CV).astype(f32)

    # ---- fuse temporal (Kt x 1) conv + BN2 into one im2col matrix ----
    # Wt[(dt,ci,v),(co,w)] = wt[dt, co, ci] * s2[co] * delta(v, w)
    wt_s = wt * s2[None, :, None]
    Wt = jnp.einsum('doc,vw->dcvow', wt_s, jnp.eye(V, dtype=f32))
    Wt = Wt.reshape(Kt * CV, CV).astype(bf16)
    b2v = jnp.broadcast_to((bt * s2 + h2)[:, None], (Cout, V)).reshape(1, CV)
    b2v = b2v.astype(f32)

    # ---- lane-dense input layout: (N*T, Cin*V), cast ONCE to bf16 outside ----
    x_flat = jnp.transpose(x, (0, 2, 1, 3)).reshape(NT, CinV).astype(bf16)

    # ---- row tile: whole T-sequences per block, rows % 8 == 0, ~256 rows ----
    def _pick_row_tile(target_rows=256):
        best = N                      # fallback: grid of 1, full-extent block
        for seqs in range(1, N + 1):
            if N % seqs:
                continue
            rows = seqs * T
            if rows % 8:
                continue
            best = seqs
            if rows >= target_rows:
                break
        return best * T

    TM = _pick_row_tile()
    grid = (NT // TM,)

    def kernel(x_ref, m_ref, b1_ref, wt_ref, b2_ref, o_ref):
        rows = x_ref.shape[0]
        x_b = x_ref[...]                                     # (rows, Cin*V) bf16
        x_f = x_b.astype(f32)                                # f32 residual

        # gcn 1x1 conv + K-way graph contraction + BN1 as ONE matmul, then ReLU
        z = jnp.dot(x_b, m_ref[...],
                    preferred_element_type=jnp.float32) + b1_ref[...]
        h = jnp.maximum(z, 0.0)                              # (rows, CV) f32
        h_b = h.astype(bf16)

        # temporal index of each row within its sequence (block = whole seqs,
        # blocks start on sequence boundaries) — replaces the HBM mask operand.
        t_row = jax.lax.broadcasted_iota(jnp.int32, (rows, 1), 0) % T

        # temporal (Kt x 1) conv + BN2 as a Kt-step accumulation of (CV, CV)
        # matmuls; start from the fused bias + identity residual.
        acc = b2_ref[...] + x_f
        for dt in range(Kt):
            s = dt - pad
            if s == 0:
                hs_b = h_b                                   # always valid rows
            else:
                hs = pltpu.roll(h, shift=(-s) % rows, axis=0)     # XLU, f32
                valid = jnp.logical_and(t_row + s >= 0, t_row + s < T)
                hs_b = jnp.where(valid, hs.astype(bf16), jnp.zeros((), bf16))
            acc = acc + jnp.dot(hs_b, wt_ref[dt * CV:(dt + 1) * CV, :],
                                preferred_element_type=jnp.float32)

        # final ReLU (f32 epilogue), lane-dense store (CV multiple of 128 here)
        o_ref[...] = jnp.maximum(acc, 0.0).astype(o_ref.dtype)

    in_specs = [
        pl.BlockSpec((TM, CinV), lambda i: (i, 0)),          # x: row-tiled
        pl.BlockSpec((CinV, CV), lambda i: (0, 0)),          # M: resident
        pl.BlockSpec((1, CV), lambda i: (0, 0)),             # b1: resident
        pl.BlockSpec((Kt * CV, CV), lambda i: (0, 0)),       # Wt: resident
        pl.BlockSpec((1, CV), lambda i: (0, 0)),             # b2: resident
    ]
    out_specs = pl.BlockSpec((TM, CV), lambda i: (i, 0))

    # VMEM budget: double-buffered row tiles + resident weights + f32 temps.
    est = (2 * (TM * CinV * 2 + TM * CV * 4)
           + 2 * (CinV * CV * 2 + Kt * CV * CV * 2 + 2 * CV * 4)
           + 8 * TM * CV * 4)
    vmem_limit = int(min(max(2 * est, 32 << 20), 60 << 20))   # portable to v7x

    cost = pl.CostEstimate(
        flops=2 * NT * CV * (CinV + Kt * CV) + 6 * NT * CV,
        transcendentals=0,
        bytes_accessed=(NT * CinV * 2 + NT * CV * 4
                        + CinV * CV * 2 + Kt * CV * CV * 2 + 2 * CV * 4),
    )

    out_flat = pl.pallas_call(
        kernel,
        out_shape=jax.ShapeDtypeStruct((NT, CV), f32),
        grid=grid,
        in_specs=in_specs,
        out_specs=out_specs,
        compiler_params=pltpu.CompilerParams(
            dimension_semantics=("parallel",),
            vmem_limit_bytes=vmem_limit),
        cost_estimate=cost,
        interpret=interpret,
    )(x_flat, M, b1v, Wt, b2v)

    y = jnp.transpose(out_flat.reshape(N, T, Cout, V), (0, 2, 1, 3))  # (N,Cout,T,V)
    return y, A


def st_gcn_reference(x, A, params):
    """Pure-JAX mirror of the PyTorch forward (eval-mode BN, p=0 dropout)."""
    eps = 1e-5
    K = A.shape[0]
    wg, bg = params['wg'], params['bg']
    KC = wg.shape[0]
    Cout = KC // K
    N, Cin, T, V = x.shape
    wt, bt = params['wt'], params['bt']
    Kt = wt.shape[0]
    pad = (Kt - 1) // 2

    # gcn: 1x1 conv then einsum('nkctv,kvw->nctw')
    y = jnp.einsum('oc,nctv->notv', wg, x) + bg[None, :, None, None]
    y = y.reshape(N, K, Cout, T, V)
    z = jnp.einsum('nkctv,kvw->nctw', y, A)

    def bn(t, g, b, m, v):
        return (t - m[None, :, None, None]) / jnp.sqrt(v + eps)[None, :, None, None] \
               * g[None, :, None, None] + b[None, :, None, None]

    h = jnp.maximum(bn(z, params['g1'], params['b1'], params['m1'], params['v1']), 0.0)
    hp = jnp.pad(h, ((0, 0), (0, 0), (pad, pad), (0, 0)))
    out = bt[None, :, None, None]
    for dt in range(Kt):
        out = out + jnp.einsum('oc,nctv->notv', wt[dt], hp[:, :, dt:dt + T, :])
    out = bn(out, params['g2'], params['b2'], params['m2'], params['v2'])
    out = out + x                                   # identity residual
    return jnp.maximum(out, 0.0), A


if __name__ == "__main__":
    N, C, T, V = 8, 16, 64, 16         # in_channels == out_channels == 16
    K, Kt = 3, 3                       # kernel_size = (temporal Kt=3, spatial K=3)
    f32 = jnp.float32

    keys = jax.random.split(jax.random.PRNGKey(0), 16)
    x = jax.random.normal(keys[0], (N, C, T, V), f32)
    A = jax.random.normal(keys[1], (K, V, V), f32) * 0.3

    params = dict(
        wg=jax.random.normal(keys[2], (K * C, C), f32) * 0.1,   # conv (K*C, C, 1, 1)
        bg=jax.random.normal(keys[3], (K * C,), f32) * 0.1,
        wt=jax.random.normal(keys[4], (Kt, C, C), f32) * 0.1,   # conv (C, C, Kt, 1) as [dt, co, ci]
        bt=jax.random.normal(keys[5], (C,), f32) * 0.1,
        g1=1.0 + 0.1 * jax.random.normal(keys[6], (C,), f32),
        b1=0.1 * jax.random.normal(keys[7], (C,), f32),
        m1=0.1 * jax.random.normal(keys[8], (C,), f32),
        v1=1.0 + 0.5 * jnp.abs(jax.random.normal(keys[9], (C,), f32)),
        g2=1.0 + 0.1 * jax.random.normal(keys[10], (C,), f32),
        b2=0.1 * jax.random.normal(keys[11], (C,), f32),
        m2=0.1 * jax.random.normal(keys[12], (C,), f32),
        v2=1.0 + 0.5 * jnp.abs(jax.random.normal(keys[13], (C,), f32)),
    )

    y_kernel, A_out = jax.jit(st_gcn_forward)(x, A, params)
    y_kernel = jax.block_until_ready(y_kernel)

    y_ref, _ = st_gcn_reference(x, A, params)
    # bf16 input stream + bf16 matmul operands (f32 accumulation) -> ~1e-3 rel
    # error; tolerance sized accordingly.
    np.testing.assert_allclose(np.asarray(y_kernel), np.asarray(y_ref),
                               rtol=2e-2, atol=3e-2)
    print("KERNEL_OK")
</pallas_src>

<mosaic_0001>
module attributes {stable_mosaic.version = 11 : i64} {
  func.func @kernel(%arg0: i32, %arg1: memref<256x256xbf16, #tpu.memory_space<vmem>>, %arg2: memref<256x256xbf16, #tpu.memory_space<vmem>>, %arg3: memref<1x256xf32, #tpu.memory_space<vmem>>, %arg4: memref<768x256xbf16, #tpu.memory_space<vmem>>, %arg5: memref<1x256xf32, #tpu.memory_space<vmem>>, %arg6: memref<256x256xf32, #tpu.memory_space<vmem>>) attributes {dimension_semantics = [#tpu.dimension_semantics<parallel>], iteration_bounds = array<i64: 2>, scalar_prefetch = 0 : i64, scratch_operands = 0 : i64, tpu.core_type = #tpu.core_type<tc>, window_params = [{transform_indices = @transform_0, window_bounds = array<i64: 256, 256>}, {pipeline_mode = #tpu.pipeline_mode<synchronous>, transform_indices = @transform_1, window_bounds = array<i64: 256, 256>}, {pipeline_mode = #tpu.pipeline_mode<synchronous>, transform_indices = @transform_2, window_bounds = array<i64: 1, 256>}, {pipeline_mode = #tpu.pipeline_mode<synchronous>, transform_indices = @transform_3, window_bounds = array<i64: 768, 256>}, {pipeline_mode = #tpu.pipeline_mode<synchronous>, transform_indices = @transform_4, window_bounds = array<i64: 1, 256>}, {transform_indices = @transform_5, window_bounds = array<i64: 256, 256>}]} {
    %c0 = arith.constant 0 : index
    %c0_0 = arith.constant 0 : index
    %0 = vector.load %arg1[%c0, %c0_0] : memref<256x256xbf16, #tpu.memory_space<vmem>>, vector<256x256xbf16>
    %1 = arith.extf %0 : vector<256x256xbf16> to vector<256x256xf32>
    %c0_1 = arith.constant 0 : index
    %c0_2 = arith.constant 0 : index
    %2 = vector.load %arg2[%c0_1, %c0_2] : memref<256x256xbf16, #tpu.memory_space<vmem>>, vector<256x256xbf16>
    %cst = arith.constant dense<0.000000e+00> : vector<256x256xf32>
    %3 = tpu.matmul %0, %2, %cst {dimension_numbers = #tpu.dot_dimension_numbers<[1], [0], [0], [1], [0, 0, 1, 1], [], []>} : vector<256x256xbf16>, vector<256x256xbf16>, vector<256x256xf32> -> vector<256x256xf32>
    %c0_3 = arith.constant 0 : index
    %c0_4 = arith.constant 0 : index
    %4 = vector.load %arg3[%c0_3, %c0_4] : memref<1x256xf32, #tpu.memory_space<vmem>>, vector<1x256xf32>
    %5 = vector.broadcast %4 : vector<1x256xf32> to vector<256x256xf32>
    %6 = arith.addf %3, %5 : vector<256x256xf32>
    %cst_5 = arith.constant 0.000000e+00 : f32
    %7 = vector.broadcast %cst_5 : f32 to vector<256x256xf32>
    %8 = arith.maximumf %6, %7 : vector<256x256xf32>
    %9 = arith.truncf %8 : vector<256x256xf32> to vector<256x256xbf16>
    %10 = tpu.iota {dimensions = array<i32: 0>} : vector<256x1xi32>
    %c64_i32 = arith.constant 64 : i32
    %c0_i32 = arith.constant 0 : i32
    %11 = arith.cmpi eq, %c64_i32, %c0_i32 : i32
    %c1_i32 = arith.constant 1 : i32
    %12 = arith.select %11, %c1_i32, %c64_i32 : i32
    %13 = vector.broadcast %12 : i32 to vector<256x1xi32>
    %14 = arith.remsi %10, %13 : vector<256x1xi32>
    %c0_i32_6 = arith.constant 0 : i32
    %15 = vector.broadcast %c0_i32_6 : i32 to vector<256x1xi32>
    %16 = arith.cmpi ne, %14, %15 : vector<256x1xi32>
    %c0_i32_7 = arith.constant 0 : i32
    %17 = vector.broadcast %c0_i32_7 : i32 to vector<256x1xi32>
    %18 = arith.cmpi slt, %14, %17 : vector<256x1xi32>
    %c0_i32_8 = arith.constant 0 : i32
    %19 = arith.cmpi slt, %12, %c0_i32_8 : i32
    %20 = vector.broadcast %19 : i1 to vector<256x1xi1>
    %21 = vector.broadcast %20 : vector<256x1xi1> to vector<256x1xi1>
    %22 = arith.xori %18, %21 : vector<256x1xi1>
    %23 = arith.andi %22, %16 : vector<256x1xi1>
    %24 = vector.broadcast %12 : i32 to vector<256x1xi32>
    %25 = arith.addi %14, %24 : vector<256x1xi32>
    %26 = arith.select %23, %25, %14 : vector<256x1xi1>, vector<256x1xi32>
    %c0_9 = arith.constant 0 : index
    %c0_10 = arith.constant 0 : index
    %27 = vector.load %arg5[%c0_9, %c0_10] : memref<1x256xf32, #tpu.memory_space<vmem>>, vector<1x256xf32>
    %28 = vector.broadcast %27 : vector<1x256xf32> to vector<256x256xf32>
    %29 = arith.addf %28, %1 : vector<256x256xf32>
    %c1_i32_11 = arith.constant 1 : i32
    %30 = tpu.dynamic_rotate %8 by %c1_i32_11 dim 0 : vector<256x256xf32>, i32 -> vector<256x256xf32>
    %c-1_i32 = arith.constant -1 : i32
    %31 = vector.broadcast %c-1_i32 : i32 to vector<256x1xi32>
    %32 = arith.addi %26, %31 : vector<256x1xi32>
    %c0_i32_12 = arith.constant 0 : i32
    %33 = vector.broadcast %c0_i32_12 : i32 to vector<256x1xi32>
    %34 = arith.cmpi sge, %32, %33 : vector<256x1xi32>
    %c-1_i32_13 = arith.constant -1 : i32
    %35 = vector.broadcast %c-1_i32_13 : i32 to vector<256x1xi32>
    %36 = arith.addi %26, %35 : vector<256x1xi32>
    %c64_i32_14 = arith.constant 64 : i32
    %37 = vector.broadcast %c64_i32_14 : i32 to vector<256x1xi32>
    %38 = arith.cmpi slt, %36, %37 : vector<256x1xi32>
    %39 = arith.andi %34, %38 : vector<256x1xi1>
    %40 = arith.truncf %30 : vector<256x256xf32> to vector<256x256xbf16>
    %cst_15 = arith.constant 0.000000e+00 : bf16
    %41 = vector.shape_cast %39 : vector<256x1xi1> to vector<256x1xi1>
    %42 = vector.broadcast %41 : vector<256x1xi1> to vector<256x256xi1>
    %43 = vector.broadcast %cst_15 : bf16 to vector<256x256xbf16>
    %44 = arith.select %42, %40, %43 : vector<256x256xi1>, vector<256x256xbf16>
    %c0_16 = arith.constant 0 : index
    %c0_17 = arith.constant 0 : index
    %45 = vector.load %arg4[%c0_16, %c0_17] : memref<768x256xbf16, #tpu.memory_space<vmem>>, vector<256x256xbf16>
    %cst_18 = arith.constant dense<0.000000e+00> : vector<256x256xf32>
    %46 = tpu.matmul %44, %45, %cst_18 {dimension_numbers = #tpu.dot_dimension_numbers<[1], [0], [0], [1], [0, 0, 1, 1], [], []>} : vector<256x256xbf16>, vector<256x256xbf16>, vector<256x256xf32> -> vector<256x256xf32>
    %47 = arith.addf %29, %46 : vector<256x256xf32>
    %c256 = arith.constant 256 : index
    %c0_19 = arith.constant 0 : index
    %48 = vector.load %arg4[%c256, %c0_19] : memref<768x256xbf16, #tpu.memory_space<vmem>>, vector<256x256xbf16>
    %cst_20 = arith.constant dense<0.000000e+00> : vector<256x256xf32>
    %49 = tpu.matmul %9, %48, %cst_20 {dimension_numbers = #tpu.dot_dimension_numbers<[1], [0], [0], [1], [0, 0, 1, 1], [], []>} : vector<256x256xbf16>, vector<256x256xbf16>, vector<256x256xf32> -> vector<256x256xf32>
    %50 = arith.addf %47, %49 : vector<256x256xf32>
    %c255_i32 = arith.constant 255 : i32
    %51 = tpu.dynamic_rotate %8 by %c255_i32 dim 0 : vector<256x256xf32>, i32 -> vector<256x256xf32>
    %c1_i32_21 = arith.constant 1 : i32
    %52 = vector.broadcast %c1_i32_21 : i32 to vector<256x1xi32>
    %53 = arith.addi %26, %52 : vector<256x1xi32>
    %c0_i32_22 = arith.constant 0 : i32
    %54 = vector.broadcast %c0_i32_22 : i32 to vector<256x1xi32>
    %55 = arith.cmpi sge, %53, %54 : vector<256x1xi32>
    %c1_i32_23 = arith.constant 1 : i32
    %56 = vector.broadcast %c1_i32_23 : i32 to vector<256x1xi32>
    %57 = arith.addi %26, %56 : vector<256x1xi32>
    %c64_i32_24 = arith.constant 64 : i32
    %58 = vector.broadcast %c64_i32_24 : i32 to vector<256x1xi32>
    %59 = arith.cmpi slt, %57, %58 : vector<256x1xi32>
    %60 = arith.andi %55, %59 : vector<256x1xi1>
    %61 = arith.truncf %51 : vector<256x256xf32> to vector<256x256xbf16>
    %cst_25 = arith.constant 0.000000e+00 : bf16
    %62 = vector.shape_cast %60 : vector<256x1xi1> to vector<256x1xi1>
    %63 = vector.broadcast %62 : vector<256x1xi1> to vector<256x256xi1>
    %64 = vector.broadcast %cst_25 : bf16 to vector<256x256xbf16>
    %65 = arith.select %63, %61, %64 : vector<256x256xi1>, vector<256x256xbf16>
    %c512 = arith.constant 512 : index
    %c0_26 = arith.constant 0 : index
    %66 = vector.load %arg4[%c512, %c0_26] : memref<768x256xbf16, #tpu.memory_space<vmem>>, vector<256x256xbf16>
    %cst_27 = arith.constant dense<0.000000e+00> : vector<256x256xf32>
    %67 = tpu.matmul %65, %66, %cst_27 {dimension_numbers = #tpu.dot_dimension_numbers<[1], [0], [0], [1], [0, 0, 1, 1], [], []>} : vector<256x256xbf16>, vector<256x256xbf16>, vector<256x256xf32> -> vector<256x256xf32>
    %68 = arith.addf %50, %67 : vector<256x256xf32>
    %cst_28 = arith.constant 0.000000e+00 : f32
    %69 = vector.broadcast %cst_28 : f32 to vector<256x256xf32>
    %70 = arith.maximumf %68, %69 : vector<256x256xf32>
    %c0_29 = arith.constant 0 : index
    %c0_30 = arith.constant 0 : index
    %71 = vector.load %arg6[%c0_29, %c0_30] : memref<256x256xf32, #tpu.memory_space<vmem>>, vector<256x256xf32>
    tpu.vector_store %arg6[%c0_29, %c0_30], %70 {strides = array<i32>} : memref<256x256xf32, #tpu.memory_space<vmem>>, vector<256x256xf32>,
    return
  }
  func.func @transform_0(%arg0: i32) -> (i32, i32) {
    %c0_i32 = arith.constant 0 : i32
    %c0_i32_0 = arith.constant 0 : i32
    return %arg0, %c0_i32 : i32, i32
  }
  func.func @transform_1(%arg0: i32) -> (i32, i32) {
    %c0_i32 = arith.constant 0 : i32
    %c0_i32_0 = arith.constant 0 : i32
    %c0_i32_1 = arith.constant 0 : i32
    return %c0_i32, %c0_i32_0 : i32, i32
  }
  func.func @transform_2(%arg0: i32) -> (i32, i32) {
    %c0_i32 = arith.constant 0 : i32
    %c0_i32_0 = arith.constant 0 : i32
    %c0_i32_1 = arith.constant 0 : i32
    return %c0_i32, %c0_i32_0 : i32, i32
  }
  func.func @transform_3(%arg0: i32) -> (i32, i32) {
    %c0_i32 = arith.constant 0 : i32
    %c0_i32_0 = arith.constant 0 : i32
    %c0_i32_1 = arith.constant 0 : i32
    return %c0_i32, %c0_i32_0 : i32, i32
  }
  func.func @transform_4(%arg0: i32) -> (i32, i32) {
    %c0_i32 = arith.constant 0 : i32
    %c0_i32_0 = arith.constant 0 : i32
    %c0_i32_1 = arith.constant 0 : i32
    return %c0_i32, %c0_i32_0 : i32, i32
  }
  func.func @transform_5(%arg0: i32) -> (i32, i32) {
    %c0_i32 = arith.constant 0 : i32
    %c0_i32_0 = arith.constant 0 : i32
    return %arg0, %c0_i32 : i32, i32
  }
}

</mosaic_0001>

<llo_original>
// kernel: st_gcn_forward.1
$region0: #{st_gcn_forward.1}
  #allocation0 [shape = 'u32[]', space=smem, size = 0x4, offset = 0x4, fixed_abs, tag = 'smem constant byte address 0x4 - core index']
  #allocation1 [shape = 'u32[72,128]{1,0:T(1,128)}', space=vmem, size = 0x9000, scoped, tag = 'internal scratch']
  %s0 = inlined_call_operand.vmem [shape: bf16[512,256], index: 0, kind: input, shape index: {}]
  %s1 = inlined_call_operand.vmem [shape: bf16[256,256], index: 1, kind: input, shape index: {}]
  %s2 = inlined_call_operand.vmem [shape: f32[1,256], index: 2, kind: input, shape index: {}]
  %s3 = inlined_call_operand.vmem [shape: bf16[768,256], index: 3, kind: input, shape index: {}]
  %s4 = inlined_call_operand.vmem [shape: f32[1,256], index: 4, kind: input, shape index: {}]
  %s5 = inlined_call_operand.vmem [shape: f32[512,256], index: 5, kind: output, shape index: {}]
  %s6 = sld [smem:[#allocation0]]
  $region53: #{st_gcn_forward.1} parent=0
    _
  %s8 = ssub.s32 1, %s6
  %s9 = scalar_select 0, %s8, %s6
  loop: start=0, step=1, limit=4
  $region2: #{st_gcn_forward.1} parent=0 // loop_pre_header
    _
  $region3: #{st_gcn_forward.1} parent=0 // loop_header
    %s11 = sphi 0, %s15
    %p12 = scmp.ge.s32.totalorder %s11, 4
    %s21 = sphi 0, %s23
    %s24 = sphi 0, %s21
    %s25 = sphi 0, %s24
    %s41 = sphi 0, %s25
    %s45 = sphi 0, %s45
    %s47 = sphi 0, %s45
    %s48 = sphi 0, %s47
    %s62 = sphi 0, %s48
    %s66 = sphi 0, %s66
    %s68 = sphi 0, %s66
    %s69 = sphi 0, %s68
    %s83 = sphi 0, %s69
    %s87 = sphi 0, %s87
    %s89 = sphi 0, %s87
    %s90 = sphi 0, %s89
    %s104 = sphi 0, %s90
    %s108 = sphi 0, %s108
    %s110 = sphi 0, %s108
    %s111 = sphi 0, %s110
    %s125 = sphi 0, %s111
    %s131 = sphi 0, %s133
    %s134 = sphi 0, %s131
    %s135 = sphi 0, %s134
    %s151 = sphi 0, %s135
  $region4: #{st_gcn_forward.1} parent=0 // loop_header_branch
    %14 = sbr.rel (%p12) target = $region8
  $region5: #{st_gcn_forward.1} parent=0 // loop_body
    %s16 = ssub.s32 %s11, 1
    %s17 = ssub.s32 %s11, 2
    %s18 = sadd.s32 %s11, 1
    %s19 = ssub.s32 %s11, %s18
    %p20 = scmp.eq.s32.totalorder %s19, 0
    %s22 = sadd.s32 %s21, 1
    %s23 = scalar_select %p20, %s21, %s22
    %p26 = pneg %p20
    %p27 = scmp.eq.s32.totalorder %s11, 1
    %p28 = por %p26, %p27
    %p29 = scmp.ne.s32.totalorder %s21, %s24
    %p30 = scmp.eq.s32.totalorder %s11, 0
    %p31 = por %p29, %p30
    %p32 = scmp.ne.s32.totalorder %s21, %s24
    %p33 = scmp.eq.s32.totalorder %s16, 1
    %p34 = por %p32, %p33
    %p35 = scmp.ne.s32.totalorder %s24, %s25
    %p36 = scmp.eq.s32.totalorder %s16, 0
    %p37 = por %p35, %p36
    %p38 = scmp.ne.s32.totalorder %s24, %s25
    %p39 = scmp.eq.s32.totalorder %s17, 1
    %p40 = por %p38, %p39
    %p42 = scmp.ne.s32.totalorder %s25, %s41
    %p43 = scmp.eq.s32.totalorder %s17, 0
    %p44 = por %p42, %p43
    %s46 = sadd.s32 %s45, 1
    %p49 = scmp.eq.s32.totalorder %s11, 1
    %p50 = scmp.ne.s32.totalorder %s45, %s47
    %p51 = scmp.eq.s32.totalorder %s11, 0
    %p52 = por %p50, %p51
    %p53 = scmp.ne.s32.totalorder %s45, %s47
    %p54 = scmp.eq.s32.totalorder %s16, 1
    %p55 = por %p53, %p54
    %p56 = scmp.ne.s32.totalorder %s47, %s48
    %p57 = scmp.eq.s32.totalorder %s16, 0
    %p58 = por %p56, %p57
    %p59 = scmp.ne.s32.totalorder %s47, %s48
    %p60 = scmp.eq.s32.totalorder %s17, 1
    %p61 = por %p59, %p60
    %p63 = scmp.ne.s32.totalorder %s48, %s62
    %p64 = scmp.eq.s32.totalorder %s17, 0
    %p65 = por %p63, %p64
    %s67 = sadd.s32 %s66, 1
    %p70 = scmp.eq.s32.totalorder %s11, 1
    %p71 = scmp.ne.s32.totalorder %s66, %s68
    %p72 = scmp.eq.s32.totalorder %s11, 0
    %p73 = por %p71, %p72
    %p74 = scmp.ne.s32.totalorder %s66, %s68
    %p75 = scmp.eq.s32.totalorder %s16, 1
    %p76 = por %p74, %p75
    %p77 = scmp.ne.s32.totalorder %s68, %s69
    %p78 = scmp.eq.s32.totalorder %s16, 0
    %p79 = por %p77, %p78
    %p80 = scmp.ne.s32.totalorder %s68, %s69
    %p81 = scmp.eq.s32.totalorder %s17, 1
    %p82 = por %p80, %p81
    %p84 = scmp.ne.s32.totalorder %s69, %s83
    %p85 = scmp.eq.s32.totalorder %s17, 0
    %p86 = por %p84, %p85
    %s88 = sadd.s32 %s87, 1
    %p91 = scmp.eq.s32.totalorder %s11, 1
    %p92 = scmp.ne.s32.totalorder %s87, %s89
    %p93 = scmp.eq.s32.totalorder %s11, 0
    %p94 = por %p92, %p93
    %p95 = scmp.ne.s32.totalorder %s87, %s89
    %p96 = scmp.eq.s32.totalorder %s16, 1
    %p97 = por %p95, %p96
    %p98 = scmp.ne.s32.totalorder %s89, %s90
    %p99 = scmp.eq.s32.totalorder %s16, 0
    %p100 = por %p98, %p99
    %p101 = scmp.ne.s32.totalorder %s89, %s90
    %p102 = scmp.eq.s32.totalorder %s17, 1
    %p103 = por %p101, %p102
    %p105 = scmp.ne.s32.totalorder %s90, %s104
    %p106 = scmp.eq.s32.totalorder %s17, 0
    %p107 = por %p105, %p106
    %s109 = sadd.s32 %s108, 1
    %p112 = scmp.eq.s32.totalorder %s11, 1
    %p113 = scmp.ne.s32.totalorder %s108, %s110
    %p114 = scmp.eq.s32.totalorder %s11, 0
    %p115 = por %p113, %p114
    %p116 = scmp.ne.s32.totalorder %s108, %s110
    %p117 = scmp.eq.s32.totalorder %s16, 1
    %p118 = por %p116, %p117
    %p119 = scmp.ne.s32.totalorder %s110, %s111
    %p120 = scmp.eq.s32.totalorder %s16, 0
    %p121 = por %p119, %p120
    %p122 = scmp.ne.s32.totalorder %s110, %s111
    %p123 = scmp.eq.s32.totalorder %s17, 1
    %p124 = por %p122, %p123
    %p126 = scmp.ne.s32.totalorder %s111, %s125
    %p127 = scmp.eq.s32.totalorder %s17, 0
    %p128 = por %p126, %p127
    %s129 = ssub.s32 %s11, %s18
    %p130 = scmp.eq.s32.totalorder %s129, 0
    %s132 = sadd.s32 %s131, 1
    %s133 = scalar_select %p130, %s131, %s132
    %p136 = pneg %p130
    %p137 = scmp.eq.s32.totalorder %s11, 1
    %p138 = por %p136, %p137
    %p139 = scmp.ne.s32.totalorder %s131, %s134
    %p140 = scmp.eq.s32.totalorder %s11, 0
    %p141 = por %p139, %p140
    %p142 = scmp.ne.s32.totalorder %s131, %s134
    %p143 = scmp.eq.s32.totalorder %s16, 1
    %p144 = por %p142, %p143
    %p145 = scmp.ne.s32.totalorder %s134, %s135
    %p146 = scmp.eq.s32.totalorder %s16, 0
    %p147 = por %p145, %p146
    %p148 = scmp.ne.s32.totalorder %s134, %s135
    %p149 = scmp.eq.s32.totalorder %s17, 1
    %p150 = por %p148, %p149
    %p152 = scmp.ne.s32.totalorder %s135, %s151
    %p153 = scmp.eq.s32.totalorder %s17, 0
    %p154 = por %p152, %p153
    %p155 = scmp.le.s32.totalorder 1, %s11
    %p156 = scmp.lt.s32.totalorder %s11, 3
    %p157 = pnand %p155, %p156
    %p158 = pneg %p157
    // Predicated region
    $region9: #{st_gcn_forward.1} parent=5 // pred_check
      _
    $region10: #{st_gcn_forward.1} parent=5 // pred_check_branch
      %160 = sbr.rel (%p157) target = $region12
    $region11: #{st_gcn_forward.1} parent=5 // pred_region
      %s161 = ssub.s32 %s11, 1
      // Predicated region
      $region13: #{st_gcn_forward.1} parent=11 // pred_check
        %p162 = pneg %p58
      $region14: #{st_gcn_forward.1} parent=11 // pred_check_branch
        %164 = sbr.rel (%p162) target = $region16
      $region15: #{st_gcn_forward.1} parent=11 // pred_region
        _
      $region16: #{st_gcn_forward.1} parent=11 // pred_fallthru
        _
      // Predicated region
      $region17: #{st_gcn_forward.1} parent=11 // pred_check
        %p165 = pneg %p79
      $region18: #{st_gcn_forward.1} parent=11 // pred_check_branch
        %167 = sbr.rel (%p165) target = $region20
      $region19: #{st_gcn_forward.1} parent=11 // pred_region
        _
      $region20: #{st_gcn_forward.1} parent=11 // pred_fallthru
        _
      // Predicated region
      $region21: #{st_gcn_forward.1} parent=11 // pred_check
        %p168 = pneg %p100
      $region22: #{st_gcn_forward.1} parent=11 // pred_check_branch
        %170 = sbr.rel (%p168) target = $region24
      $region23: #{st_gcn_forward.1} parent=11 // pred_region
        _
      $region24: #{st_gcn_forward.1} parent=11 // pred_fallthru
        _
      // Predicated region
      $region25: #{st_gcn_forward.1} parent=11 // pred_check
        %p171 = pneg %p121
      $region26: #{st_gcn_forward.1} parent=11 // pred_check_branch
        %173 = sbr.rel (%p171) target = $region28
      $region27: #{st_gcn_forward.1} parent=11 // pred_region
        _
      $region28: #{st_gcn_forward.1} parent=11 // pred_fallthru
        _
    $region12: #{st_gcn_forward.1} parent=5 // pred_fallthru
      _
    %p174 = scmp.lt.s32.totalorder %s11, 2
    // Predicated region
    $region29: #{st_gcn_forward.1} parent=5 // pred_check
      %p175 = pneg %p174
    $region30: #{st_gcn_forward.1} parent=5 // pred_check_branch
      %177 = sbr.rel (%p175) target = $region32
    $region31: #{st_gcn_forward.1} parent=5 // pred_region
      // Predicated region
      $region33: #{st_gcn_forward.1} parent=31 // pred_check
        %p178 = pneg %p31
      $region34: #{st_gcn_forward.1} parent=31 // pred_check_branch
        %180 = sbr.rel (%p178) target = $region36
      $region35: #{st_gcn_forward.1} parent=31 // pred_region
        %s181 = smul.u32 32, %s11
        %p182 = scmp.lt.s32.totalorder %s181, 63
        %s183 = scalar_select %p182, %s181, 63
        %s184 = smul.addr %s183, 2
        %s185 = smul.addr %s184, 4
        %s186 = scalar_lea.vmem %s0, %s185
        %s187 = smul.u32 32, %s11
      $region36: #{st_gcn_forward.1} parent=31 // pred_fallthru
        _
    $region32: #{st_gcn_forward.1} parent=5 // pred_fallthru
      _
    %p188 = scmp.le.s32.totalorder 1, %s11
    %p189 = scmp.lt.s32.totalorder %s11, 3
    %p190 = pnand %p188, %p189
    %p191 = pneg %p190
    // Predicated region
    $region37: #{st_gcn_forward.1} parent=5 // pred_check
      _
    $region38: #{st_gcn_forward.1} parent=5 // pred_check_branch
      %193 = sbr.rel (%p190) target = $region40
    $region39: #{st_gcn_forward.1} parent=5 // pred_region
      %s194 = ssub.s32 %s11, 1
      %s195 = smul.u32 32, %s16
      %p196 = scmp.lt.s32.totalorder %s195, 63
      %s197 = scalar_select %p196, %s195, 63
      %s198 = smul.addr %s197, 2
      %s199 = smul.addr %s198, 4
      %s200 = scalar_lea.vmem %s0, %s199
      %p201 = pneg %p37
      %p202 = pneg %p34
      %p203 = pneg %p58
      %p204 = pneg %p55
      %p205 = pneg %p79
      %p206 = pneg %p76
      %p207 = pneg %p100
      %p208 = pneg %p97
      %p209 = pneg %p121
      %p210 = pneg %p118
      %p211 = pneg %p147
      %p212 = pneg %p144
      %s213 = smul.u32 32, %s16
      %p214 = scmp.lt.s32.totalorder %s213, 63
      %s215 = scalar_select %p214, %s213, 63
      %s216 = smul.addr %s215, 2
      %s217 = smul.addr %s216, 8
      %s218 = scalar_lea.vmem %s5, %s217
      %s219 = smul.u32 32, %s16
      %p220 = scmp.lt.s32.totalorder %s219, 63
      %s221 = scalar_select %p220, %s219, 63
      %s222 = smul.addr %s221, 2
      %s223 = smul.addr %s222, 4
      %s224 = scalar_lea.vmem %s0, %s223
      %s225 = smul.u32 32, %s16
      %s226 = smul.u32 32, %s16
      %p227 = scmp.lt.s32.totalorder %s226, 63
      %s228 = scalar_select %p227, %s226, 63
      %s229 = smul.addr %s228, 2
      %s230 = smul.addr %s229, 8
      %s231 = scalar_lea.vmem %s5, %s230
      %s232 = smul.u32 32, %s16
      %v234 = vld [vmem:[%s224] sm:$0xff]
      %v235 = vld [vmem:[%s224 + $0x8] sm:$0xff]
      %v236 = vld [vmem:[%s224 + $0x10] sm:$0xff]
      %v237 = vld [vmem:[%s224 + $0x18] sm:$0xff]
      %v238 = vld [vmem:[%s224 + $0x20] sm:$0xff]
      %v239 = vld [vmem:[%s224 + $0x28] sm:$0xff]
      %v240 = vld [vmem:[%s224 + $0x30] sm:$0xff]
      %v241 = vld [vmem:[%s224 + $0x38] sm:$0xff]
      %v242 = vld [vmem:[%s224 + $0x40] sm:$0xff]
      %v243 = vld [vmem:[%s224 + $0x48] sm:$0xff]
      %v244 = vld [vmem:[%s224 + $0x50] sm:$0xff]
      %v245 = vld [vmem:[%s224 + $0x58] sm:$0xff]
      %v246 = vld [vmem:[%s224 + $0x60] sm:$0xff]
      %v247 = vld [vmem:[%s224 + $0x68] sm:$0xff]
      %v248 = vld [vmem:[%s224 + $0x70] sm:$0xff]
      %v249 = vld [vmem:[%s224 + $0x78] sm:$0xff]
      %v250 = vld [vmem:[%s224 + $0x80] sm:$0xff]
      %v251 = vld [vmem:[%s224 + $0x88] sm:$0xff]
      %v252 = vld [vmem:[%s224 + $0x90] sm:$0xff]
      %v253 = vld [vmem:[%s224 + $0x98] sm:$0xff]
      %v254 = vld [vmem:[%s224 + $0xa0] sm:$0xff]
      %v255 = vld [vmem:[%s224 + $0xa8] sm:$0xff]
      %v256 = vld [vmem:[%s224 + $0xb0] sm:$0xff]
      %v257 = vld [vmem:[%s224 + $0xb8] sm:$0xff]
      %v258 = vld [vmem:[%s224 + $0xc0] sm:$0xff]
      %v259 = vld [vmem:[%s224 + $0xc8] sm:$0xff]
      %v260 = vld [vmem:[%s224 + $0xd0] sm:$0xff]
      %v261 = vld [vmem:[%s224 + $0xd8] sm:$0xff]
      %v262 = vld [vmem:[%s224 + $0xe0] sm:$0xff]
      %v263 = vld [vmem:[%s224 + $0xe8] sm:$0xff]
      %v264 = vld [vmem:[%s224 + $0xf0] sm:$0xff]
      %v265 = vld [vmem:[%s224 + $0xf8] sm:$0xff]
      %v266 = vunpack.c.l.bf16 %v234
      %v267 = vunpack.c.h.bf16 %v234
      %v268 = vunpack.c.l.bf16 %v235
      %v269 = vunpack.c.h.bf16 %v235
      %v270 = vunpack.c.l.bf16 %v236
      %v271 = vunpack.c.h.bf16 %v236
      %v272 = vunpack.c.l.bf16 %v237
      %v273 = vunpack.c.h.bf16 %v237
      %v274 = vunpack.c.l.bf16 %v238
      %v275 = vunpack.c.h.bf16 %v238
      %v276 = vunpack.c.l.bf16 %v239
      %v277 = vunpack.c.h.bf16 %v239
      %v278 = vunpack.c.l.bf16 %v240
      %v279 = vunpack.c.h.bf16 %v240
      %v280 = vunpack.c.l.bf16 %v241
      %v281 = vunpack.c.h.bf16 %v241
      %v282 = vunpack.c.l.bf16 %v242
      %v283 = vunpack.c.h.bf16 %v242
      %v284 = vunpack.c.l.bf16 %v243
      %v285 = vunpack.c.h.bf16 %v243
      %v286 = vunpack.c.l.bf16 %v244
      %v287 = vunpack.c.h.bf16 %v244
      %v288 = vunpack.c.l.bf16 %v245
      %v289 = vunpack.c.h.bf16 %v245
      %v290 = vunpack.c.l.bf16 %v246
      %v291 = vunpack.c.h.bf16 %v246
      %v292 = vunpack.c.l.bf16 %v247
      %v293 = vunpack.c.h.bf16 %v247
      %v294 = vunpack.c.l.bf16 %v248
      %v295 = vunpack.c.h.bf16 %v248
      %v296 = vunpack.c.l.bf16 %v249
      %v297 = vunpack.c.h.bf16 %v249
      %v298 = vunpack.c.l.bf16 %v250
      %v299 = vunpack.c.h.bf16 %v250
      %v300 = vunpack.c.l.bf16 %v251
      %v301 = vunpack.c.h.bf16 %v251
      %v302 = vunpack.c.l.bf16 %v252
      %v303 = vunpack.c.h.bf16 %v252
      %v304 = vunpack.c.l.bf16 %v253
      %v305 = vunpack.c.h.bf16 %v253
      %v306 = vunpack.c.l.bf16 %v254
      %v307 = vunpack.c.h.bf16 %v254
      %v308 = vunpack.c.l.bf16 %v255
      %v309 = vunpack.c.h.bf16 %v255
      %v310 = vunpack.c.l.bf16 %v256
      %v311 = vunpack.c.h.bf16 %v256
      %v312 = vunpack.c.l.bf16 %v257
      %v313 = vunpack.c.h.bf16 %v257
      %v314 = vunpack.c.l.bf16 %v258
      %v315 = vunpack.c.h.bf16 %v258
      %v316 = vunpack.c.l.bf16 %v259
      %v317 = vunpack.c.h.bf16 %v259
      %v318 = vunpack.c.l.bf16 %v260
      %v319 = vunpack.c.h.bf16 %v260
      %v320 = vunpack.c.l.bf16 %v261
      %v321 = vunpack.c.h.bf16 %v261
      %v322 = vunpack.c.l.bf16 %v262
      %v323 = vunpack.c.h.bf16 %v262
      %v324 = vunpack.c.l.bf16 %v263
      %v325 = vunpack.c.h.bf16 %v263
      %v326 = vunpack.c.l.bf16 %v264
      %v327 = vunpack.c.h.bf16 %v264
      %v328 = vunpack.c.l.bf16 %v265
      %v329 = vunpack.c.h.bf16 %v265
      %v330 = vld [vmem:[%s1] sm:$0xff]
      %v331 = vld [vmem:[%s1 + $0x8] sm:$0xff]
      %v332 = vld [vmem:[%s1 + $0x10] sm:$0xff]
      %v333 = vld [vmem:[%s1 + $0x18] sm:$0xff]
      %v334 = vld [vmem:[%s1 + $0x20] sm:$0xff]
      %v335 = vld [vmem:[%s1 + $0x28] sm:$0xff]
      %v336 = vld [vmem:[%s1 + $0x30] sm:$0xff]
      %v337 = vld [vmem:[%s1 + $0x38] sm:$0xff]
      %v338 = vld [vmem:[%s1 + $0x40] sm:$0xff]
      %v339 = vld [vmem:[%s1 + $0x48] sm:$0xff]
      %v340 = vld [vmem:[%s1 + $0x50] sm:$0xff]
      %v341 = vld [vmem:[%s1 + $0x58] sm:$0xff]
      %v342 = vld [vmem:[%s1 + $0x60] sm:$0xff]
      %v343 = vld [vmem:[%s1 + $0x68] sm:$0xff]
      %v344 = vld [vmem:[%s1 + $0x70] sm:$0xff]
      %v345 = vld [vmem:[%s1 + $0x78] sm:$0xff]
      %v346 = vld [vmem:[%s1 + $0x80] sm:$0xff]
      %v347 = vld [vmem:[%s1 + $0x88] sm:$0xff]
      %v348 = vld [vmem:[%s1 + $0x90] sm:$0xff]
      %v349 = vld [vmem:[%s1 + $0x98] sm:$0xff]
      %v350 = vld [vmem:[%s1 + $0xa0] sm:$0xff]
      %v351 = vld [vmem:[%s1 + $0xa8] sm:$0xff]
      %v352 = vld [vmem:[%s1 + $0xb0] sm:$0xff]
      %v353 = vld [vmem:[%s1 + $0xb8] sm:$0xff]
      %v354 = vld [vmem:[%s1 + $0xc0] sm:$0xff]
      %v355 = vld [vmem:[%s1 + $0xc8] sm:$0xff]
      %v356 = vld [vmem:[%s1 + $0xd0] sm:$0xff]
      %v357 = vld [vmem:[%s1 + $0xd8] sm:$0xff]
      %v358 = vld [vmem:[%s1 + $0xe0] sm:$0xff]
      %v359 = vld [vmem:[%s1 + $0xe8] sm:$0xff]
      %v360 = vld [vmem:[%s1 + $0xf0] sm:$0xff]
      %v361 = vld [vmem:[%s1 + $0xf8] sm:$0xff]
      %v362 = vld [vmem:[%s2] sm:$0x3]
      %v364 = vperm.slane %v362, 0
      %v365 = vperm.slane %v362, 1
      %v400 = vunpack.c.l.b16 %v234
      %v401 = vunpack.c.h.b16 %v234
      %v402 = vunpack.c.l.b16 %v235
      %v403 = vunpack.c.h.b16 %v235
      %v404 = vunpack.c.l.b16 %v236
      %v405 = vunpack.c.h.b16 %v236
      %v406 = vunpack.c.l.b16 %v237
      %v407 = vunpack.c.h.b16 %v237
      %v408 = vunpack.c.l.b16 %v238
      %v409 = vunpack.c.h.b16 %v238
      %v410 = vunpack.c.l.b16 %v239
      %v411 = vunpack.c.h.b16 %v239
      %v412 = vunpack.c.l.b16 %v240
      %v413 = vunpack.c.h.b16 %v240
      %v414 = vunpack.c.l.b16 %v241
      %v415 = vunpack.c.h.b16 %v241
      %v416 = vunpack.c.l.b16 %v242
      %v417 = vunpack.c.h.b16 %v242
      %v418 = vunpack.c.l.b16 %v243
      %v419 = vunpack.c.h.b16 %v243
      %v420 = vunpack.c.l.b16 %v244
      %v421 = vunpack.c.h.b16 %v244
      %v422 = vunpack.c.l.b16 %v245
      %v423 = vunpack.c.h.b16 %v245
      %v424 = vunpack.c.l.b16 %v246
      %v425 = vunpack.c.h.b16 %v246
      %v426 = vunpack.c.l.b16 %v247
      %v427 = vunpack.c.h.b16 %v247
      %v428 = vunpack.c.l.b16 %v248
      %v429 = vunpack.c.h.b16 %v248
      %v430 = vunpack.c.l.b16 %v249
      %v431 = vunpack.c.h.b16 %v249
      %v432 = vunpack.c.l.b16 %v250
      %v433 = vunpack.c.h.b16 %v250
      %v434 = vunpack.c.l.b16 %v251
      %v435 = vunpack.c.h.b16 %v251
      %v436 = vunpack.c.l.b16 %v252
      %v437 = vunpack.c.h.b16 %v252
      %v438 = vunpack.c.l.b16 %v253
      %v439 = vunpack.c.h.b16 %v253
      %v440 = vunpack.c.l.b16 %v254
      %v441 = vunpack.c.h.b16 %v254
      %v442 = vunpack.c.l.b16 %v255
      %v443 = vunpack.c.h.b16 %v255
      %v444 = vunpack.c.l.b16 %v256
      %v445 = vunpack.c.h.b16 %v256
      %v446 = vunpack.c.l.b16 %v257
      %v447 = vunpack.c.h.b16 %v257
      %v448 = vunpack.c.l.b16 %v258
      %v449 = vunpack.c.h.b16 %v258
      %v450 = vunpack.c.l.b16 %v259
      %v451 = vunpack.c.h.b16 %v259
      %v452 = vunpack.c.l.b16 %v260
      %v453 = vunpack.c.h.b16 %v260
      %v454 = vunpack.c.l.b16 %v261
      %v455 = vunpack.c.h.b16 %v261
      %v456 = vunpack.c.l.b16 %v262
      %v457 = vunpack.c.h.b16 %v262
      %v458 = vunpack.c.l.b16 %v263
      %v459 = vunpack.c.h.b16 %v263
      %v460 = vunpack.c.l.b16 %v264
      %v461 = vunpack.c.h.b16 %v264
      %v462 = vunpack.c.l.b16 %v265
      %v463 = vunpack.c.h.b16 %v265
      %v464 = vpack.c.b16 %v402, %v400
      %v465 = vpack.c.b16 %v403, %v401
      %v466 = vpack.c.b16 %v406, %v404
      %v467 = vpack.c.b16 %v407, %v405
      %v468 = vpack.c.b16 %v410, %v408
      %v469 = vpack.c.b16 %v411, %v409
      %v470 = vpack.c.b16 %v414, %v412
      %v471 = vpack.c.b16 %v415, %v413
      %v472 = vpack.c.b16 %v418, %v416
      %v473 = vpack.c.b16 %v419, %v417
      %v474 = vpack.c.b16 %v422, %v420
      %v475 = vpack.c.b16 %v423, %v421
      %v476 = vpack.c.b16 %v426, %v424
      %v477 = vpack.c.b16 %v427, %v425
      %v478 = vpack.c.b16 %v430, %v428
      %v479 = vpack.c.b16 %v431, %v429
      %v480 = vpack.c.b16 %v434, %v432
      %v481 = vpack.c.b16 %v435, %v433
      %v482 = vpack.c.b16 %v438, %v436
      %v483 = vpack.c.b16 %v439, %v437
      %v484 = vpack.c.b16 %v442, %v440
      %v485 = vpack.c.b16 %v443, %v441
      %v486 = vpack.c.b16 %v446, %v444
      %v487 = vpack.c.b16 %v447, %v445
      %v488 = vpack.c.b16 %v450, %v448
      %v489 = vpack.c.b16 %v451, %v449
      %v490 = vpack.c.b16 %v454, %v452
      %v491 = vpack.c.b16 %v455, %v453
      %v492 = vpack.c.b16 %v458, %v456
      %v493 = vpack.c.b16 %v459, %v457
      %v494 = vpack.c.b16 %v462, %v460
      %v495 = vpack.c.b16 %v463, %v461
      %v560 = vunpack.c.l.b16 %v330
      %v561 = vunpack.c.h.b16 %v330
      %v562 = vunpack.c.l.b16 %v331
      %v563 = vunpack.c.h.b16 %v331
      %v564 = vunpack.c.l.b16 %v332
      %v565 = vunpack.c.h.b16 %v332
      %v566 = vunpack.c.l.b16 %v333
      %v567 = vunpack.c.h.b16 %v333
      %v568 = vunpack.c.l.b16 %v334
      %v569 = vunpack.c.h.b16 %v334
      %v570 = vunpack.c.l.b16 %v335
      %v571 = vunpack.c.h.b16 %v335
      %v572 = vunpack.c.l.b16 %v336
      %v573 = vunpack.c.h.b16 %v336
      %v574 = vunpack.c.l.b16 %v337
      %v575 = vunpack.c.h.b16 %v337
      %v576 = vunpack.c.l.b16 %v338
      %v577 = vunpack.c.h.b16 %v338
      %v578 = vunpack.c.l.b16 %v339
      %v579 = vunpack.c.h.b16 %v339
      %v580 = vunpack.c.l.b16 %v340
      %v581 = vunpack.c.h.b16 %v340
      %v582 = vunpack.c.l.b16 %v341
      %v583 = vunpack.c.h.b16 %v341
      %v584 = vunpack.c.l.b16 %v342
      %v585 = vunpack.c.h.b16 %v342
      %v586 = vunpack.c.l.b16 %v343
      %v587 = vunpack.c.h.b16 %v343
      %v588 = vunpack.c.l.b16 %v344
      %v589 = vunpack.c.h.b16 %v344
      %v590 = vunpack.c.l.b16 %v345
      %v591 = vunpack.c.h.b16 %v345
      %v592 = vunpack.c.l.b16 %v346
      %v593 = vunpack.c.h.b16 %v346
      %v594 = vunpack.c.l.b16 %v347
      %v595 = vunpack.c.h.b16 %v347
      %v596 = vunpack.c.l.b16 %v348
      %v597 = vunpack.c.h.b16 %v348
      %v598 = vunpack.c.l.b16 %v349
      %v599 = vunpack.c.h.b16 %v349
      %v600 = vunpack.c.l.b16 %v350
      %v601 = vunpack.c.h.b16 %v350
      %v602 = vunpack.c.l.b16 %v351
      %v603 = vunpack.c.h.b16 %v351
      %v604 = vunpack.c.l.b16 %v352
      %v605 = vunpack.c.h.b16 %v352
      %v606 = vunpack.c.l.b16 %v353
      %v607 = vunpack.c.h.b16 %v353
      %v608 = vunpack.c.l.b16 %v354
      %v609 = vunpack.c.h.b16 %v354
      %v610 = vunpack.c.l.b16 %v355
      %v611 = vunpack.c.h.b16 %v355
      %v612 = vunpack.c.l.b16 %v356
      %v613 = vunpack.c.h.b16 %v356
      %v614 = vunpack.c.l.b16 %v357
      %v615 = vunpack.c.h.b16 %v357
      %v616 = vunpack.c.l.b16 %v358
      %v617 = vunpack.c.h.b16 %v358
      %v618 = vunpack.c.l.b16 %v359
      %v619 = vunpack.c.h.b16 %v359
      %v620 = vunpack.c.l.b16 %v360
      %v621 = vunpack.c.h.b16 %v360
      %v622 = vunpack.c.l.b16 %v361
      %v623 = vunpack.c.h.b16 %v361
      %v624 = vpack.c.b16 %v562, %v560
      %v625 = vpack.c.b16 %v563, %v561
      %v626 = vpack.c.b16 %v566, %v564
      %v627 = vpack.c.b16 %v567, %v565
      %v628 = vpack.c.b16 %v570, %v568
      %v629 = vpack.c.b16 %v571, %v569
      %v630 = vpack.c.b16 %v574, %v572
      %v631 = vpack.c.b16 %v575, %v573
      %v632 = vpack.c.b16 %v578, %v576
      %v633 = vpack.c.b16 %v579, %v577
      %v634 = vpack.c.b16 %v582, %v580
      %v635 = vpack.c.b16 %v583, %v581
      %v636 = vpack.c.b16 %v586, %v584
      %v637 = vpack.c.b16 %v587, %v585
      %v638 = vpack.c.b16 %v590, %v588
      %v639 = vpack.c.b16 %v591, %v589
      %v640 = vpack.c.b16 %v594, %v592
      %v641 = vpack.c.b16 %v595, %v593
      %v642 = vpack.c.b16 %v598, %v596
      %v643 = vpack.c.b16 %v599, %v597
      %v644 = vpack.c.b16 %v602, %v600
      %v645 = vpack.c.b16 %v603, %v601
      %v646 = vpack.c.b16 %v606, %v604
      %v647 = vpack.c.b16 %v607, %v605
      %v648 = vpack.c.b16 %v610, %v608
      %v649 = vpack.c.b16 %v611, %v609
      %v650 = vpack.c.b16 %v614, %v612
      %v651 = vpack.c.b16 %v615, %v613
      %v652 = vpack.c.b16 %v618, %v616
      %v653 = vpack.c.b16 %v619, %v617
      %v654 = vpack.c.b16 %v622, %v620
      %v655 = vpack.c.b16 %v623, %v621
      %688 = vmatpush.bf16.msra.mxu0 %v638
      %689 = vmatpush.bf16.msra.mxu0 %v636
      %690 = vmatpush.bf16.msra.mxu0 %v634
      %691 = vmatpush.bf16.msra.mxu0 %v632
      %692 = vmatpush.bf16.msra.mxu0 %v630
      %693 = vmatpush.bf16.msra.mxu0 %v628
      %694 = vmatpush.bf16.msra.mxu0 %v626
      %695 = vmatpush.bf16.msra.mxu0 %v624
      %696 = vmatmul.bf16.gmra.mxu0 %v464
      %v697 = vpop.f32.mrf.mxu0
      %v698 = vadd.f32 %v364, %v697
      %v699 = vpop.f32.mrf.mxu0
      %v700 = vadd.f32 %v364, %v699
      %701 = vmatmul.bf16.gmra.mxu0 %v466
      %v702 = vpop.f32.mrf.mxu0
      %v703 = vadd.f32 %v364, %v702
      %v704 = vpop.f32.mrf.mxu0
      %v705 = vadd.f32 %v364, %v704
      %706 = vmatmul.bf16.gmra.mxu0 %v468
      %v707 = vpop.f32.mrf.mxu0
      %v708 = vadd.f32 %v364, %v707
      %v709 = vpop.f32.mrf.mxu0
      %v710 = vadd.f32 %v364, %v709
      %711 = vmatmul.bf16.gmra.mxu0 %v470
      %v712 = vpop.f32.mrf.mxu0
      %v713 = vadd.f32 %v364, %v712
      %v714 = vpop.f32.mrf.mxu0
      %v715 = vadd.f32 %v364, %v714
      %716 = vmatmul.bf16.gmra.mxu0 %v472
      %v717 = vpop.f32.mrf.mxu0
      %v718 = vadd.f32 %v364, %v717
      %v719 = vpop.f32.mrf.mxu0
      %v720 = vadd.f32 %v364, %v719
      %721 = vmatmul.bf16.gmra.mxu0 %v474
      %v722 = vpop.f32.mrf.mxu0
      %v723 = vadd.f32 %v364, %v722
      %v724 = vpop.f32.mrf.mxu0
      %v725 = vadd.f32 %v364, %v724
      %726 = vmatmul.bf16.gmra.mxu0 %v476
      %v727 = vpop.f32.mrf.mxu0
      %v728 = vadd.f32 %v364, %v727
      %v729 = vpop.f32.mrf.mxu0
      %v730 = vadd.f32 %v364, %v729
      %731 = vmatmul.bf16.gmra.mxu0 %v478
      %v732 = vpop.f32.mrf.mxu0
      %v733 = vadd.f32 %v364, %v732
      %v734 = vpop.f32.mrf.mxu0
      %v735 = vadd.f32 %v364, %v734
      %736 = vmatmul.bf16.gmra.mxu0 %v480
      %v737 = vpop.f32.mrf.mxu0
      %v738 = vadd.f32 %v364, %v737
      %v739 = vpop.f32.mrf.mxu0
      %v740 = vadd.f32 %v364, %v739
      %741 = vmatmul.bf16.gmra.mxu0 %v482
      %v742 = vpop.f32.mrf.mxu0
      %v743 = vadd.f32 %v364, %v742
      %v744 = vpop.f32.mrf.mxu0
      %v745 = vadd.f32 %v364, %v744
      %746 = vmatmul.bf16.gmra.mxu0 %v484
      %v747 = vpop.f32.mrf.mxu0
      %v748 = vadd.f32 %v364, %v747
      %v749 = vpop.f32.mrf.mxu0
      %v750 = vadd.f32 %v364, %v749
      %751 = vmatmul.bf16.gmra.mxu0 %v486
      %v752 = vpop.f32.mrf.mxu0
      %v753 = vadd.f32 %v364, %v752
      %v754 = vpop.f32.mrf.mxu0
      %v755 = vadd.f32 %v364, %v754
      %756 = vmatmul.bf16.gmra.mxu0 %v488
      %v757 = vpop.f32.mrf.mxu0
      %v758 = vadd.f32 %v364, %v757
      %v759 = vpop.f32.mrf.mxu0
      %v760 = vadd.f32 %v364, %v759
      %761 = vmatmul.bf16.gmra.mxu0 %v490
      %v762 = vpop.f32.mrf.mxu0
      %v763 = vadd.f32 %v364, %v762
      %v764 = vpop.f32.mrf.mxu0
      %v765 = vadd.f32 %v364, %v764
      %766 = vmatmul.bf16.gmra.mxu0 %v492
      %v767 = vpop.f32.mrf.mxu0
      %v768 = vadd.f32 %v364, %v767
      %v769 = vpop.f32.mrf.mxu0
      %v770 = vadd.f32 %v364, %v769
      %771 = vmatmul.bf16.gmra.mxu0 %v494
      %v772 = vpop.f32.mrf.mxu0
      %v773 = vadd.f32 %v364, %v772
      %v774 = vpop.f32.mrf.mxu0
      %v775 = vadd.f32 %v364, %v774
      %776 = vdwg.mxu0
      %777 = vmatpush.bf16.msra.mxu0 %v654
      %778 = vmatpush.bf16.msra.mxu0 %v652
      %779 = vmatpush.bf16.msra.mxu0 %v650
      %780 = vmatpush.bf16.msra.mxu0 %v648
      %781 = vmatpush.bf16.msra.mxu0 %v646
      %782 = vmatpush.bf16.msra.mxu0 %v644
      %783 = vmatpush.bf16.msra.mxu0 %v642
      %784 = vmatpush.bf16.msra.mxu0 %v640
      %785 = vmatmul.bf16.gmra.mxu0 %v465
      %v786 = vpop.f32.mrf.mxu0
      %v787 = vadd.f32 %v698, %v786
      %v788 = vpop.f32.mrf.mxu0
      %v789 = vadd.f32 %v700, %v788
      %790 = vmatmul.bf16.gmra.mxu0 %v467
      %v791 = vpop.f32.mrf.mxu0
      %v792 = vadd.f32 %v703, %v791
      %v793 = vpop.f32.mrf.mxu0
      %v794 = vadd.f32 %v705, %v793
      %795 = vmatmul.bf16.gmra.mxu0 %v469
      %v796 = vpop.f32.mrf.mxu0
      %v797 = vadd.f32 %v708, %v796
      %v798 = vpop.f32.mrf.mxu0
      %v799 = vadd.f32 %v710, %v798
      %800 = vmatmul.bf16.gmra.mxu0 %v471
      %v801 = vpop.f32.mrf.mxu0
      %v802 = vadd.f32 %v713, %v801
      %v803 = vpop.f32.mrf.mxu0
      %v804 = vadd.f32 %v715, %v803
      %805 = vmatmul.bf16.gmra.mxu0 %v473
      %v806 = vpop.f32.mrf.mxu0
      %v807 = vadd.f32 %v718, %v806
      %v808 = vpop.f32.mrf.mxu0
      %v809 = vadd.f32 %v720, %v808
      %810 = vmatmul.bf16.gmra.mxu0 %v475
      %v811 = vpop.f32.mrf.mxu0
      %v812 = vadd.f32 %v723, %v811
      %v813 = vpop.f32.mrf.mxu0
      %v814 = vadd.f32 %v725, %v813
      %815 = vmatmul.bf16.gmra.mxu0 %v477
      %v816 = vpop.f32.mrf.mxu0
      %v817 = vadd.f32 %v728, %v816
      %v818 = vpop.f32.mrf.mxu0
      %v819 = vadd.f32 %v730, %v818
      %820 = vmatmul.bf16.gmra.mxu0 %v479
      %v821 = vpop.f32.mrf.mxu0
      %v822 = vadd.f32 %v733, %v821
      %v823 = vpop.f32.mrf.mxu0
      %v824 = vadd.f32 %v735, %v823
      %825 = vmatmul.bf16.gmra.mxu0 %v481
      %v826 = vpop.f32.mrf.mxu0
      %v827 = vadd.f32 %v738, %v826
      %v828 = vpop.f32.mrf.mxu0
      %v829 = vadd.f32 %v740, %v828
      %830 = vmatmul.bf16.gmra.mxu0 %v483
      %v831 = vpop.f32.mrf.mxu0
      %v832 = vadd.f32 %v743, %v831
      %v833 = vpop.f32.mrf.mxu0
      %v834 = vadd.f32 %v745, %v833
      %835 = vmatmul.bf16.gmra.mxu0 %v485
      %v836 = vpop.f32.mrf.mxu0
      %v837 = vadd.f32 %v748, %v836
      %v838 = vpop.f32.mrf.mxu0
      %v839 = vadd.f32 %v750, %v838
      %840 = vmatmul.bf16.gmra.mxu0 %v487
      %v841 = vpop.f32.mrf.mxu0
      %v842 = vadd.f32 %v753, %v841
      %v843 = vpop.f32.mrf.mxu0
      %v844 = vadd.f32 %v755, %v843
      %845 = vmatmul.bf16.gmra.mxu0 %v489
      %v846 = vpop.f32.mrf.mxu0
      %v847 = vadd.f32 %v758, %v846
      %v848 = vpop.f32.mrf.mxu0
      %v849 = vadd.f32 %v760, %v848
      %850 = vmatmul.bf16.gmra.mxu0 %v491
      %v851 = vpop.f32.mrf.mxu0
      %v852 = vadd.f32 %v763, %v851
      %v853 = vpop.f32.mrf.mxu0
      %v854 = vadd.f32 %v765, %v853
      %855 = vmatmul.bf16.gmra.mxu0 %v493
      %v856 = vpop.f32.mrf.mxu0
      %v857 = vadd.f32 %v768, %v856
      %v858 = vpop.f32.mrf.mxu0
      %v859 = vadd.f32 %v770, %v858
      %860 = vmatmul.bf16.gmra.mxu0 %v495
      %v861 = vpop.f32.mrf.mxu0
      %v862 = vadd.f32 %v773, %v861
      %v863 = vpop.f32.mrf.mxu0
      %v864 = vadd.f32 %v775, %v863
      %865 = vdwg.mxu0
      %866 = vmatpush.bf16.msra.mxu0 %v639
      %867 = vmatpush.bf16.msra.mxu0 %v637
      %868 = vmatpush.bf16.msra.mxu0 %v635
      %869 = vmatpush.bf16.msra.mxu0 %v633
      %870 = vmatpush.bf16.msra.mxu0 %v631
      %871 = vmatpush.bf16.msra.mxu0 %v629
      %872 = vmatpush.bf16.msra.mxu0 %v627
      %873 = vmatpush.bf16.msra.mxu0 %v625
      %874 = vmatmul.bf16.gmra.mxu0 %v464
      %v875 = vpop.f32.mrf.mxu0
      %v876 = vadd.f32 %v365, %v875
      %v877 = vpop.f32.mrf.mxu0
      %v878 = vadd.f32 %v365, %v877
      %879 = vmatmul.bf16.gmra.mxu0 %v466
      %v880 = vpop.f32.mrf.mxu0
      %v881 = vadd.f32 %v365, %v880
      %v882 = vpop.f32.mrf.mxu0
      %v883 = vadd.f32 %v365, %v882
      %884 = vmatmul.bf16.gmra.mxu0 %v468
      %v885 = vpop.f32.mrf.mxu0
      %v886 = vadd.f32 %v365, %v885
      %v887 = vpop.f32.mrf.mxu0
      %v888 = vadd.f32 %v365, %v887
      %889 = vmatmul.bf16.gmra.mxu0 %v470
      %v890 = vpop.f32.mrf.mxu0
      %v891 = vadd.f32 %v365, %v890
      %v892 = vpop.f32.mrf.mxu0
      %v893 = vadd.f32 %v365, %v892
      %894 = vmatmul.bf16.gmra.mxu0 %v472
      %v895 = vpop.f32.mrf.mxu0
      %v896 = vadd.f32 %v365, %v895
      %v897 = vpop.f32.mrf.mxu0
      %v898 = vadd.f32 %v365, %v897
      %899 = vmatmul.bf16.gmra.mxu0 %v474
      %v900 = vpop.f32.mrf.mxu0
      %v901 = vadd.f32 %v365, %v900
      %v902 = vpop.f32.mrf.mxu0
      %v903 = vadd.f32 %v365, %v902
      %904 = vmatmul.bf16.gmra.mxu0 %v476
      %v905 = vpop.f32.mrf.mxu0
      %v906 = vadd.f32 %v365, %v905
      %v907 = vpop.f32.mrf.mxu0
      %v908 = vadd.f32 %v365, %v907
      %909 = vmatmul.bf16.gmra.mxu0 %v478
      %v910 = vpop.f32.mrf.mxu0
      %v911 = vadd.f32 %v365, %v910
      %v912 = vpop.f32.mrf.mxu0
      %v913 = vadd.f32 %v365, %v912
      %914 = vmatmul.bf16.gmra.mxu0 %v480
      %v915 = vpop.f32.mrf.mxu0
      %v916 = vadd.f32 %v365, %v915
      %v917 = vpop.f32.mrf.mxu0
      %v918 = vadd.f32 %v365, %v917
      %919 = vmatmul.bf16.gmra.mxu0 %v482
      %v920 = vpop.f32.mrf.mxu0
      %v921 = vadd.f32 %v365, %v920
      %v922 = vpop.f32.mrf.mxu0
      %v923 = vadd.f32 %v365, %v922
      %924 = vmatmul.bf16.gmra.mxu0 %v484
      %v925 = vpop.f32.mrf.mxu0
      %v926 = vadd.f32 %v365, %v925
      %v927 = vpop.f32.mrf.mxu0
      %v928 = vadd.f32 %v365, %v927
      %929 = vmatmul.bf16.gmra.mxu0 %v486
      %v930 = vpop.f32.mrf.mxu0
      %v931 = vadd.f32 %v365, %v930
      %v932 = vpop.f32.mrf.mxu0
      %v933 = vadd.f32 %v365, %v932
      %934 = vmatmul.bf16.gmra.mxu0 %v488
      %v935 = vpop.f32.mrf.mxu0
      %v936 = vadd.f32 %v365, %v935
      %v937 = vpop.f32.mrf.mxu0
      %v938 = vadd.f32 %v365, %v937
      %939 = vmatmul.bf16.gmra.mxu0 %v490
      %v940 = vpop.f32.mrf.mxu0
      %v941 = vadd.f32 %v365, %v940
      %v942 = vpop.f32.mrf.mxu0
      %v943 = vadd.f32 %v365, %v942
      %944 = vmatmul.bf16.gmra.mxu0 %v492
      %v945 = vpop.f32.mrf.mxu0
      %v946 = vadd.f32 %v365, %v945
      %v947 = vpop.f32.mrf.mxu0
      %v948 = vadd.f32 %v365, %v947
      %949 = vmatmul.bf16.gmra.mxu0 %v494
      %v950 = vpop.f32.mrf.mxu0
      %v951 = vadd.f32 %v365, %v950
      %v952 = vpop.f32.mrf.mxu0
      %v953 = vadd.f32 %v365, %v952
      %954 = vdwg.mxu0
      %955 = vmatpush.bf16.msra.mxu0 %v655
      %956 = vmatpush.bf16.msra.mxu0 %v653
      %957 = vmatpush.bf16.msra.mxu0 %v651
      %958 = vmatpush.bf16.msra.mxu0 %v649
      %959 = vmatpush.bf16.msra.mxu0 %v647
      %960 = vmatpush.bf16.msra.mxu0 %v645
      %961 = vmatpush.bf16.msra.mxu0 %v643
      %962 = vmatpush.bf16.msra.mxu0 %v641
      %963 = vmatmul.bf16.gmra.mxu0 %v465
      %v964 = vpop.f32.mrf.mxu0
      %v965 = vadd.f32 %v876, %v964
      %v966 = vpop.f32.mrf.mxu0
      %v967 = vadd.f32 %v878, %v966
      %968 = vmatmul.bf16.gmra.mxu0 %v467
      %v969 = vpop.f32.mrf.mxu0
      %v970 = vadd.f32 %v881, %v969
      %v971 = vpop.f32.mrf.mxu0
      %v972 = vadd.f32 %v883, %v971
      %973 = vmatmul.bf16.gmra.mxu0 %v469
      %v974 = vpop.f32.mrf.mxu0
      %v975 = vadd.f32 %v886, %v974
      %v976 = vpop.f32.mrf.mxu0
      %v977 = vadd.f32 %v888, %v976
      %978 = vmatmul.bf16.gmra.mxu0 %v471
      %v979 = vpop.f32.mrf.mxu0
      %v980 = vadd.f32 %v891, %v979
      %v981 = vpop.f32.mrf.mxu0
      %v982 = vadd.f32 %v893, %v981
      %983 = vmatmul.bf16.gmra.mxu0 %v473
      %v984 = vpop.f32.mrf.mxu0
      %v985 = vadd.f32 %v896, %v984
      %v986 = vpop.f32.mrf.mxu0
      %v987 = vadd.f32 %v898, %v986
      %988 = vmatmul.bf16.gmra.mxu0 %v475
      %v989 = vpop.f32.mrf.mxu0
      %v990 = vadd.f32 %v901, %v989
      %v991 = vpop.f32.mrf.mxu0
      %v992 = vadd.f32 %v903, %v991
      %993 = vmatmul.bf16.gmra.mxu0 %v477
      %v994 = vpop.f32.mrf.mxu0
      %v995 = vadd.f32 %v906, %v994
      %v996 = vpop.f32.mrf.mxu0
      %v997 = vadd.f32 %v908, %v996
      %998 = vmatmul.bf16.gmra.mxu0 %v479
      %v999 = vpop.f32.mrf.mxu0
      %v1000 = vadd.f32 %v911, %v999
      %v1001 = vpop.f32.mrf.mxu0
      %v1002 = vadd.f32 %v913, %v1001
      %1003 = vmatmul.bf16.gmra.mxu0 %v481
      %v1004 = vpop.f32.mrf.mxu0
      %v1005 = vadd.f32 %v916, %v1004
      %v1006 = vpop.f32.mrf.mxu0
      %v1007 = vadd.f32 %v918, %v1006
      %1008 = vmatmul.bf16.gmra.mxu0 %v483
      %v1009 = vpop.f32.mrf.mxu0
      %v1010 = vadd.f32 %v921, %v1009
      %v1011 = vpop.f32.mrf.mxu0
      %v1012 = vadd.f32 %v923, %v1011
      %1013 = vmatmul.bf16.gmra.mxu0 %v485
      %v1014 = vpop.f32.mrf.mxu0
      %v1015 = vadd.f32 %v926, %v1014
      %v1016 = vpop.f32.mrf.mxu0
      %v1017 = vadd.f32 %v928, %v1016
      %1018 = vmatmul.bf16.gmra.mxu0 %v487
      %v1019 = vpop.f32.mrf.mxu0
      %v1020 = vadd.f32 %v931, %v1019
      %v1021 = vpop.f32.mrf.mxu0
      %v1022 = vadd.f32 %v933, %v1021
      %1023 = vmatmul.bf16.gmra.mxu0 %v489
      %v1024 = vpop.f32.mrf.mxu0
      %v1025 = vadd.f32 %v936, %v1024
      %v1026 = vpop.f32.mrf.mxu0
      %v1027 = vadd.f32 %v938, %v1026
      %1028 = vmatmul.bf16.gmra.mxu0 %v491
      %v1029 = vpop.f32.mrf.mxu0
      %v1030 = vadd.f32 %v941, %v1029
      %v1031 = vpop.f32.mrf.mxu0
      %v1032 = vadd.f32 %v943, %v1031
      %1033 = vmatmul.bf16.gmra.mxu0 %v493
      %v1034 = vpop.f32.mrf.mxu0
      %v1035 = vadd.f32 %v946, %v1034
      %v1036 = vpop.f32.mrf.mxu0
      %v1037 = vadd.f32 %v948, %v1036
      %1038 = vmatmul.bf16.gmra.mxu0 %v495
      %v1039 = vpop.f32.mrf.mxu0
      %v1040 = vadd.f32 %v951, %v1039
      %v1041 = vpop.f32.mrf.mxu0
      %v1042 = vadd.f32 %v953, %v1041
      %1043 = vdwg.mxu0
      %v1044 = vmax.f32 %v787, 0.0
      %v1045 = vmax.f32 %v965, 0.0
      %v1046 = vmax.f32 %v789, 0.0
      %v1047 = vmax.f32 %v967, 0.0
      %v1048 = vmax.f32 %v792, 0.0
      %v1049 = vmax.f32 %v970, 0.0
      %v1050 = vmax.f32 %v794, 0.0
      %v1051 = vmax.f32 %v972, 0.0
      %v1052 = vmax.f32 %v797, 0.0
      %v1053 = vmax.f32 %v975, 0.0
      %v1054 = vmax.f32 %v799, 0.0
      %v1055 = vmax.f32 %v977, 0.0
      %v1056 = vmax.f32 %v802, 0.0
      %v1057 = vmax.f32 %v980, 0.0
      %v1058 = vmax.f32 %v804, 0.0
      %v1059 = vmax.f32 %v982, 0.0
      %v1060 = vmax.f32 %v807, 0.0
      %v1061 = vmax.f32 %v985, 0.0
      %v1062 = vmax.f32 %v809, 0.0
      %v1063 = vmax.f32 %v987, 0.0
      %v1064 = vmax.f32 %v812, 0.0
      %v1065 = vmax.f32 %v990, 0.0
      %v1066 = vmax.f32 %v814, 0.0
      %v1067 = vmax.f32 %v992, 0.0
      %v1068 = vmax.f32 %v817, 0.0
      %v1069 = vmax.f32 %v995, 0.0
      %v1070 = vmax.f32 %v819, 0.0
      %v1071 = vmax.f32 %v997, 0.0
      %v1072 = vmax.f32 %v822, 0.0
      %v1073 = vmax.f32 %v1000, 0.0
      %v1074 = vmax.f32 %v824, 0.0
      %v1075 = vmax.f32 %v1002, 0.0
      %v1076 = vmax.f32 %v827, 0.0
      %v1077 = vmax.f32 %v1005, 0.0
      %v1078 = vmax.f32 %v829, 0.0
      %v1079 = vmax.f32 %v1007, 0.0
      %v1080 = vmax.f32 %v832, 0.0
      %v1081 = vmax.f32 %v1010, 0.0
      %v1082 = vmax.f32 %v834, 0.0
      %v1083 = vmax.f32 %v1012, 0.0
      %v1084 = vmax.f32 %v837, 0.0
      %v1085 = vmax.f32 %v1015, 0.0
      %v1086 = vmax.f32 %v839, 0.0
      %v1087 = vmax.f32 %v1017, 0.0
      %v1088 = vmax.f32 %v842, 0.0
      %v1089 = vmax.f32 %v1020, 0.0
      %v1090 = vmax.f32 %v844, 0.0
      %v1091 = vmax.f32 %v1022, 0.0
      %v1092 = vmax.f32 %v847, 0.0
      %v1093 = vmax.f32 %v1025, 0.0
      %v1094 = vmax.f32 %v849, 0.0
      %v1095 = vmax.f32 %v1027, 0.0
      %v1096 = vmax.f32 %v852, 0.0
      %v1097 = vmax.f32 %v1030, 0.0
      %v1098 = vmax.f32 %v854, 0.0
      %v1099 = vmax.f32 %v1032, 0.0
      %v1100 = vmax.f32 %v857, 0.0
      %v1101 = vmax.f32 %v1035, 0.0
      %v1102 = vmax.f32 %v859, 0.0
      %v1103 = vmax.f32 %v1037, 0.0
      %v1104 = vmax.f32 %v862, 0.0
      %v1105 = vmax.f32 %v1040, 0.0
      %v1106 = vmax.f32 %v864, 0.0
      %v1107 = vmax.f32 %v1042, 0.0
      %v1108 = vpack.c.bf16 %v1046, %v1044
      %v1109 = vpack.c.bf16 %v1047, %v1045
      %v1110 = vpack.c.bf16 %v1050, %v1048
      %v1111 = vpack.c.bf16 %v1051, %v1049
      %v1112 = vpack.c.bf16 %v1054, %v1052
      %v1113 = vpack.c.bf16 %v1055, %v1053
      %v1114 = vpack.c.bf16 %v1058, %v1056
      %v1115 = vpack.c.bf16 %v1059, %v1057
      %v1116 = vpack.c.bf16 %v1062, %v1060
      %v1117 = vpack.c.bf16 %v1063, %v1061
      %v1118 = vpack.c.bf16 %v1066, %v1064
      %v1119 = vpack.c.bf16 %v1067, %v1065
      %v1120 = vpack.c.bf16 %v1070, %v1068
      %v1121 = vpack.c.bf16 %v1071, %v1069
      %v1122 = vpack.c.bf16 %v1074, %v1072
      %v1123 = vpack.c.bf16 %v1075, %v1073
      %v1124 = vpack.c.bf16 %v1078, %v1076
      %v1125 = vpack.c.bf16 %v1079, %v1077
      %v1126 = vpack.c.bf16 %v1082, %v1080
      %v1127 = vpack.c.bf16 %v1083, %v1081
      %v1128 = vpack.c.bf16 %v1086, %v1084
      %v1129 = vpack.c.bf16 %v1087, %v1085
      %v1130 = vpack.c.bf16 %v1090, %v1088
      %v1131 = vpack.c.bf16 %v1091, %v1089
      %v1132 = vpack.c.bf16 %v1094, %v1092
      %v1133 = vpack.c.bf16 %v1095, %v1093
      %v1134 = vpack.c.bf16 %v1098, %v1096
      %v1135 = vpack.c.bf16 %v1099, %v1097
      %v1136 = vpack.c.bf16 %v1102, %v1100
      %v1137 = vpack.c.bf16 %v1103, %v1101
      %v1138 = vpack.c.bf16 %v1106, %v1104
      %v1139 = vpack.c.bf16 %v1107, %v1105
      %v1140 = vlaneseq
      %v1141 = vshrl.u32 %v1140, 7
      %v1142 = vadd.s32 %v1141, 8
      %v1143 = vadd.s32 %v1141, 16
      %v1144 = vadd.s32 %v1141, 24
      %v1145 = vadd.s32 %v1141, 32
      %v1146 = vadd.s32 %v1141, 40
      %v1147 = vadd.s32 %v1141, 48
      %v1148 = vadd.s32 %v1141, 56
      %v1149 = vadd.s32 %v1141, 64
      %v1150 = vadd.s32 %v1141, 72
      %v1151 = vadd.s32 %v1141, 80
      %v1152 = vadd.s32 %v1141, 88
      %v1153 = vadd.s32 %v1141, 96
      %v1154 = vadd.s32 %v1141, 104
      %v1155 = vadd.s32 %v1141, 112
      %v1156 = vadd.s32 %v1141, 120
      %v1157 = vadd.s32 %v1141, 128
      %v1158 = vadd.s32 %v1141, 136
      %v1159 = vadd.s32 %v1141, 144
      %v1160 = vadd.s32 %v1141, 152
      %v1161 = vadd.s32 %v1141, 160
      %v1162 = vadd.s32 %v1141, 168
      %v1163 = vadd.s32 %v1141, 176
      %v1164 = vadd.s32 %v1141, 184
      %v1165 = vadd.s32 %v1141, 192
      %v1166 = vadd.s32 %v1141, 200
      %v1167 = vadd.s32 %v1141, 208
      %v1168 = vadd.s32 %v1141, 216
      %v1169 = vadd.s32 %v1141, 224
      %v1170 = vadd.s32 %v1141, 232
      %v1171 = vadd.s32 %v1141, 240
      %v1172 = vadd.s32 %v1141, 248
      %vm1173 = vcmp.lt.s32.totalorder %v1141, 0
      %v1174 = vsub.s32 0, %v1141
      %v1175 = vsel %vm1173, %v1174, %v1141
      %v1176 = vshrl.u32 %v1175, 6
      %v1177 = vand.u32 %v1175, 63
      %v1178 = vsub.s32 0, %v1177
      %v1179 = vsel %vm1173, %v1178, %v1177
      %vm1180 = vcmp.lt.s32.totalorder %v1142, 0
      %v1181 = vsub.s32 0, %v1142
      %v1182 = vsel %vm1180, %v1181, %v1142
      %v1183 = vshrl.u32 %v1182, 6
      %v1184 = vand.u32 %v1182, 63
      %v1185 = vsub.s32 0, %v1184
      %v1186 = vsel %vm1180, %v1185, %v1184
      %vm1187 = vcmp.lt.s32.totalorder %v1143, 0
      %v1188 = vsub.s32 0, %v1143
      %v1189 = vsel %vm1187, %v1188, %v1143
      %v1190 = vshrl.u32 %v1189, 6
      %v1191 = vand.u32 %v1189, 63
      %v1192 = vsub.s32 0, %v1191
      %v1193 = vsel %vm1187, %v1192, %v1191
      %vm1194 = vcmp.lt.s32.totalorder %v1144, 0
      %v1195 = vsub.s32 0, %v1144
      %v1196 = vsel %vm1194, %v1195, %v1144
      %v1197 = vshrl.u32 %v1196, 6
      %v1198 = vand.u32 %v1196, 63
      %v1199 = vsub.s32 0, %v1198
      %v1200 = vsel %vm1194, %v1199, %v1198
      %vm1201 = vcmp.lt.s32.totalorder %v1145, 0
      %v1202 = vsub.s32 0, %v1145
      %v1203 = vsel %vm1201, %v1202, %v1145
      %v1204 = vshrl.u32 %v1203, 6
      %v1205 = vand.u32 %v1203, 63
      %v1206 = vsub.s32 0, %v1205
      %v1207 = vsel %vm1201, %v1206, %v1205
      %vm1208 = vcmp.lt.s32.totalorder %v1146, 0
      %v1209 = vsub.s32 0, %v1146
      %v1210 = vsel %vm1208, %v1209, %v1146
      %v1211 = vshrl.u32 %v1210, 6
      %v1212 = vand.u32 %v1210, 63
      %v1213 = vsub.s32 0, %v1212
      %v1214 = vsel %vm1208, %v1213, %v1212
      %vm1215 = vcmp.lt.s32.totalorder %v1147, 0
      %v1216 = vsub.s32 0, %v1147
      %v1217 = vsel %vm1215, %v1216, %v1147
      %v1218 = vshrl.u32 %v1217, 6
      %v1219 = vand.u32 %v1217, 63
      %v1220 = vsub.s32 0, %v1219
      %v1221 = vsel %vm1215, %v1220, %v1219
      %vm1222 = vcmp.lt.s32.totalorder %v1148, 0
      %v1223 = vsub.s32 0, %v1148
      %v1224 = vsel %vm1222, %v1223, %v1148
      %v1225 = vshrl.u32 %v1224, 6
      %v1226 = vand.u32 %v1224, 63
      %v1227 = vsub.s32 0, %v1226
      %v1228 = vsel %vm1222, %v1227, %v1226
      %vm1229 = vcmp.lt.s32.totalorder %v1149, 0
      %v1230 = vsub.s32 0, %v1149
      %v1231 = vsel %vm1229, %v1230, %v1149
      %v1232 = vshrl.u32 %v1231, 6
      %v1233 = vand.u32 %v1231, 63
      %v1234 = vsub.s32 0, %v1233
      %v1235 = vsel %vm1229, %v1234, %v1233
      %vm1236 = vcmp.lt.s32.totalorder %v1150, 0
      %v1237 = vsub.s32 0, %v1150
      %v1238 = vsel %vm1236, %v1237, %v1150
      %v1239 = vshrl.u32 %v1238, 6
      %v1240 = vand.u32 %v1238, 63
      %v1241 = vsub.s32 0, %v1240
      %v1242 = vsel %vm1236, %v1241, %v1240
      %vm1243 = vcmp.lt.s32.totalorder %v1151, 0
      %v1244 = vsub.s32 0, %v1151
      %v1245 = vsel %vm1243, %v1244, %v1151
      %v1246 = vshrl.u32 %v1245, 6
      %v1247 = vand.u32 %v1245, 63
      %v1248 = vsub.s32 0, %v1247
      %v1249 = vsel %vm1243, %v1248, %v1247
      %vm1250 = vcmp.lt.s32.totalorder %v1152, 0
      %v1251 = vsub.s32 0, %v1152
      %v1252 = vsel %vm1250, %v1251, %v1152
      %v1253 = vshrl.u32 %v1252, 6
      %v1254 = vand.u32 %v1252, 63
      %v1255 = vsub.s32 0, %v1254
      %v1256 = vsel %vm1250, %v1255, %v1254
      %vm1257 = vcmp.lt.s32.totalorder %v1153, 0
      %v1258 = vsub.s32 0, %v1153
      %v1259 = vsel %vm1257, %v1258, %v1153
      %v1260 = vshrl.u32 %v1259, 6
      %v1261 = vand.u32 %v1259, 63
      %v1262 = vsub.s32 0, %v1261
      %v1263 = vsel %vm1257, %v1262, %v1261
      %vm1264 = vcmp.lt.s32.totalorder %v1154, 0
      %v1265 = vsub.s32 0, %v1154
      %v1266 = vsel %vm1264, %v1265, %v1154
      %v1267 = vshrl.u32 %v1266, 6
      %v1268 = vand.u32 %v1266, 63
      %v1269 = vsub.s32 0, %v1268
      %v1270 = vsel %vm1264, %v1269, %v1268
      %vm1271 = vcmp.lt.s32.totalorder %v1155, 0
      %v1272 = vsub.s32 0, %v1155
      %v1273 = vsel %vm1271, %v1272, %v1155
      %v1274 = vshrl.u32 %v1273, 6
      %v1275 = vand.u32 %v1273, 63
      %v1276 = vsub.s32 0, %v1275
      %v1277 = vsel %vm1271, %v1276, %v1275
      %vm1278 = vcmp.lt.s32.totalorder %v1156, 0
      %v1279 = vsub.s32 0, %v1156
      %v1280 = vsel %vm1278, %v1279, %v1156
      %v1281 = vshrl.u32 %v1280, 6
      %v1282 = vand.u32 %v1280, 63
      %v1283 = vsub.s32 0, %v1282
      %v1284 = vsel %vm1278, %v1283, %v1282
      %vm1285 = vcmp.lt.s32.totalorder %v1157, 0
      %v1286 = vsub.s32 0, %v1157
      %v1287 = vsel %vm1285, %v1286, %v1157
      %v1288 = vshrl.u32 %v1287, 6
      %v1289 = vand.u32 %v1287, 63
      %v1290 = vsub.s32 0, %v1289
      %v1291 = vsel %vm1285, %v1290, %v1289
      %vm1292 = vcmp.lt.s32.totalorder %v1158, 0
      %v1293 = vsub.s32 0, %v1158
      %v1294 = vsel %vm1292, %v1293, %v1158
      %v1295 = vshrl.u32 %v1294, 6
      %v1296 = vand.u32 %v1294, 63
      %v1297 = vsub.s32 0, %v1296
      %v1298 = vsel %vm1292, %v1297, %v1296
      %vm1299 = vcmp.lt.s32.totalorder %v1159, 0
      %v1300 = vsub.s32 0, %v1159
      %v1301 = vsel %vm1299, %v1300, %v1159
      %v1302 = vshrl.u32 %v1301, 6
      %v1303 = vand.u32 %v1301, 63
      %v1304 = vsub.s32 0, %v1303
      %v1305 = vsel %vm1299, %v1304, %v1303
      %vm1306 = vcmp.lt.s32.totalorder %v1160, 0
      %v1307 = vsub.s32 0, %v1160
      %v1308 = vsel %vm1306, %v1307, %v1160
      %v1309 = vshrl.u32 %v1308, 6
      %v1310 = vand.u32 %v1308, 63
      %v1311 = vsub.s32 0, %v1310
      %v1312 = vsel %vm1306, %v1311, %v1310
      %vm1313 = vcmp.lt.s32.totalorder %v1161, 0
      %v1314 = vsub.s32 0, %v1161
      %v1315 = vsel %vm1313, %v1314, %v1161
      %v1316 = vshrl.u32 %v1315, 6
      %v1317 = vand.u32 %v1315, 63
      %v1318 = vsub.s32 0, %v1317
      %v1319 = vsel %vm1313, %v1318, %v1317
      %vm1320 = vcmp.lt.s32.totalorder %v1162, 0
      %v1321 = vsub.s32 0, %v1162
      %v1322 = vsel %vm1320, %v1321, %v1162
      %v1323 = vshrl.u32 %v1322, 6
      %v1324 = vand.u32 %v1322, 63
      %v1325 = vsub.s32 0, %v1324
      %v1326 = vsel %vm1320, %v1325, %v1324
      %vm1327 = vcmp.lt.s32.totalorder %v1163, 0
      %v1328 = vsub.s32 0, %v1163
      %v1329 = vsel %vm1327, %v1328, %v1163
      %v1330 = vshrl.u32 %v1329, 6
      %v1331 = vand.u32 %v1329, 63
      %v1332 = vsub.s32 0, %v1331
      %v1333 = vsel %vm1327, %v1332, %v1331
      %vm1334 = vcmp.lt.s32.totalorder %v1164, 0
      %v1335 = vsub.s32 0, %v1164
      %v1336 = vsel %vm1334, %v1335, %v1164
      %v1337 = vshrl.u32 %v1336, 6
      %v1338 = vand.u32 %v1336, 63
      %v1339 = vsub.s32 0, %v1338
      %v1340 = vsel %vm1334, %v1339, %v1338
      %vm1341 = vcmp.lt.s32.totalorder %v1165, 0
      %v1342 = vsub.s32 0, %v1165
      %v1343 = vsel %vm1341, %v1342, %v1165
      %v1344 = vshrl.u32 %v1343, 6
      %v1345 = vand.u32 %v1343, 63
      %v1346 = vsub.s32 0, %v1345
      %v1347 = vsel %vm1341, %v1346, %v1345
      %vm1348 = vcmp.lt.s32.totalorder %v1166, 0
      %v1349 = vsub.s32 0, %v1166
      %v1350 = vsel %vm1348, %v1349, %v1166
      %v1351 = vshrl.u32 %v1350, 6
      %v1352 = vand.u32 %v1350, 63
      %v1353 = vsub.s32 0, %v1352
      %v1354 = vsel %vm1348, %v1353, %v1352
      %vm1355 = vcmp.lt.s32.totalorder %v1167, 0
      %v1356 = vsub.s32 0, %v1167
      %v1357 = vsel %vm1355, %v1356, %v1167
      %v1358 = vshrl.u32 %v1357, 6
      %v1359 = vand.u32 %v1357, 63
      %v1360 = vsub.s32 0, %v1359
      %v1361 = vsel %vm1355, %v1360, %v1359
      %vm1362 = vcmp.lt.s32.totalorder %v1168, 0
      %v1363 = vsub.s32 0, %v1168
      %v1364 = vsel %vm1362, %v1363, %v1168
      %v1365 = vshrl.u32 %v1364, 6
      %v1366 = vand.u32 %v1364, 63
      %v1367 = vsub.s32 0, %v1366
      %v1368 = vsel %vm1362, %v1367, %v1366
      %vm1369 = vcmp.lt.s32.totalorder %v1169, 0
      %v1370 = vsub.s32 0, %v1169
      %v1371 = vsel %vm1369, %v1370, %v1169
      %v1372 = vshrl.u32 %v1371, 6
      %v1373 = vand.u32 %v1371, 63
      %v1374 = vsub.s32 0, %v1373
      %v1375 = vsel %vm1369, %v1374, %v1373
      %vm1376 = vcmp.lt.s32.totalorder %v1170, 0
      %v1377 = vsub.s32 0, %v1170
      %v1378 = vsel %vm1376, %v1377, %v1170
      %v1379 = vshrl.u32 %v1378, 6
      %v1380 = vand.u32 %v1378, 63
      %v1381 = vsub.s32 0, %v1380
      %v1382 = vsel %vm1376, %v1381, %v1380
      %vm1383 = vcmp.lt.s32.totalorder %v1171, 0
      %v1384 = vsub.s32 0, %v1171
      %v1385 = vsel %vm1383, %v1384, %v1171
      %v1386 = vshrl.u32 %v1385, 6
      %v1387 = vand.u32 %v1385, 63
      %v1388 = vsub.s32 0, %v1387
      %v1389 = vsel %vm1383, %v1388, %v1387
      %vm1390 = vcmp.lt.s32.totalorder %v1172, 0
      %v1391 = vsub.s32 0, %v1172
      %v1392 = vsel %vm1390, %v1391, %v1172
      %v1393 = vshrl.u32 %v1392, 6
      %v1394 = vand.u32 %v1392, 63
      %v1395 = vsub.s32 0, %v1394
      %v1396 = vsel %vm1390, %v1395, %v1394
      %vm1397 = vcmp.ne.s32.totalorder %v1179, 0
      %vm1398 = vcmp.ne.s32.totalorder %v1186, 0
      %vm1399 = vcmp.ne.s32.totalorder %v1193, 0
      %vm1400 = vcmp.ne.s32.totalorder %v1200, 0
      %vm1401 = vcmp.ne.s32.totalorder %v1207, 0
      %vm1402 = vcmp.ne.s32.totalorder %v1214, 0
      %vm1403 = vcmp.ne.s32.totalorder %v1221, 0
      %vm1404 = vcmp.ne.s32.totalorder %v1228, 0
      %vm1405 = vcmp.ne.s32.totalorder %v1235, 0
      %vm1406 = vcmp.ne.s32.totalorder %v1242, 0
      %vm1407 = vcmp.ne.s32.totalorder %v1249, 0
      %vm1408 = vcmp.ne.s32.totalorder %v1256, 0
      %vm1409 = vcmp.ne.s32.totalorder %v1263, 0
      %vm1410 = vcmp.ne.s32.totalorder %v1270, 0
      %vm1411 = vcmp.ne.s32.totalorder %v1277, 0
      %vm1412 = vcmp.ne.s32.totalorder %v1284, 0
      %vm1413 = vcmp.ne.s32.totalorder %v1291, 0
      %vm1414 = vcmp.ne.s32.totalorder %v1298, 0
      %vm1415 = vcmp.ne.s32.totalorder %v1305, 0
      %vm1416 = vcmp.ne.s32.totalorder %v1312, 0
      %vm1417 = vcmp.ne.s32.totalorder %v1319, 0
      %vm1418 = vcmp.ne.s32.totalorder %v1326, 0
      %vm1419 = vcmp.ne.s32.totalorder %v1333, 0
      %vm1420 = vcmp.ne.s32.totalorder %v1340, 0
      %vm1421 = vcmp.ne.s32.totalorder %v1347, 0
      %vm1422 = vcmp.ne.s32.totalorder %v1354, 0
      %vm1423 = vcmp.ne.s32.totalorder %v1361, 0
      %vm1424 = vcmp.ne.s32.totalorder %v1368, 0
      %vm1425 = vcmp.ne.s32.totalorder %v1375, 0
      %vm1426 = vcmp.ne.s32.totalorder %v1382, 0
      %vm1427 = vcmp.ne.s32.totalorder %v1389, 0
      %vm1428 = vcmp.ne.s32.totalorder %v1396, 0
      %vm1429 = vcmp.lt.s32.totalorder %v1179, 0
      %vm1430 = vcmp.lt.s32.totalorder %v1186, 0
      %vm1431 = vcmp.lt.s32.totalorder %v1193, 0
      %vm1432 = vcmp.lt.s32.totalorder %v1200, 0
      %vm1433 = vcmp.lt.s32.totalorder %v1207, 0
      %vm1434 = vcmp.lt.s32.totalorder %v1214, 0
      %vm1435 = vcmp.lt.s32.totalorder %v1221, 0
      %vm1436 = vcmp.lt.s32.totalorder %v1228, 0
      %vm1437 = vcmp.lt.s32.totalorder %v1235, 0
      %vm1438 = vcmp.lt.s32.totalorder %v1242, 0
      %vm1439 = vcmp.lt.s32.totalorder %v1249, 0
      %vm1440 = vcmp.lt.s32.totalorder %v1256, 0
      %vm1441 = vcmp.lt.s32.totalorder %v1263, 0
      %vm1442 = vcmp.lt.s32.totalorder %v1270, 0
      %vm1443 = vcmp.lt.s32.totalorder %v1277, 0
      %vm1444 = vcmp.lt.s32.totalorder %v1284, 0
      %vm1445 = vcmp.lt.s32.totalorder %v1291, 0
      %vm1446 = vcmp.lt.s32.totalorder %v1298, 0
      %vm1447 = vcmp.lt.s32.totalorder %v1305, 0
      %vm1448 = vcmp.lt.s32.totalorder %v1312, 0
      %vm1449 = vcmp.lt.s32.totalorder %v1319, 0
      %vm1450 = vcmp.lt.s32.totalorder %v1326, 0
      %vm1451 = vcmp.lt.s32.totalorder %v1333, 0
      %vm1452 = vcmp.lt.s32.totalorder %v1340, 0
      %vm1453 = vcmp.lt.s32.totalorder %v1347, 0
      %vm1454 = vcmp.lt.s32.totalorder %v1354, 0
      %vm1455 = vcmp.lt.s32.totalorder %v1361, 0
      %vm1456 = vcmp.lt.s32.totalorder %v1368, 0
      %vm1457 = vcmp.lt.s32.totalorder %v1375, 0
      %vm1458 = vcmp.lt.s32.totalorder %v1382, 0
      %vm1459 = vcmp.lt.s32.totalorder %v1389, 0
      %vm1460 = vcmp.lt.s32.totalorder %v1396, 0
      %vm1461 = vmand %vm1429, %vm1397
      %vm1462 = vmand %vm1430, %vm1398
      %vm1463 = vmand %vm1431, %vm1399
      %vm1464 = vmand %vm1432, %vm1400
      %vm1465 = vmand %vm1433, %vm1401
      %vm1466 = vmand %vm1434, %vm1402
      %vm1467 = vmand %vm1435, %vm1403
      %vm1468 = vmand %vm1436, %vm1404
      %vm1469 = vmand %vm1437, %vm1405
      %vm1470 = vmand %vm1438, %vm1406
      %vm1471 = vmand %vm1439, %vm1407
      %vm1472 = vmand %vm1440, %vm1408
      %vm1473 = vmand %vm1441, %vm1409
      %vm1474 = vmand %vm1442, %vm1410
      %vm1475 = vmand %vm1443, %vm1411
      %vm1476 = vmand %vm1444, %vm1412
      %vm1477 = vmand %vm1445, %vm1413
      %vm1478 = vmand %vm1446, %vm1414
      %vm1479 = vmand %vm1447, %vm1415
      %vm1480 = vmand %vm1448, %vm1416
      %vm1481 = vmand %vm1449, %vm1417
      %vm1482 = vmand %vm1450, %vm1418
      %vm1483 = vmand %vm1451, %vm1419
      %vm1484 = vmand %vm1452, %vm1420
      %vm1485 = vmand %vm1453, %vm1421
      %vm1486 = vmand %vm1454, %vm1422
      %vm1487 = vmand %vm1455, %vm1423
      %vm1488 = vmand %vm1456, %vm1424
      %vm1489 = vmand %vm1457, %vm1425
      %vm1490 = vmand %vm1458, %vm1426
      %vm1491 = vmand %vm1459, %vm1427
      %vm1492 = vmand %vm1460, %vm1428
      %v1493 = vadd.s32 %v1179, 64
      %v1494 = vadd.s32 %v1186, 64
      %v1495 = vadd.s32 %v1193, 64
      %v1496 = vadd.s32 %v1200, 64
      %v1497 = vadd.s32 %v1207, 64
      %v1498 = vadd.s32 %v1214, 64
      %v1499 = vadd.s32 %v1221, 64
      %v1500 = vadd.s32 %v1228, 64
      %v1501 = vadd.s32 %v1235, 64
      %v1502 = vadd.s32 %v1242, 64
      %v1503 = vadd.s32 %v1249, 64
      %v1504 = vadd.s32 %v1256, 64
      %v1505 = vadd.s32 %v1263, 64
      %v1506 = vadd.s32 %v1270, 64
      %v1507 = vadd.s32 %v1277, 64
      %v1508 = vadd.s32 %v1284, 64
      %v1509 = vadd.s32 %v1291, 64
      %v1510 = vadd.s32 %v1298, 64
      %v1511 = vadd.s32 %v1305, 64
      %v1512 = vadd.s32 %v1312, 64
      %v1513 = vadd.s32 %v1319, 64
      %v1514 = vadd.s32 %v1326, 64
      %v1515 = vadd.s32 %v1333, 64
      %v1516 = vadd.s32 %v1340, 64
      %v1517 = vadd.s32 %v1347, 64
      %v1518 = vadd.s32 %v1354, 64
      %v1519 = vadd.s32 %v1361, 64
      %v1520 = vadd.s32 %v1368, 64
      %v1521 = vadd.s32 %v1375, 64
      %v1522 = vadd.s32 %v1382, 64
      %v1523 = vadd.s32 %v1389, 64
      %v1524 = vadd.s32 %v1396, 64
      %v1525 = vsel %vm1461, %v1493, %v1179
      %v1526 = vsel %vm1462, %v1494, %v1186
      %v1527 = vsel %vm1463, %v1495, %v1193
      %v1528 = vsel %vm1464, %v1496, %v1200
      %v1529 = vsel %vm1465, %v1497, %v1207
      %v1530 = vsel %vm1466, %v1498, %v1214
      %v1531 = vsel %vm1467, %v1499, %v1221
      %v1532 = vsel %vm1468, %v1500, %v1228
      %v1533 = vsel %vm1469, %v1501, %v1235
      %v1534 = vsel %vm1470, %v1502, %v1242
      %v1535 = vsel %vm1471, %v1503, %v1249
      %v1536 = vsel %vm1472, %v1504, %v1256
      %v1537 = vsel %vm1473, %v1505, %v1263
      %v1538 = vsel %vm1474, %v1506, %v1270
      %v1539 = vsel %vm1475, %v1507, %v1277
      %v1540 = vsel %vm1476, %v1508, %v1284
      %v1541 = vsel %vm1477, %v1509, %v1291
      %v1542 = vsel %vm1478, %v1510, %v1298
      %v1543 = vsel %vm1479, %v1511, %v1305
      %v1544 = vsel %vm1480, %v1512, %v1312
      %v1545 = vsel %vm1481, %v1513, %v1319
      %v1546 = vsel %vm1482, %v1514, %v1326
      %v1547 = vsel %vm1483, %v1515, %v1333
      %v1548 = vsel %vm1484, %v1516, %v1340
      %v1549 = vsel %vm1485, %v1517, %v1347
      %v1550 = vsel %vm1486, %v1518, %v1354
      %v1551 = vsel %vm1487, %v1519, %v1361
      %v1552 = vsel %vm1488, %v1520, %v1368
      %v1553 = vsel %vm1489, %v1521, %v1375
      %v1554 = vsel %vm1490, %v1522, %v1382
      %v1555 = vsel %vm1491, %v1523, %v1389
      %v1556 = vsel %vm1492, %v1524, %v1396
      %v1557 = vld [vmem:[%s4] sm:$0x3]
      %v1559 = vperm.slane %v1557, 0
      %v1560 = vperm.slane %v1557, 1
      %v1563 = vadd.f32 %v1559, %v266
      %v1564 = vadd.f32 %v1560, %v267
      %v1565 = vadd.f32 %v1559, %v268
      %v1566 = vadd.f32 %v1560, %v269
      %v1567 = vadd.f32 %v1559, %v270
      %v1568 = vadd.f32 %v1560, %v271
      %v1569 = vadd.f32 %v1559, %v272
      %v1570 = vadd.f32 %v1560, %v273
      %v1571 = vadd.f32 %v1559, %v274
      %v1572 = vadd.f32 %v1560, %v275
      %v1573 = vadd.f32 %v1559, %v276
      %v1574 = vadd.f32 %v1560, %v277
      %v1575 = vadd.f32 %v1559, %v278
      %v1576 = vadd.f32 %v1560, %v279
      %v1577 = vadd.f32 %v1559, %v280
      %v1578 = vadd.f32 %v1560, %v281
      %v1579 = vadd.f32 %v1559, %v282
      %v1580 = vadd.f32 %v1560, %v283
      %v1581 = vadd.f32 %v1559, %v284
      %v1582 = vadd.f32 %v1560, %v285
      %v1583 = vadd.f32 %v1559, %v286
      %v1584 = vadd.f32 %v1560, %v287
      %v1585 = vadd.f32 %v1559, %v288
      %v1586 = vadd.f32 %v1560, %v289
      %v1587 = vadd.f32 %v1559, %v290
      %v1588 = vadd.f32 %v1560, %v291
      %v1589 = vadd.f32 %v1559, %v292
      %v1590 = vadd.f32 %v1560, %v293
      %v1591 = vadd.f32 %v1559, %v294
      %v1592 = vadd.f32 %v1560, %v295
      %v1593 = vadd.f32 %v1559, %v296
      %v1594 = vadd.f32 %v1560, %v297
      %v1595 = vadd.f32 %v1559, %v298
      %v1596 = vadd.f32 %v1560, %v299
      %v1597 = vadd.f32 %v1559, %v300
      %v1598 = vadd.f32 %v1560, %v301
      %v1599 = vadd.f32 %v1559, %v302
      %v1600 = vadd.f32 %v1560, %v303
      %v1601 = vadd.f32 %v1559, %v304
      %v1602 = vadd.f32 %v1560, %v305
      %v1603 = vadd.f32 %v1559, %v306
      %v1604 = vadd.f32 %v1560, %v307
      %v1605 = vadd.f32 %v1559, %v308
      %v1606 = vadd.f32 %v1560, %v309
      %v1607 = vadd.f32 %v1559, %v310
      %v1608 = vadd.f32 %v1560, %v311
      %v1609 = vadd.f32 %v1559, %v312
      %v1610 = vadd.f32 %v1560, %v313
      %v1611 = vadd.f32 %v1559, %v314
      %v1612 = vadd.f32 %v1560, %v315
      %v1613 = vadd.f32 %v1559, %v316
      %v1614 = vadd.f32 %v1560, %v317
      %v1615 = vadd.f32 %v1559, %v318
      %v1616 = vadd.f32 %v1560, %v319
      %v1617 = vadd.f32 %v1559, %v320
      %v1618 = vadd.f32 %v1560, %v321
      %v1619 = vadd.f32 %v1559, %v322
      %v1620 = vadd.f32 %v1560, %v323
      %v1621 = vadd.f32 %v1559, %v324
      %v1622 = vadd.f32 %v1560, %v325
      %v1623 = vadd.f32 %v1559, %v326
      %v1624 = vadd.f32 %v1560, %v327
      %v1625 = vadd.f32 %v1559, %v328
      %v1626 = vadd.f32 %v1560, %v329
      %v1627 = vrot.slane %v1044, 7
      %v1628 = vrot.slane %v1045, 7
      %v1629 = vrot.slane %v1046, 7
      %v1630 = vrot.slane %v1047, 7
      %v1631 = vrot.slane %v1048, 7
      %v1632 = vrot.slane %v1049, 7
      %v1633 = vrot.slane %v1050, 7
      %v1634 = vrot.slane %v1051, 7
      %v1635 = vrot.slane %v1052, 7
      %v1636 = vrot.slane %v1053, 7
      %v1637 = vrot.slane %v1054, 7
      %v1638 = vrot.slane %v1055, 7
      %v1639 = vrot.slane %v1056, 7
      %v1640 = vrot.slane %v1057, 7
      %v1641 = vrot.slane %v1058, 7
      %v1642 = vrot.slane %v1059, 7
      %v1643 = vrot.slane %v1060, 7
      %v1644 = vrot.slane %v1061, 7
      %v1645 = vrot.slane %v1062, 7
      %v1646 = vrot.slane %v1063, 7
      %v1647 = vrot.slane %v1064, 7
      %v1648 = vrot.slane %v1065, 7
      %v1649 = vrot.slane %v1066, 7
      %v1650 = vrot.slane %v1067, 7
      %v1651 = vrot.slane %v1068, 7
      %v1652 = vrot.slane %v1069, 7
      %v1653 = vrot.slane %v1070, 7
      %v1654 = vrot.slane %v1071, 7
      %v1655 = vrot.slane %v1072, 7
      %v1656 = vrot.slane %v1073, 7
      %v1657 = vrot.slane %v1074, 7
      %v1658 = vrot.slane %v1075, 7
      %v1659 = vrot.slane %v1076, 7
      %v1660 = vrot.slane %v1077, 7
      %v1661 = vrot.slane %v1078, 7
      %v1662 = vrot.slane %v1079, 7
      %v1663 = vrot.slane %v1080, 7
      %v1664 = vrot.slane %v1081, 7
      %v1665 = vrot.slane %v1082, 7
      %v1666 = vrot.slane %v1083, 7
      %v1667 = vrot.slane %v1084, 7
      %v1668 = vrot.slane %v1085, 7
      %v1669 = vrot.slane %v1086, 7
      %v1670 = vrot.slane %v1087, 7
      %v1671 = vrot.slane %v1088, 7
      %v1672 = vrot.slane %v1089, 7
      %v1673 = vrot.slane %v1090, 7
      %v1674 = vrot.slane %v1091, 7
      %v1675 = vrot.slane %v1092, 7
      %v1676 = vrot.slane %v1093, 7
      %v1677 = vrot.slane %v1094, 7
      %v1678 = vrot.slane %v1095, 7
      %v1679 = vrot.slane %v1096, 7
      %v1680 = vrot.slane %v1097, 7
      %v1681 = vrot.slane %v1098, 7
      %v1682 = vrot.slane %v1099, 7
      %v1683 = vrot.slane %v1100, 7
      %v1684 = vrot.slane %v1101, 7
      %v1685 = vrot.slane %v1102, 7
      %v1686 = vrot.slane %v1103, 7
      %v1687 = vrot.slane %v1104, 7
      %v1688 = vrot.slane %v1105, 7
      %v1689 = vrot.slane %v1106, 7
      %v1690 = vrot.slane %v1107, 7
      %vm1691 = vcmp.lt.s32.totalorder %v1141, 1
      %v1692 = vsel %vm1691, %v1687, %v1689
      %v1693 = vsel %vm1691, %v1688, %v1690
      %v1694 = vsel %vm1691, %v1685, %v1687
      %v1695 = vsel %vm1691, %v1686, %v1688
      %v1696 = vsel %vm1691, %v1683, %v1685
      %v1697 = vsel %vm1691, %v1684, %v1686
      %v1698 = vsel %vm1691, %v1681, %v1683
      %v1699 = vsel %vm1691, %v1682, %v1684
      %v1700 = vsel %vm1691, %v1679, %v1681
      %v1701 = vsel %vm1691, %v1680, %v1682
      %v1702 = vsel %vm1691, %v1677, %v1679
      %v1703 = vsel %vm1691, %v1678, %v1680
      %v1704 = vsel %vm1691, %v1675, %v1677
      %v1705 = vsel %vm1691, %v1676, %v1678
      %v1706 = vsel %vm1691, %v1673, %v1675
      %v1707 = vsel %vm1691, %v1674, %v1676
      %v1708 = vsel %vm1691, %v1671, %v1673
      %v1709 = vsel %vm1691, %v1672, %v1674
      %v1710 = vsel %vm1691, %v1669, %v1671
      %v1711 = vsel %vm1691, %v1670, %v1672
      %v1712 = vsel %vm1691, %v1667, %v1669
      %v1713 = vsel %vm1691, %v1668, %v1670
      %v1714 = vsel %vm1691, %v1665, %v1667
      %v1715 = vsel %vm1691, %v1666, %v1668
      %v1716 = vsel %vm1691, %v1663, %v1665
      %v1717 = vsel %vm1691, %v1664, %v1666
      %v1718 = vsel %vm1691, %v1661, %v1663
      %v1719 = vsel %vm1691, %v1662, %v1664
      %v1720 = vsel %vm1691, %v1659, %v1661
      %v1721 = vsel %vm1691, %v1660, %v1662
      %v1722 = vsel %vm1691, %v1657, %v1659
      %v1723 = vsel %vm1691, %v1658, %v1660
      %v1724 = vsel %vm1691, %v1655, %v1657
      %v1725 = vsel %vm1691, %v1656, %v1658
      %v1726 = vsel %vm1691, %v1653, %v1655
      %v1727 = vsel %vm1691, %v1654, %v1656
      %v1728 = vsel %vm1691, %v1651, %v1653
      %v1729 = vsel %vm1691, %v1652, %v1654
      %v1730 = vsel %vm1691, %v1649, %v1651
      %v1731 = vsel %vm1691, %v1650, %v1652
      %v1732 = vsel %vm1691, %v1647, %v1649
      %v1733 = vsel %vm1691, %v1648, %v1650
      %v1734 = vsel %vm1691, %v1645, %v1647
      %v1735 = vsel %vm1691, %v1646, %v1648
      %v1736 = vsel %vm1691, %v1643, %v1645
      %v1737 = vsel %vm1691, %v1644, %v1646
      %v1738 = vsel %vm1691, %v1641, %v1643
      %v1739 = vsel %vm1691, %v1642, %v1644
      %v1740 = vsel %vm1691, %v1639, %v1641
      %v1741 = vsel %vm1691, %v1640, %v1642
      %v1742 = vsel %vm1691, %v1637, %v1639
      %v1743 = vsel %vm1691, %v1638, %v1640
      %v1744 = vsel %vm1691, %v1635, %v1637
      %v1745 = vsel %vm1691, %v1636, %v1638
      %v1746 = vsel %vm1691, %v1633, %v1635
      %v1747 = vsel %vm1691, %v1634, %v1636
      %v1748 = vsel %vm1691, %v1631, %v1633
      %v1749 = vsel %vm1691, %v1632, %v1634
      %v1750 = vsel %vm1691, %v1629, %v1631
      %v1751 = vsel %vm1691, %v1630, %v1632
      %v1752 = vsel %vm1691, %v1627, %v1629
      %v1753 = vsel %vm1691, %v1628, %v1630
      %v1754 = vsel %vm1691, %v1689, %v1627
      %v1755 = vsel %vm1691, %v1690, %v1628
      %v1756 = vadd.s32 %v1525, 4294967295
      %v1757 = vadd.s32 %v1526, 4294967295
      %v1758 = vadd.s32 %v1527, 4294967295
      %v1759 = vadd.s32 %v1528, 4294967295
      %v1760 = vadd.s32 %v1529, 4294967295
      %v1761 = vadd.s32 %v1530, 4294967295
      %v1762 = vadd.s32 %v1531, 4294967295
      %v1763 = vadd.s32 %v1532, 4294967295
      %v1764 = vadd.s32 %v1533, 4294967295
      %v1765 = vadd.s32 %v1534, 4294967295
      %v1766 = vadd.s32 %v1535, 4294967295
      %v1767 = vadd.s32 %v1536, 4294967295
      %v1768 = vadd.s32 %v1537, 4294967295
      %v1769 = vadd.s32 %v1538, 4294967295
      %v1770 = vadd.s32 %v1539, 4294967295
      %v1771 = vadd.s32 %v1540, 4294967295
      %v1772 = vadd.s32 %v1541, 4294967295
      %v1773 = vadd.s32 %v1542, 4294967295
      %v1774 = vadd.s32 %v1543, 4294967295
      %v1775 = vadd.s32 %v1544, 4294967295
      %v1776 = vadd.s32 %v1545, 4294967295
      %v1777 = vadd.s32 %v1546, 4294967295
      %v1778 = vadd.s32 %v1547, 4294967295
      %v1779 = vadd.s32 %v1548, 4294967295
      %v1780 = vadd.s32 %v1549, 4294967295
      %v1781 = vadd.s32 %v1550, 4294967295
      %v1782 = vadd.s32 %v1551, 4294967295
      %v1783 = vadd.s32 %v1552, 4294967295
      %v1784 = vadd.s32 %v1553, 4294967295
      %v1785 = vadd.s32 %v1554, 4294967295
      %v1786 = vadd.s32 %v1555, 4294967295
      %v1787 = vadd.s32 %v1556, 4294967295
      %vm1788 = vcmp.ge.s32.totalorder %v1756, 0
      %vm1789 = vcmp.ge.s32.totalorder %v1757, 0
      %vm1790 = vcmp.ge.s32.totalorder %v1758, 0
      %vm1791 = vcmp.ge.s32.totalorder %v1759, 0
      %vm1792 = vcmp.ge.s32.totalorder %v1760, 0
      %vm1793 = vcmp.ge.s32.totalorder %v1761, 0
      %vm1794 = vcmp.ge.s32.totalorder %v1762, 0
      %vm1795 = vcmp.ge.s32.totalorder %v1763, 0
      %vm1796 = vcmp.ge.s32.totalorder %v1764, 0
      %vm1797 = vcmp.ge.s32.totalorder %v1765, 0
      %vm1798 = vcmp.ge.s32.totalorder %v1766, 0
      %vm1799 = vcmp.ge.s32.totalorder %v1767, 0
      %vm1800 = vcmp.ge.s32.totalorder %v1768, 0
      %vm1801 = vcmp.ge.s32.totalorder %v1769, 0
      %vm1802 = vcmp.ge.s32.totalorder %v1770, 0
      %vm1803 = vcmp.ge.s32.totalorder %v1771, 0
      %vm1804 = vcmp.ge.s32.totalorder %v1772, 0
      %vm1805 = vcmp.ge.s32.totalorder %v1773, 0
      %vm1806 = vcmp.ge.s32.totalorder %v1774, 0
      %vm1807 = vcmp.ge.s32.totalorder %v1775, 0
      %vm1808 = vcmp.ge.s32.totalorder %v1776, 0
      %vm1809 = vcmp.ge.s32.totalorder %v1777, 0
      %vm1810 = vcmp.ge.s32.totalorder %v1778, 0
      %vm1811 = vcmp.ge.s32.totalorder %v1779, 0
      %vm1812 = vcmp.ge.s32.totalorder %v1780, 0
      %vm1813 = vcmp.ge.s32.totalorder %v1781, 0
      %vm1814 = vcmp.ge.s32.totalorder %v1782, 0
      %vm1815 = vcmp.ge.s32.totalorder %v1783, 0
      %vm1816 = vcmp.ge.s32.totalorder %v1784, 0
      %vm1817 = vcmp.ge.s32.totalorder %v1785, 0
      %vm1818 = vcmp.ge.s32.totalorder %v1786, 0
      %vm1819 = vcmp.ge.s32.totalorder %v1787, 0
      %vm1820 = vcmp.lt.s32.totalorder %v1756, 64
      %vm1821 = vcmp.lt.s32.totalorder %v1757, 64
      %vm1822 = vcmp.lt.s32.totalorder %v1758, 64
      %vm1823 = vcmp.lt.s32.totalorder %v1759, 64
      %vm1824 = vcmp.lt.s32.totalorder %v1760, 64
      %vm1825 = vcmp.lt.s32.totalorder %v1761, 64
      %vm1826 = vcmp.lt.s32.totalorder %v1762, 64
      %vm1827 = vcmp.lt.s32.totalorder %v1763, 64
      %vm1828 = vcmp.lt.s32.totalorder %v1764, 64
      %vm1829 = vcmp.lt.s32.totalorder %v1765, 64
      %vm1830 = vcmp.lt.s32.totalorder %v1766, 64
      %vm1831 = vcmp.lt.s32.totalorder %v1767, 64
      %vm1832 = vcmp.lt.s32.totalorder %v1768, 64
      %vm1833 = vcmp.lt.s32.totalorder %v1769, 64
      %vm1834 = vcmp.lt.s32.totalorder %v1770, 64
      %vm1835 = vcmp.lt.s32.totalorder %v1771, 64
      %vm1836 = vcmp.lt.s32.totalorder %v1772, 64
      %vm1837 = vcmp.lt.s32.totalorder %v1773, 64
      %vm1838 = vcmp.lt.s32.totalorder %v1774, 64
      %vm1839 = vcmp.lt.s32.totalorder %v1775, 64
      %vm1840 = vcmp.lt.s32.totalorder %v1776, 64
      %vm1841 = vcmp.lt.s32.totalorder %v1777, 64
      %vm1842 = vcmp.lt.s32.totalorder %v1778, 64
      %vm1843 = vcmp.lt.s32.totalorder %v1779, 64
      %vm1844 = vcmp.lt.s32.totalorder %v1780, 64
      %vm1845 = vcmp.lt.s32.totalorder %v1781, 64
      %vm1846 = vcmp.lt.s32.totalorder %v1782, 64
      %vm1847 = vcmp.lt.s32.totalorder %v1783, 64
      %vm1848 = vcmp.lt.s32.totalorder %v1784, 64
      %vm1849 = vcmp.lt.s32.totalorder %v1785, 64
      %vm1850 = vcmp.lt.s32.totalorder %v1786, 64
      %vm1851 = vcmp.lt.s32.totalorder %v1787, 64
      %vm1852 = vmand %vm1788, %vm1820
      %vm1853 = vmand %vm1789, %vm1821
      %vm1854 = vmand %vm1790, %vm1822
      %vm1855 = vmand %vm1791, %vm1823
      %vm1856 = vmand %vm1792, %vm1824
      %vm1857 = vmand %vm1793, %vm1825
      %vm1858 = vmand %vm1794, %vm1826
      %vm1859 = vmand %vm1795, %vm1827
      %vm1860 = vmand %vm1796, %vm1828
      %vm1861 = vmand %vm1797, %vm1829
      %vm1862 = vmand %vm1798, %vm1830
      %vm1863 = vmand %vm1799, %vm1831
      %vm1864 = vmand %vm1800, %vm1832
      %vm1865 = vmand %vm1801, %vm1833
      %vm1866 = vmand %vm1802, %vm1834
      %vm1867 = vmand %vm1803, %vm1835
      %vm1868 = vmand %vm1804, %vm1836
      %vm1869 = vmand %vm1805, %vm1837
      %vm1870 = vmand %vm1806, %vm1838
      %vm1871 = vmand %vm1807, %vm1839
      %vm1872 = vmand %vm1808, %vm1840
      %vm1873 = vmand %vm1809, %vm1841
      %vm1874 = vmand %vm1810, %vm1842
      %vm1875 = vmand %vm1811, %vm1843
      %vm1876 = vmand %vm1812, %vm1844
      %vm1877 = vmand %vm1813, %vm1845
      %vm1878 = vmand %vm1814, %vm1846
      %vm1879 = vmand %vm1815, %vm1847
      %vm1880 = vmand %vm1816, %vm1848
      %vm1881 = vmand %vm1817, %vm1849
      %vm1882 = vmand %vm1818, %vm1850
      %vm1883 = vmand %vm1819, %vm1851
      %v1884 = vpack.c.bf16 %v1755, %v1754
      %v1885 = vpack.c.bf16 %v1753, %v1752
      %v1886 = vpack.c.bf16 %v1751, %v1750
      %v1887 = vpack.c.bf16 %v1749, %v1748
      %v1888 = vpack.c.bf16 %v1747, %v1746
      %v1889 = vpack.c.bf16 %v1745, %v1744
      %v1890 = vpack.c.bf16 %v1743, %v1742
      %v1891 = vpack.c.bf16 %v1741, %v1740
      %v1892 = vpack.c.bf16 %v1739, %v1738
      %v1893 = vpack.c.bf16 %v1737, %v1736
      %v1894 = vpack.c.bf16 %v1735, %v1734
      %v1895 = vpack.c.bf16 %v1733, %v1732
      %v1896 = vpack.c.bf16 %v1731, %v1730
      %v1897 = vpack.c.bf16 %v1729, %v1728
      %v1898 = vpack.c.bf16 %v1727, %v1726
      %v1899 = vpack.c.bf16 %v1725, %v1724
      %v1900 = vpack.c.bf16 %v1723, %v1722
      %v1901 = vpack.c.bf16 %v1721, %v1720
      %v1902 = vpack.c.bf16 %v1719, %v1718
      %v1903 = vpack.c.bf16 %v1717, %v1716
      %v1904 = vpack.c.bf16 %v1715, %v1714
      %v1905 = vpack.c.bf16 %v1713, %v1712
      %v1906 = vpack.c.bf16 %v1711, %v1710
      %v1907 = vpack.c.bf16 %v1709, %v1708
      %v1908 = vpack.c.bf16 %v1707, %v1706
      %v1909 = vpack.c.bf16 %v1705, %v1704
      %v1910 = vpack.c.bf16 %v1703, %v1702
      %v1911 = vpack.c.bf16 %v1701, %v1700
      %v1912 = vpack.c.bf16 %v1699, %v1698
      %v1913 = vpack.c.bf16 %v1697, %v1696
      %v1914 = vpack.c.bf16 %v1695, %v1694
      %v1915 = vpack.c.bf16 %v1693, %v1692
      %v1916 = vsel %vm1852, 1, 0
      %v1917 = vsel %vm1853, 1, 0
      %v1918 = vsel %vm1854, 1, 0
      %v1919 = vsel %vm1855, 1, 0
      %v1920 = vsel %vm1856, 1, 0
      %v1921 = vsel %vm1857, 1, 0
      %v1922 = vsel %vm1858, 1, 0
      %v1923 = vsel %vm1859, 1, 0
      %v1924 = vsel %vm1860, 1, 0
      %v1925 = vsel %vm1861, 1, 0
      %v1926 = vsel %vm1862, 1, 0
      %v1927 = vsel %vm1863, 1, 0
      %v1928 = vsel %vm1864, 1, 0
      %v1929 = vsel %vm1865, 1, 0
      %v1930 = vsel %vm1866, 1, 0
      %v1931 = vsel %vm1867, 1, 0
      %v1932 = vsel %vm1868, 1, 0
      %v1933 = vsel %vm1869, 1, 0
      %v1934 = vsel %vm1870, 1, 0
      %v1935 = vsel %vm1871, 1, 0
      %v1936 = vsel %vm1872, 1, 0
      %v1937 = vsel %vm1873, 1, 0
      %v1938 = vsel %vm1874, 1, 0
      %v1939 = vsel %vm1875, 1, 0
      %v1940 = vsel %vm1876, 1, 0
      %v1941 = vsel %vm1877, 1, 0
      %v1942 = vsel %vm1878, 1, 0
      %v1943 = vsel %vm1879, 1, 0
      %v1944 = vsel %vm1880, 1, 0
      %v1945 = vsel %vm1881, 1, 0
      %v1946 = vsel %vm1882, 1, 0
      %v1947 = vsel %vm1883, 1, 0
      %vm1948 = vcmp.eq.s32.totalorder %v1916, 1
      %vm1949 = vcmp.eq.s32.totalorder %v1917, 1
      %vm1950 = vcmp.eq.s32.totalorder %v1918, 1
      %vm1951 = vcmp.eq.s32.totalorder %v1919, 1
      %vm1952 = vcmp.eq.s32.totalorder %v1920, 1
      %vm1953 = vcmp.eq.s32.totalorder %v1921, 1
      %vm1954 = vcmp.eq.s32.totalorder %v1922, 1
      %vm1955 = vcmp.eq.s32.totalorder %v1923, 1
      %vm1956 = vcmp.eq.s32.totalorder %v1924, 1
      %vm1957 = vcmp.eq.s32.totalorder %v1925, 1
      %vm1958 = vcmp.eq.s32.totalorder %v1926, 1
      %vm1959 = vcmp.eq.s32.totalorder %v1927, 1
      %vm1960 = vcmp.eq.s32.totalorder %v1928, 1
      %vm1961 = vcmp.eq.s32.totalorder %v1929, 1
      %vm1962 = vcmp.eq.s32.totalorder %v1930, 1
      %vm1963 = vcmp.eq.s32.totalorder %v1931, 1
      %vm1964 = vcmp.eq.s32.totalorder %v1932, 1
      %vm1965 = vcmp.eq.s32.totalorder %v1933, 1
      %vm1966 = vcmp.eq.s32.totalorder %v1934, 1
      %vm1967 = vcmp.eq.s32.totalorder %v1935, 1
      %vm1968 = vcmp.eq.s32.totalorder %v1936, 1
      %vm1969 = vcmp.eq.s32.totalorder %v1937, 1
      %vm1970 = vcmp.eq.s32.totalorder %v1938, 1
      %vm1971 = vcmp.eq.s32.totalorder %v1939, 1
      %vm1972 = vcmp.eq.s32.totalorder %v1940, 1
      %vm1973 = vcmp.eq.s32.totalorder %v1941, 1
      %vm1974 = vcmp.eq.s32.totalorder %v1942, 1
      %vm1975 = vcmp.eq.s32.totalorder %v1943, 1
      %vm1976 = vcmp.eq.s32.totalorder %v1944, 1
      %vm1977 = vcmp.eq.s32.totalorder %v1945, 1
      %vm1978 = vcmp.eq.s32.totalorder %v1946, 1
      %vm1979 = vcmp.eq.s32.totalorder %v1947, 1
      %vm1980 = vmpackc.low %vm1948, %vm1948
      %vm1981 = vmpackc.low %vm1949, %vm1949
      %vm1982 = vmpackc.low %vm1950, %vm1950
      %vm1983 = vmpackc.low %vm1951, %vm1951
      %vm1984 = vmpackc.low %vm1952, %vm1952
      %vm1985 = vmpackc.low %vm1953, %vm1953
      %vm1986 = vmpackc.low %vm1954, %vm1954
      %vm1987 = vmpackc.low %vm1955, %vm1955
      %vm1988 = vmpackc.low %vm1956, %vm1956
      %vm1989 = vmpackc.low %vm1957, %vm1957
      %vm1990 = vmpackc.low %vm1958, %vm1958
      %vm1991 = vmpackc.low %vm1959, %vm1959
      %vm1992 = vmpackc.low %vm1960, %vm1960
      %vm1993 = vmpackc.low %vm1961, %vm1961
      %vm1994 = vmpackc.low %vm1962, %vm1962
      %vm1995 = vmpackc.low %vm1963, %vm1963
      %vm1996 = vmpackc.low %vm1964, %vm1964
      %vm1997 = vmpackc.low %vm1965, %vm1965
      %vm1998 = vmpackc.low %vm1966, %vm1966
      %vm1999 = vmpackc.low %vm1967, %vm1967
      %vm2000 = vmpackc.low %vm1968, %vm1968
      %vm2001 = vmpackc.low %vm1969, %vm1969
      %vm2002 = vmpackc.low %vm1970, %vm1970
      %vm2003 = vmpackc.low %vm1971, %vm1971
      %vm2004 = vmpackc.low %vm1972, %vm1972
      %vm2005 = vmpackc.low %vm1973, %vm1973
      %vm2006 = vmpackc.low %vm1974, %vm1974
      %vm2007 = vmpackc.low %vm1975, %vm1975
      %vm2008 = vmpackc.low %vm1976, %vm1976
      %vm2009 = vmpackc.low %vm1977, %vm1977
      %vm2010 = vmpackc.low %vm1978, %vm1978
      %vm2011 = vmpackc.low %vm1979, %vm1979
      %v2012 = vsel %vm1980, %v1884, 0
      %v2013 = vsel %vm1981, %v1885, 0
      %v2014 = vsel %vm1982, %v1886, 0
      %v2015 = vsel %vm1983, %v1887, 0
      %v2016 = vsel %vm1984, %v1888, 0
      %v2017 = vsel %vm1985, %v1889, 0
      %v2018 = vsel %vm1986, %v1890, 0
      %v2019 = vsel %vm1987, %v1891, 0
      %v2020 = vsel %vm1988, %v1892, 0
      %v2021 = vsel %vm1989, %v1893, 0
      %v2022 = vsel %vm1990, %v1894, 0
      %v2023 = vsel %vm1991, %v1895, 0
      %v2024 = vsel %vm1992, %v1896, 0
      %v2025 = vsel %vm1993, %v1897, 0
      %v2026 = vsel %vm1994, %v1898, 0
      %v2027 = vsel %vm1995, %v1899, 0
      %v2028 = vsel %vm1996, %v1900, 0
      %v2029 = vsel %vm1997, %v1901, 0
      %v2030 = vsel %vm1998, %v1902, 0
      %v2031 = vsel %vm1999, %v1903, 0
      %v2032 = vsel %vm2000, %v1904, 0
      %v2033 = vsel %vm2001, %v1905, 0
      %v2034 = vsel %vm2002, %v1906, 0
      %v2035 = vsel %vm2003, %v1907, 0
      %v2036 = vsel %vm2004, %v1908, 0
      %v2037 = vsel %vm2005, %v1909, 0
      %v2038 = vsel %vm2006, %v1910, 0
      %v2039 = vsel %vm2007, %v1911, 0
      %v2040 = vsel %vm2008, %v1912, 0
      %v2041 = vsel %vm2009, %v1913, 0
      %v2042 = vsel %vm2010, %v1914, 0
      %v2043 = vsel %vm2011, %v1915, 0
      %v2044 = vld [vmem:[%s3] sm:$0xff]
      %v2045 = vld [vmem:[%s3 + $0x8] sm:$0xff]
      %v2046 = vld [vmem:[%s3 + $0x10] sm:$0xff]
      %v2047 = vld [vmem:[%s3 + $0x18] sm:$0xff]
      %v2048 = vld [vmem:[%s3 + $0x20] sm:$0xff]
      %v2049 = vld [vmem:[%s3 + $0x28] sm:$0xff]
      %v2050 = vld [vmem:[%s3 + $0x30] sm:$0xff]
      %v2051 = vld [vmem:[%s3 + $0x38] sm:$0xff]
      %v2052 = vld [vmem:[%s3 + $0x40] sm:$0xff]
      %v2053 = vld [vmem:[%s3 + $0x48] sm:$0xff]
      %v2054 = vld [vmem:[%s3 + $0x50] sm:$0xff]
      %v2055 = vld [vmem:[%s3 + $0x58] sm:$0xff]
      %v2056 = vld [vmem:[%s3 + $0x60] sm:$0xff]
      %v2057 = vld [vmem:[%s3 + $0x68] sm:$0xff]
      %v2058 = vld [vmem:[%s3 + $0x70] sm:$0xff]
      %v2059 = vld [vmem:[%s3 + $0x78] sm:$0xff]
      %v2060 = vld [vmem:[%s3 + $0x80] sm:$0xff]
      %v2061 = vld [vmem:[%s3 + $0x88] sm:$0xff]
      %v2062 = vld [vmem:[%s3 + $0x90] sm:$0xff]
      %v2063 = vld [vmem:[%s3 + $0x98] sm:$0xff]
      %v2064 = vld [vmem:[%s3 + $0xa0] sm:$0xff]
      %v2065 = vld [vmem:[%s3 + $0xa8] sm:$0xff]
      %v2066 = vld [vmem:[%s3 + $0xb0] sm:$0xff]
      %v2067 = vld [vmem:[%s3 + $0xb8] sm:$0xff]
      %v2068 = vld [vmem:[%s3 + $0xc0] sm:$0xff]
      %v2069 = vld [vmem:[%s3 + $0xc8] sm:$0xff]
      %v2070 = vld [vmem:[%s3 + $0xd0] sm:$0xff]
      %v2071 = vld [vmem:[%s3 + $0xd8] sm:$0xff]
      %v2072 = vld [vmem:[%s3 + $0xe0] sm:$0xff]
      %v2073 = vld [vmem:[%s3 + $0xe8] sm:$0xff]
      %v2074 = vld [vmem:[%s3 + $0xf0] sm:$0xff]
      %v2075 = vld [vmem:[%s3 + $0xf8] sm:$0xff]
      %v2108 = vunpack.c.l.b16 %v2012
      %v2109 = vunpack.c.h.b16 %v2012
      %v2110 = vunpack.c.l.b16 %v2013
      %v2111 = vunpack.c.h.b16 %v2013
      %v2112 = vunpack.c.l.b16 %v2014
      %v2113 = vunpack.c.h.b16 %v2014
      %v2114 = vunpack.c.l.b16 %v2015
      %v2115 = vunpack.c.h.b16 %v2015
      %v2116 = vunpack.c.l.b16 %v2016
      %v2117 = vunpack.c.h.b16 %v2016
      %v2118 = vunpack.c.l.b16 %v2017
      %v2119 = vunpack.c.h.b16 %v2017
      %v2120 = vunpack.c.l.b16 %v2018
      %v2121 = vunpack.c.h.b16 %v2018
      %v2122 = vunpack.c.l.b16 %v2019
      %v2123 = vunpack.c.h.b16 %v2019
      %v2124 = vunpack.c.l.b16 %v2020
      %v2125 = vunpack.c.h.b16 %v2020
      %v2126 = vunpack.c.l.b16 %v2021
      %v2127 = vunpack.c.h.b16 %v2021
      %v2128 = vunpack.c.l.b16 %v2022
      %v2129 = vunpack.c.h.b16 %v2022
      %v2130 = vunpack.c.l.b16 %v2023
      %v2131 = vunpack.c.h.b16 %v2023
      %v2132 = vunpack.c.l.b16 %v2024
      %v2133 = vunpack.c.h.b16 %v2024
      %v2134 = vunpack.c.l.b16 %v2025
      %v2135 = vunpack.c.h.b16 %v2025
      %v2136 = vunpack.c.l.b16 %v2026
      %v2137 = vunpack.c.h.b16 %v2026
      %v2138 = vunpack.c.l.b16 %v2027
      %v2139 = vunpack.c.h.b16 %v2027
      %v2140 = vunpack.c.l.b16 %v2028
      %v2141 = vunpack.c.h.b16 %v2028
      %v2142 = vunpack.c.l.b16 %v2029
      %v2143 = vunpack.c.h.b16 %v2029
      %v2144 = vunpack.c.l.b16 %v2030
      %v2145 = vunpack.c.h.b16 %v2030
      %v2146 = vunpack.c.l.b16 %v2031
      %v2147 = vunpack.c.h.b16 %v2031
      %v2148 = vunpack.c.l.b16 %v2032
      %v2149 = vunpack.c.h.b16 %v2032
      %v2150 = vunpack.c.l.b16 %v2033
      %v2151 = vunpack.c.h.b16 %v2033
      %v2152 = vunpack.c.l.b16 %v2034
      %v2153 = vunpack.c.h.b16 %v2034
      %v2154 = vunpack.c.l.b16 %v2035
      %v2155 = vunpack.c.h.b16 %v2035
      %v2156 = vunpack.c.l.b16 %v2036
      %v2157 = vunpack.c.h.b16 %v2036
      %v2158 = vunpack.c.l.b16 %v2037
      %v2159 = vunpack.c.h.b16 %v2037
      %v2160 = vunpack.c.l.b16 %v2038
      %v2161 = vunpack.c.h.b16 %v2038
      %v2162 = vunpack.c.l.b16 %v2039
      %v2163 = vunpack.c.h.b16 %v2039
      %v2164 = vunpack.c.l.b16 %v2040
      %v2165 = vunpack.c.h.b16 %v2040
      %v2166 = vunpack.c.l.b16 %v2041
      %v2167 = vunpack.c.h.b16 %v2041
      %v2168 = vunpack.c.l.b16 %v2042
      %v2169 = vunpack.c.h.b16 %v2042
      %v2170 = vunpack.c.l.b16 %v2043
      %v2171 = vunpack.c.h.b16 %v2043
      %v2172 = vpack.c.b16 %v2110, %v2108
      %v2173 = vpack.c.b16 %v2111, %v2109
      %v2174 = vpack.c.b16 %v2114, %v2112
      %v2175 = vpack.c.b16 %v2115, %v2113
      %v2176 = vpack.c.b16 %v2118, %v2116
      %v2177 = vpack.c.b16 %v2119, %v2117
      %v2178 = vpack.c.b16 %v2122, %v2120
      %v2179 = vpack.c.b16 %v2123, %v2121
      %v2180 = vpack.c.b16 %v2126, %v2124
      %v2181 = vpack.c.b16 %v2127, %v2125
      %v2182 = vpack.c.b16 %v2130, %v2128
      %v2183 = vpack.c.b16 %v2131, %v2129
      %v2184 = vpack.c.b16 %v2134, %v2132
      %v2185 = vpack.c.b16 %v2135, %v2133
      %v2186 = vpack.c.b16 %v2138, %v2136
      %v2187 = vpack.c.b16 %v2139, %v2137
      %v2188 = vpack.c.b16 %v2142, %v2140
      %v2189 = vpack.c.b16 %v2143, %v2141
      %v2190 = vpack.c.b16 %v2146, %v2144
      %v2191 = vpack.c.b16 %v2147, %v2145
      %v2192 = vpack.c.b16 %v2150, %v2148
      %v2193 = vpack.c.b16 %v2151, %v2149
      %v2194 = vpack.c.b16 %v2154, %v2152
      %v2195 = vpack.c.b16 %v2155, %v2153
      %v2196 = vpack.c.b16 %v2158, %v2156
      %v2197 = vpack.c.b16 %v2159, %v2157
      %v2198 = vpack.c.b16 %v2162, %v2160
      %v2199 = vpack.c.b16 %v2163, %v2161
      %v2200 = vpack.c.b16 %v2166, %v2164
      %v2201 = vpack.c.b16 %v2167, %v2165
      %v2202 = vpack.c.b16 %v2170, %v2168
      %v2203 = vpack.c.b16 %v2171, %v2169
      %v2268 = vunpack.c.l.b16 %v2044
      %v2269 = vunpack.c.h.b16 %v2044
      %v2270 = vunpack.c.l.b16 %v2045
      %v2271 = vunpack.c.h.b16 %v2045
      %v2272 = vunpack.c.l.b16 %v2046
      %v2273 = vunpack.c.h.b16 %v2046
      %v2274 = vunpack.c.l.b16 %v2047
      %v2275 = vunpack.c.h.b16 %v2047
      %v2276 = vunpack.c.l.b16 %v2048
      %v2277 = vunpack.c.h.b16 %v2048
      %v2278 = vunpack.c.l.b16 %v2049
      %v2279 = vunpack.c.h.b16 %v2049
      %v2280 = vunpack.c.l.b16 %v2050
      %v2281 = vunpack.c.h.b16 %v2050
      %v2282 = vunpack.c.l.b16 %v2051
      %v2283 = vunpack.c.h.b16 %v2051
      %v2284 = vunpack.c.l.b16 %v2052
      %v2285 = vunpack.c.h.b16 %v2052
      %v2286 = vunpack.c.l.b16 %v2053
      %v2287 = vunpack.c.h.b16 %v2053
      %v2288 = vunpack.c.l.b16 %v2054
      %v2289 = vunpack.c.h.b16 %v2054
      %v2290 = vunpack.c.l.b16 %v2055
      %v2291 = vunpack.c.h.b16 %v2055
      %v2292 = vunpack.c.l.b16 %v2056
      %v2293 = vunpack.c.h.b16 %v2056
      %v2294 = vunpack.c.l.b16 %v2057
      %v2295 = vunpack.c.h.b16 %v2057
      %v2296 = vunpack.c.l.b16 %v2058
      %v2297 = vunpack.c.h.b16 %v2058
      %v2298 = vunpack.c.l.b16 %v2059
      %v2299 = vunpack.c.h.b16 %v2059
      %v2300 = vunpack.c.l.b16 %v2060
      %v2301 = vunpack.c.h.b16 %v2060
      %v2302 = vunpack.c.l.b16 %v2061
      %v2303 = vunpack.c.h.b16 %v2061
      %v2304 = vunpack.c.l.b16 %v2062
      %v2305 = vunpack.c.h.b16 %v2062
      %v2306 = vunpack.c.l.b16 %v2063
      %v2307 = vunpack.c.h.b16 %v2063
      %v2308 = vunpack.c.l.b16 %v2064
      %v2309 = vunpack.c.h.b16 %v2064
      %v2310 = vunpack.c.l.b16 %v2065
      %v2311 = vunpack.c.h.b16 %v2065
      %v2312 = vunpack.c.l.b16 %v2066
      %v2313 = vunpack.c.h.b16 %v2066
      %v2314 = vunpack.c.l.b16 %v2067
      %v2315 = vunpack.c.h.b16 %v2067
      %v2316 = vunpack.c.l.b16 %v2068
      %v2317 = vunpack.c.h.b16 %v2068
      %v2318 = vunpack.c.l.b16 %v2069
      %v2319 = vunpack.c.h.b16 %v2069
      %v2320 = vunpack.c.l.b16 %v2070
      %v2321 = vunpack.c.h.b16 %v2070
      %v2322 = vunpack.c.l.b16 %v2071
      %v2323 = vunpack.c.h.b16 %v2071
      %v2324 = vunpack.c.l.b16 %v2072
      %v2325 = vunpack.c.h.b16 %v2072
      %v2326 = vunpack.c.l.b16 %v2073
      %v2327 = vunpack.c.h.b16 %v2073
      %v2328 = vunpack.c.l.b16 %v2074
      %v2329 = vunpack.c.h.b16 %v2074
      %v2330 = vunpack.c.l.b16 %v2075
      %v2331 = vunpack.c.h.b16 %v2075
      %v2332 = vpack.c.b16 %v2270, %v2268
      %v2333 = vpack.c.b16 %v2271, %v2269
      %v2334 = vpack.c.b16 %v2274, %v2272
      %v2335 = vpack.c.b16 %v2275, %v2273
      %v2336 = vpack.c.b16 %v2278, %v2276
      %v2337 = vpack.c.b16 %v2279, %v2277
      %v2338 = vpack.c.b16 %v2282, %v2280
      %v2339 = vpack.c.b16 %v2283, %v2281
      %v2340 = vpack.c.b16 %v2286, %v2284
      %v2341 = vpack.c.b16 %v2287, %v2285
      %v2342 = vpack.c.b16 %v2290, %v2288
      %v2343 = vpack.c.b16 %v2291, %v2289
      %v2344 = vpack.c.b16 %v2294, %v2292
      %v2345 = vpack.c.b16 %v2295, %v2293
      %v2346 = vpack.c.b16 %v2298, %v2296
      %v2347 = vpack.c.b16 %v2299, %v2297
      %v2348 = vpack.c.b16 %v2302, %v2300
      %v2349 = vpack.c.b16 %v2303, %v2301
      %v2350 = vpack.c.b16 %v2306, %v2304
      %v2351 = vpack.c.b16 %v2307, %v2305
      %v2352 = vpack.c.b16 %v2310, %v2308
      %v2353 = vpack.c.b16 %v2311, %v2309
      %v2354 = vpack.c.b16 %v2314, %v2312
      %v2355 = vpack.c.b16 %v2315, %v2313
      %v2356 = vpack.c.b16 %v2318, %v2316
      %v2357 = vpack.c.b16 %v2319, %v2317
      %v2358 = vpack.c.b16 %v2322, %v2320
      %v2359 = vpack.c.b16 %v2323, %v2321
      %v2360 = vpack.c.b16 %v2326, %v2324
      %v2361 = vpack.c.b16 %v2327, %v2325
      %v2362 = vpack.c.b16 %v2330, %v2328
      %v2363 = vpack.c.b16 %v2331, %v2329
      %2396 = vmatpush.bf16.msra.mxu0 %v2346
      %2397 = vmatpush.bf16.msra.mxu0 %v2344
      %2398 = vmatpush.bf16.msra.mxu0 %v2342
      %2399 = vmatpush.bf16.msra.mxu0 %v2340
      %2400 = vmatpush.bf16.msra.mxu0 %v2338
      %2401 = vmatpush.bf16.msra.mxu0 %v2336
      %2402 = vmatpush.bf16.msra.mxu0 %v2334
      %2403 = vmatpush.bf16.msra.mxu0 %v2332
      %2404 = vmatmul.bf16.gmra.mxu0 %v2172
      %v2405 = vpop.f32.mrf.mxu0
      %v2406 = vadd.f32 0.0, %v2405
      %v2407 = vpop.f32.mrf.mxu0
      %v2408 = vadd.f32 0.0, %v2407
      %2409 = vmatmul.bf16.gmra.mxu0 %v2174
      %v2410 = vpop.f32.mrf.mxu0
      %v2411 = vadd.f32 0.0, %v2410
      %v2412 = vpop.f32.mrf.mxu0
      %v2413 = vadd.f32 0.0, %v2412
      %2414 = vmatmul.bf16.gmra.mxu0 %v2176
      %v2415 = vpop.f32.mrf.mxu0
      %v2416 = vadd.f32 0.0, %v2415
      %v2417 = vpop.f32.mrf.mxu0
      %v2418 = vadd.f32 0.0, %v2417
      %2419 = vmatmul.bf16.gmra.mxu0 %v2178
      %v2420 = vpop.f32.mrf.mxu0
      %v2421 = vadd.f32 0.0, %v2420
      %v2422 = vpop.f32.mrf.mxu0
      %v2423 = vadd.f32 0.0, %v2422
      %2424 = vmatmul.bf16.gmra.mxu0 %v2180
      %v2425 = vpop.f32.mrf.mxu0
      %v2426 = vadd.f32 0.0, %v2425
      %v2427 = vpop.f32.mrf.mxu0
      %v2428 = vadd.f32 0.0, %v2427
      %2429 = vmatmul.bf16.gmra.mxu0 %v2182
      %v2430 = vpop.f32.mrf.mxu0
      %v2431 = vadd.f32 0.0, %v2430
      %v2432 = vpop.f32.mrf.mxu0
      %v2433 = vadd.f32 0.0, %v2432
      %2434 = vmatmul.bf16.gmra.mxu0 %v2184
      %v2435 = vpop.f32.mrf.mxu0
      %v2436 = vadd.f32 0.0, %v2435
      %v2437 = vpop.f32.mrf.mxu0
      %v2438 = vadd.f32 0.0, %v2437
      %2439 = vmatmul.bf16.gmra.mxu0 %v2186
      %v2440 = vpop.f32.mrf.mxu0
      %v2441 = vadd.f32 0.0, %v2440
      %v2442 = vpop.f32.mrf.mxu0
      %v2443 = vadd.f32 0.0, %v2442
      %2444 = vmatmul.bf16.gmra.mxu0 %v2188
      %v2445 = vpop.f32.mrf.mxu0
      %v2446 = vadd.f32 0.0, %v2445
      %v2447 = vpop.f32.mrf.mxu0
      %v2448 = vadd.f32 0.0, %v2447
      %2449 = vmatmul.bf16.gmra.mxu0 %v2190
      %v2450 = vpop.f32.mrf.mxu0
      %v2451 = vadd.f32 0.0, %v2450
      %v2452 = vpop.f32.mrf.mxu0
      %v2453 = vadd.f32 0.0, %v2452
      %2454 = vmatmul.bf16.gmra.mxu0 %v2192
      %v2455 = vpop.f32.mrf.mxu0
      %v2456 = vadd.f32 0.0, %v2455
      %v2457 = vpop.f32.mrf.mxu0
      %v2458 = vadd.f32 0.0, %v2457
      %2459 = vmatmul.bf16.gmra.mxu0 %v2194
      %v2460 = vpop.f32.mrf.mxu0
      %v2461 = vadd.f32 0.0, %v2460
      %v2462 = vpop.f32.mrf.mxu0
      %v2463 = vadd.f32 0.0, %v2462
      %2464 = vmatmul.bf16.gmra.mxu0 %v2196
      %v2465 = vpop.f32.mrf.mxu0
      %v2466 = vadd.f32 0.0, %v2465
      %v2467 = vpop.f32.mrf.mxu0
      %v2468 = vadd.f32 0.0, %v2467
      %2469 = vmatmul.bf16.gmra.mxu0 %v2198
      %v2470 = vpop.f32.mrf.mxu0
      %v2471 = vadd.f32 0.0, %v2470
      %v2472 = vpop.f32.mrf.mxu0
      %v2473 = vadd.f32 0.0, %v2472
      %2474 = vmatmul.bf16.gmra.mxu0 %v2200
      %v2475 = vpop.f32.mrf.mxu0
      %v2476 = vadd.f32 0.0, %v2475
      %v2477 = vpop.f32.mrf.mxu0
      %v2478 = vadd.f32 0.0, %v2477
      %2479 = vmatmul.bf16.gmra.mxu0 %v2202
      %v2480 = vpop.f32.mrf.mxu0
      %v2481 = vadd.f32 0.0, %v2480
      %v2482 = vpop.f32.mrf.mxu0
      %v2483 = vadd.f32 0.0, %v2482
      %2484 = vdwg.mxu0
      %2485 = vmatpush.bf16.msra.mxu0 %v2362
      %2486 = vmatpush.bf16.msra.mxu0 %v2360
      %2487 = vmatpush.bf16.msra.mxu0 %v2358
      %2488 = vmatpush.bf16.msra.mxu0 %v2356
      %2489 = vmatpush.bf16.msra.mxu0 %v2354
      %2490 = vmatpush.bf16.msra.mxu0 %v2352
      %2491 = vmatpush.bf16.msra.mxu0 %v2350
      %2492 = vmatpush.bf16.msra.mxu0 %v2348
      %2493 = vmatmul.bf16.gmra.mxu0 %v2173
      %v2494 = vpop.f32.mrf.mxu0
      %v2495 = vadd.f32 %v2406, %v2494
      %v2496 = vpop.f32.mrf.mxu0
      %v2497 = vadd.f32 %v2408, %v2496
      %2498 = vmatmul.bf16.gmra.mxu0 %v2175
      %v2499 = vpop.f32.mrf.mxu0
      %v2500 = vadd.f32 %v2411, %v2499
      %v2501 = vpop.f32.mrf.mxu0
      %v2502 = vadd.f32 %v2413, %v2501
      %2503 = vmatmul.bf16.gmra.mxu0 %v2177
      %v2504 = vpop.f32.mrf.mxu0
      %v2505 = vadd.f32 %v2416, %v2504
      %v2506 = vpop.f32.mrf.mxu0
      %v2507 = vadd.f32 %v2418, %v2506
      %2508 = vmatmul.bf16.gmra.mxu0 %v2179
      %v2509 = vpop.f32.mrf.mxu0
      %v2510 = vadd.f32 %v2421, %v2509
      %v2511 = vpop.f32.mrf.mxu0
      %v2512 = vadd.f32 %v2423, %v2511
      %2513 = vmatmul.bf16.gmra.mxu0 %v2181
      %v2514 = vpop.f32.mrf.mxu0
      %v2515 = vadd.f32 %v2426, %v2514
      %v2516 = vpop.f32.mrf.mxu0
      %v2517 = vadd.f32 %v2428, %v2516
      %2518 = vmatmul.bf16.gmra.mxu0 %v2183
      %v2519 = vpop.f32.mrf.mxu0
      %v2520 = vadd.f32 %v2431, %v2519
      %v2521 = vpop.f32.mrf.mxu0
      %v2522 = vadd.f32 %v2433, %v2521
      %2523 = vmatmul.bf16.gmra.mxu0 %v2185
      %v2524 = vpop.f32.mrf.mxu0
      %v2525 = vadd.f32 %v2436, %v2524
      %v2526 = vpop.f32.mrf.mxu0
      %v2527 = vadd.f32 %v2438, %v2526
      %2528 = vmatmul.bf16.gmra.mxu0 %v2187
      %v2529 = vpop.f32.mrf.mxu0
      %v2530 = vadd.f32 %v2441, %v2529
      %v2531 = vpop.f32.mrf.mxu0
      %v2532 = vadd.f32 %v2443, %v2531
      %2533 = vmatmul.bf16.gmra.mxu0 %v2189
      %v2534 = vpop.f32.mrf.mxu0
      %v2535 = vadd.f32 %v2446, %v2534
      %v2536 = vpop.f32.mrf.mxu0
      %v2537 = vadd.f32 %v2448, %v2536
      %2538 = vmatmul.bf16.gmra.mxu0 %v2191
      %v2539 = vpop.f32.mrf.mxu0
      %v2540 = vadd.f32 %v2451, %v2539
      %v2541 = vpop.f32.mrf.mxu0
      %v2542 = vadd.f32 %v2453, %v2541
      %2543 = vmatmul.bf16.gmra.mxu0 %v2193
      %v2544 = vpop.f32.mrf.mxu0
      %v2545 = vadd.f32 %v2456, %v2544
      %v2546 = vpop.f32.mrf.mxu0
      %v2547 = vadd.f32 %v2458, %v2546
      %2548 = vmatmul.bf16.gmra.mxu0 %v2195
      %v2549 = vpop.f32.mrf.mxu0
      %v2550 = vadd.f32 %v2461, %v2549
      %v2551 = vpop.f32.mrf.mxu0
      %v2552 = vadd.f32 %v2463, %v2551
      %2553 = vmatmul.bf16.gmra.mxu0 %v2197
      %v2554 = vpop.f32.mrf.mxu0
      %v2555 = vadd.f32 %v2466, %v2554
      %v2556 = vpop.f32.mrf.mxu0
      %v2557 = vadd.f32 %v2468, %v2556
      %2558 = vmatmul.bf16.gmra.mxu0 %v2199
      %v2559 = vpop.f32.mrf.mxu0
      %v2560 = vadd.f32 %v2471, %v2559
      %v2561 = vpop.f32.mrf.mxu0
      %v2562 = vadd.f32 %v2473, %v2561
      %2563 = vmatmul.bf16.gmra.mxu0 %v2201
      %v2564 = vpop.f32.mrf.mxu0
      %v2565 = vadd.f32 %v2476, %v2564
      %v2566 = vpop.f32.mrf.mxu0
      %v2567 = vadd.f32 %v2478, %v2566
      %2568 = vmatmul.bf16.gmra.mxu0 %v2203
      %v2569 = vpop.f32.mrf.mxu0
      %v2570 = vadd.f32 %v2481, %v2569
      %v2571 = vpop.f32.mrf.mxu0
      %v2572 = vadd.f32 %v2483, %v2571
      %2573 = vdwg.mxu0
      %2574 = vmatpush.bf16.msra.mxu0 %v2347
      %2575 = vmatpush.bf16.msra.mxu0 %v2345
      %2576 = vmatpush.bf16.msra.mxu0 %v2343
      %2577 = vmatpush.bf16.msra.mxu0 %v2341
      %2578 = vmatpush.bf16.msra.mxu0 %v2339
      %2579 = vmatpush.bf16.msra.mxu0 %v2337
      %2580 = vmatpush.bf16.msra.mxu0 %v2335
      %2581 = vmatpush.bf16.msra.mxu0 %v2333
      %2582 = vmatmul.bf16.gmra.mxu0 %v2172
      %v2583 = vpop.f32.mrf.mxu0
      %v2584 = vadd.f32 0.0, %v2583
      %v2585 = vpop.f32.mrf.mxu0
      %v2586 = vadd.f32 0.0, %v2585
      %2587 = vmatmul.bf16.gmra.mxu0 %v2174
      %v2588 = vpop.f32.mrf.mxu0
      %v2589 = vadd.f32 0.0, %v2588
      %v2590 = vpop.f32.mrf.mxu0
      %v2591 = vadd.f32 0.0, %v2590
      %2592 = vmatmul.bf16.gmra.mxu0 %v2176
      %v2593 = vpop.f32.mrf.mxu0
      %v2594 = vadd.f32 0.0, %v2593
      %v2595 = vpop.f32.mrf.mxu0
      %v2596 = vadd.f32 0.0, %v2595
      %2597 = vmatmul.bf16.gmra.mxu0 %v2178
      %v2598 = vpop.f32.mrf.mxu0
      %v2599 = vadd.f32 0.0, %v2598
      %v2600 = vpop.f32.mrf.mxu0
      %v2601 = vadd.f32 0.0, %v2600
      %2602 = vmatmul.bf16.gmra.mxu0 %v2180
      %v2603 = vpop.f32.mrf.mxu0
      %v2604 = vadd.f32 0.0, %v2603
      %v2605 = vpop.f32.mrf.mxu0
      %v2606 = vadd.f32 0.0, %v2605
      %2607 = vmatmul.bf16.gmra.mxu0 %v2182
      %v2608 = vpop.f32.mrf.mxu0
      %v2609 = vadd.f32 0.0, %v2608
      %v2610 = vpop.f32.mrf.mxu0
      %v2611 = vadd.f32 0.0, %v2610
      %2612 = vmatmul.bf16.gmra.mxu0 %v2184
      %v2613 = vpop.f32.mrf.mxu0
      %v2614 = vadd.f32 0.0, %v2613
      %v2615 = vpop.f32.mrf.mxu0
      %v2616 = vadd.f32 0.0, %v2615
      %2617 = vmatmul.bf16.gmra.mxu0 %v2186
      %v2618 = vpop.f32.mrf.mxu0
      %v2619 = vadd.f32 0.0, %v2618
      %v2620 = vpop.f32.mrf.mxu0
      %v2621 = vadd.f32 0.0, %v2620
      %2622 = vmatmul.bf16.gmra.mxu0 %v2188
      %v2623 = vpop.f32.mrf.mxu0
      %v2624 = vadd.f32 0.0, %v2623
      %v2625 = vpop.f32.mrf.mxu0
      %v2626 = vadd.f32 0.0, %v2625
      %2627 = vmatmul.bf16.gmra.mxu0 %v2190
      %v2628 = vpop.f32.mrf.mxu0
      %v2629 = vadd.f32 0.0, %v2628
      %v2630 = vpop.f32.mrf.mxu0
      %v2631 = vadd.f32 0.0, %v2630
      %2632 = vmatmul.bf16.gmra.mxu0 %v2192
      %v2633 = vpop.f32.mrf.mxu0
      %v2634 = vadd.f32 0.0, %v2633
      %v2635 = vpop.f32.mrf.mxu0
      %v2636 = vadd.f32 0.0, %v2635
      %2637 = vmatmul.bf16.gmra.mxu0 %v2194
      %v2638 = vpop.f32.mrf.mxu0
      %v2639 = vadd.f32 0.0, %v2638
      %v2640 = vpop.f32.mrf.mxu0
      %v2641 = vadd.f32 0.0, %v2640
      %2642 = vmatmul.bf16.gmra.mxu0 %v2196
      %v2643 = vpop.f32.mrf.mxu0
      %v2644 = vadd.f32 0.0, %v2643
      %v2645 = vpop.f32.mrf.mxu0
      %v2646 = vadd.f32 0.0, %v2645
      %2647 = vmatmul.bf16.gmra.mxu0 %v2198
      %v2648 = vpop.f32.mrf.mxu0
      %v2649 = vadd.f32 0.0, %v2648
      %v2650 = vpop.f32.mrf.mxu0
      %v2651 = vadd.f32 0.0, %v2650
      %2652 = vmatmul.bf16.gmra.mxu0 %v2200
      %v2653 = vpop.f32.mrf.mxu0
      %v2654 = vadd.f32 0.0, %v2653
      %v2655 = vpop.f32.mrf.mxu0
      %v2656 = vadd.f32 0.0, %v2655
      %2657 = vmatmul.bf16.gmra.mxu0 %v2202
      %v2658 = vpop.f32.mrf.mxu0
      %v2659 = vadd.f32 0.0, %v2658
      %v2660 = vpop.f32.mrf.mxu0
      %v2661 = vadd.f32 0.0, %v2660
      %2662 = vdwg.mxu0
      %2663 = vmatpush.bf16.msra.mxu0 %v2363
      %2664 = vmatpush.bf16.msra.mxu0 %v2361
      %2665 = vmatpush.bf16.msra.mxu0 %v2359
      %2666 = vmatpush.bf16.msra.mxu0 %v2357
      %2667 = vmatpush.bf16.msra.mxu0 %v2355
      %2668 = vmatpush.bf16.msra.mxu0 %v2353
      %2669 = vmatpush.bf16.msra.mxu0 %v2351
      %2670 = vmatpush.bf16.msra.mxu0 %v2349
      %2671 = vmatmul.bf16.gmra.mxu0 %v2173
      %v2672 = vpop.f32.mrf.mxu0
      %v2673 = vadd.f32 %v2584, %v2672
      %v2674 = vpop.f32.mrf.mxu0
      %v2675 = vadd.f32 %v2586, %v2674
      %2676 = vmatmul.bf16.gmra.mxu0 %v2175
      %v2677 = vpop.f32.mrf.mxu0
      %v2678 = vadd.f32 %v2589, %v2677
      %v2679 = vpop.f32.mrf.mxu0
      %v2680 = vadd.f32 %v2591, %v2679
      %2681 = vmatmul.bf16.gmra.mxu0 %v2177
      %v2682 = vpop.f32.mrf.mxu0
      %v2683 = vadd.f32 %v2594, %v2682
      %v2684 = vpop.f32.mrf.mxu0
      %v2685 = vadd.f32 %v2596, %v2684
      %2686 = vmatmul.bf16.gmra.mxu0 %v2179
      %v2687 = vpop.f32.mrf.mxu0
      %v2688 = vadd.f32 %v2599, %v2687
      %v2689 = vpop.f32.mrf.mxu0
      %v2690 = vadd.f32 %v2601, %v2689
      %2691 = vmatmul.bf16.gmra.mxu0 %v2181
      %v2692 = vpop.f32.mrf.mxu0
      %v2693 = vadd.f32 %v2604, %v2692
      %v2694 = vpop.f32.mrf.mxu0
      %v2695 = vadd.f32 %v2606, %v2694
      %2696 = vmatmul.bf16.gmra.mxu0 %v2183
      %v2697 = vpop.f32.mrf.mxu0
      %v2698 = vadd.f32 %v2609, %v2697
      %v2699 = vpop.f32.mrf.mxu0
      %v2700 = vadd.f32 %v2611, %v2699
      %2701 = vmatmul.bf16.gmra.mxu0 %v2185
      %v2702 = vpop.f32.mrf.mxu0
      %v2703 = vadd.f32 %v2614, %v2702
      %v2704 = vpop.f32.mrf.mxu0
      %v2705 = vadd.f32 %v2616, %v2704
      %2706 = vmatmul.bf16.gmra.mxu0 %v2187
      %v2707 = vpop.f32.mrf.mxu0
      %v2708 = vadd.f32 %v2619, %v2707
      %v2709 = vpop.f32.mrf.mxu0
      %v2710 = vadd.f32 %v2621, %v2709
      %2711 = vmatmul.bf16.gmra.mxu0 %v2189
      %v2712 = vpop.f32.mrf.mxu0
      %v2713 = vadd.f32 %v2624, %v2712
      %v2714 = vpop.f32.mrf.mxu0
      %v2715 = vadd.f32 %v2626, %v2714
      %2716 = vmatmul.bf16.gmra.mxu0 %v2191
      %v2717 = vpop.f32.mrf.mxu0
      %v2718 = vadd.f32 %v2629, %v2717
      %v2719 = vpop.f32.mrf.mxu0
      %v2720 = vadd.f32 %v2631, %v2719
      %2721 = vmatmul.bf16.gmra.mxu0 %v2193
      %v2722 = vpop.f32.mrf.mxu0
      %v2723 = vadd.f32 %v2634, %v2722
      %v2724 = vpop.f32.mrf.mxu0
      %v2725 = vadd.f32 %v2636, %v2724
      %2726 = vmatmul.bf16.gmra.mxu0 %v2195
      %v2727 = vpop.f32.mrf.mxu0
      %v2728 = vadd.f32 %v2639, %v2727
      %v2729 = vpop.f32.mrf.mxu0
      %v2730 = vadd.f32 %v2641, %v2729
      %2731 = vmatmul.bf16.gmra.mxu0 %v2197
      %v2732 = vpop.f32.mrf.mxu0
      %v2733 = vadd.f32 %v2644, %v2732
      %v2734 = vpop.f32.mrf.mxu0
      %v2735 = vadd.f32 %v2646, %v2734
      %2736 = vmatmul.bf16.gmra.mxu0 %v2199
      %v2737 = vpop.f32.mrf.mxu0
      %v2738 = vadd.f32 %v2649, %v2737
      %v2739 = vpop.f32.mrf.mxu0
      %v2740 = vadd.f32 %v2651, %v2739
      %2741 = vmatmul.bf16.gmra.mxu0 %v2201
      %v2742 = vpop.f32.mrf.mxu0
      %v2743 = vadd.f32 %v2654, %v2742
      %v2744 = vpop.f32.mrf.mxu0
      %v2745 = vadd.f32 %v2656, %v2744
      %2746 = vmatmul.bf16.gmra.mxu0 %v2203
      %v2747 = vpop.f32.mrf.mxu0
      %v2748 = vadd.f32 %v2659, %v2747
      %v2749 = vpop.f32.mrf.mxu0
      %v2750 = vadd.f32 %v2661, %v2749
      %2751 = vdwg.mxu0
      %v2752 = vadd.f32 %v1563, %v2495
      %v2753 = vadd.f32 %v1564, %v2673
      %v2754 = vadd.f32 %v1565, %v2497
      %v2755 = vadd.f32 %v1566, %v2675
      %v2756 = vadd.f32 %v1567, %v2500
      %v2757 = vadd.f32 %v1568, %v2678
      %v2758 = vadd.f32 %v1569, %v2502
      %v2759 = vadd.f32 %v1570, %v2680
      %v2760 = vadd.f32 %v1571, %v2505
      %v2761 = vadd.f32 %v1572, %v2683
      %v2762 = vadd.f32 %v1573, %v2507
      %v2763 = vadd.f32 %v1574, %v2685
      %v2764 = vadd.f32 %v1575, %v2510
      %v2765 = vadd.f32 %v1576, %v2688
      %v2766 = vadd.f32 %v1577, %v2512
      %v2767 = vadd.f32 %v1578, %v2690
      %v2768 = vadd.f32 %v1579, %v2515
      %v2769 = vadd.f32 %v1580, %v2693
      %v2770 = vadd.f32 %v1581, %v2517
      %v2771 = vadd.f32 %v1582, %v2695
      %v2772 = vadd.f32 %v1583, %v2520
      %v2773 = vadd.f32 %v1584, %v2698
      %v2774 = vadd.f32 %v1585, %v2522
      %v2775 = vadd.f32 %v1586, %v2700
      %v2776 = vadd.f32 %v1587, %v2525
      %v2777 = vadd.f32 %v1588, %v2703
      %v2778 = vadd.f32 %v1589, %v2527
      %v2779 = vadd.f32 %v1590, %v2705
      %v2780 = vadd.f32 %v1591, %v2530
      %v2781 = vadd.f32 %v1592, %v2708
      %v2782 = vadd.f32 %v1593, %v2532
      %v2783 = vadd.f32 %v1594, %v2710
      %v2784 = vadd.f32 %v1595, %v2535
      %v2785 = vadd.f32 %v1596, %v2713
      %v2786 = vadd.f32 %v1597, %v2537
      %v2787 = vadd.f32 %v1598, %v2715
      %v2788 = vadd.f32 %v1599, %v2540
      %v2789 = vadd.f32 %v1600, %v2718
      %v2790 = vadd.f32 %v1601, %v2542
      %v2791 = vadd.f32 %v1602, %v2720
      %v2792 = vadd.f32 %v1603, %v2545
      %v2793 = vadd.f32 %v1604, %v2723
      %v2794 = vadd.f32 %v1605, %v2547
      %v2795 = vadd.f32 %v1606, %v2725
      %v2796 = vadd.f32 %v1607, %v2550
      %v2797 = vadd.f32 %v1608, %v2728
      %v2798 = vadd.f32 %v1609, %v2552
      %v2799 = vadd.f32 %v1610, %v2730
      %v2800 = vadd.f32 %v1611, %v2555
      %v2801 = vadd.f32 %v1612, %v2733
      %v2802 = vadd.f32 %v1613, %v2557
      %v2803 = vadd.f32 %v1614, %v2735
      %v2804 = vadd.f32 %v1615, %v2560
      %v2805 = vadd.f32 %v1616, %v2738
      %v2806 = vadd.f32 %v1617, %v2562
      %v2807 = vadd.f32 %v1618, %v2740
      %v2808 = vadd.f32 %v1619, %v2565
      %v2809 = vadd.f32 %v1620, %v2743
      %v2810 = vadd.f32 %v1621, %v2567
      %v2811 = vadd.f32 %v1622, %v2745
      %v2812 = vadd.f32 %v1623, %v2570
      %v2813 = vadd.f32 %v1624, %v2748
      %v2814 = vadd.f32 %v1625, %v2572
      %v2815 = vadd.f32 %v1626, %v2750
      %v2816 = vld [vmem:[%s3 + $0x100] sm:$0xff]
      %v2817 = vld [vmem:[%s3 + $0x108] sm:$0xff]
      %v2818 = vld [vmem:[%s3 + $0x110] sm:$0xff]
      %v2819 = vld [vmem:[%s3 + $0x118] sm:$0xff]
      %v2820 = vld [vmem:[%s3 + $0x120] sm:$0xff]
      %v2821 = vld [vmem:[%s3 + $0x128] sm:$0xff]
      %v2822 = vld [vmem:[%s3 + $0x130] sm:$0xff]
      %v2823 = vld [vmem:[%s3 + $0x138] sm:$0xff]
      %v2824 = vld [vmem:[%s3 + $0x140] sm:$0xff]
      %v2825 = vld [vmem:[%s3 + $0x148] sm:$0xff]
      %v2826 = vld [vmem:[%s3 + $0x150] sm:$0xff]
      %v2827 = vld [vmem:[%s3 + $0x158] sm:$0xff]
      %v2828 = vld [vmem:[%s3 + $0x160] sm:$0xff]
      %v2829 = vld [vmem:[%s3 + $0x168] sm:$0xff]
      %v2830 = vld [vmem:[%s3 + $0x170] sm:$0xff]
      %v2831 = vld [vmem:[%s3 + $0x178] sm:$0xff]
      %v2832 = vld [vmem:[%s3 + $0x180] sm:$0xff]
      %v2833 = vld [vmem:[%s3 + $0x188] sm:$0xff]
      %v2834 = vld [vmem:[%s3 + $0x190] sm:$0xff]
      %v2835 = vld [vmem:[%s3 + $0x198] sm:$0xff]
      %v2836 = vld [vmem:[%s3 + $0x1a0] sm:$0xff]
      %v2837 = vld [vmem:[%s3 + $0x1a8] sm:$0xff]
      %v2838 = vld [vmem:[%s3 + $0x1b0] sm:$0xff]
      %v2839 = vld [vmem:[%s3 + $0x1b8] sm:$0xff]
      %v2840 = vld [vmem:[%s3 + $0x1c0] sm:$0xff]
      %v2841 = vld [vmem:[%s3 + $0x1c8] sm:$0xff]
      %v2842 = vld [vmem:[%s3 + $0x1d0] sm:$0xff]
      %v2843 = vld [vmem:[%s3 + $0x1d8] sm:$0xff]
      %v2844 = vld [vmem:[%s3 + $0x1e0] sm:$0xff]
      %v2845 = vld [vmem:[%s3 + $0x1e8] sm:$0xff]
      %v2846 = vld [vmem:[%s3 + $0x1f0] sm:$0xff]
      %v2847 = vld [vmem:[%s3 + $0x1f8] sm:$0xff]
      %v2880 = vunpack.c.l.b16 %v2816
      %v2881 = vunpack.c.h.b16 %v2816
      %v2882 = vunpack.c.l.b16 %v2817
      %v2883 = vunpack.c.h.b16 %v2817
      %v2884 = vunpack.c.l.b16 %v2818
      %v2885 = vunpack.c.h.b16 %v2818
      %v2886 = vunpack.c.l.b16 %v2819
      %v2887 = vunpack.c.h.b16 %v2819
      %v2888 = vunpack.c.l.b16 %v2820
      %v2889 = vunpack.c.h.b16 %v2820
      %v2890 = vunpack.c.l.b16 %v2821
      %v2891 = vunpack.c.h.b16 %v2821
      %v2892 = vunpack.c.l.b16 %v2822
      %v2893 = vunpack.c.h.b16 %v2822
      %v2894 = vunpack.c.l.b16 %v2823
      %v2895 = vunpack.c.h.b16 %v2823
      %v2896 = vunpack.c.l.b16 %v2824
      %v2897 = vunpack.c.h.b16 %v2824
      %v2898 = vunpack.c.l.b16 %v2825
      %v2899 = vunpack.c.h.b16 %v2825
      %v2900 = vunpack.c.l.b16 %v2826
      %v2901 = vunpack.c.h.b16 %v2826
      %v2902 = vunpack.c.l.b16 %v2827
      %v2903 = vunpack.c.h.b16 %v2827
      %v2904 = vunpack.c.l.b16 %v2828
      %v2905 = vunpack.c.h.b16 %v2828
      %v2906 = vunpack.c.l.b16 %v2829
      %v2907 = vunpack.c.h.b16 %v2829
      %v2908 = vunpack.c.l.b16 %v2830
      %v2909 = vunpack.c.h.b16 %v2830
      %v2910 = vunpack.c.l.b16 %v2831
      %v2911 = vunpack.c.h.b16 %v2831
      %v2912 = vunpack.c.l.b16 %v2832
      %v2913 = vunpack.c.h.b16 %v2832
      %v2914 = vunpack.c.l.b16 %v2833
      %v2915 = vunpack.c.h.b16 %v2833
      %v2916 = vunpack.c.l.b16 %v2834
      %v2917 = vunpack.c.h.b16 %v2834
      %v2918 = vunpack.c.l.b16 %v2835
      %v2919 = vunpack.c.h.b16 %v2835
      %v2920 = vunpack.c.l.b16 %v2836
      %v2921 = vunpack.c.h.b16 %v2836
      %v2922 = vunpack.c.l.b16 %v2837
      %v2923 = vunpack.c.h.b16 %v2837
      %v2924 = vunpack.c.l.b16 %v2838
      %v2925 = vunpack.c.h.b16 %v2838
      %v2926 = vunpack.c.l.b16 %v2839
      %v2927 = vunpack.c.h.b16 %v2839
      %v2928 = vunpack.c.l.b16 %v2840
      %v2929 = vunpack.c.h.b16 %v2840
      %v2930 = vunpack.c.l.b16 %v2841
      %v2931 = vunpack.c.h.b16 %v2841
      %v2932 = vunpack.c.l.b16 %v2842
      %v2933 = vunpack.c.h.b16 %v2842
      %v2934 = vunpack.c.l.b16 %v2843
      %v2935 = vunpack.c.h.b16 %v2843
      %v2936 = vunpack.c.l.b16 %v2844
      %v2937 = vunpack.c.h.b16 %v2844
      %v2938 = vunpack.c.l.b16 %v2845
      %v2939 = vunpack.c.h.b16 %v2845
      %v2940 = vunpack.c.l.b16 %v2846
      %v2941 = vunpack.c.h.b16 %v2846
      %v2942 = vunpack.c.l.b16 %v2847
      %v2943 = vunpack.c.h.b16 %v2847
      %v2944 = vpack.c.b16 %v2882, %v2880
      %v2945 = vpack.c.b16 %v2883, %v2881
      %v2946 = vpack.c.b16 %v2886, %v2884
      %v2947 = vpack.c.b16 %v2887, %v2885
      %v2948 = vpack.c.b16 %v2890, %v2888
      %v2949 = vpack.c.b16 %v2891, %v2889
      %v2950 = vpack.c.b16 %v2894, %v2892
      %v2951 = vpack.c.b16 %v2895, %v2893
      %v2952 = vpack.c.b16 %v2898, %v2896
      %v2953 = vpack.c.b16 %v2899, %v2897
      %v2954 = vpack.c.b16 %v2902, %v2900
      %v2955 = vpack.c.b16 %v2903, %v2901
      %v2956 = vpack.c.b16 %v2906, %v2904
      %v2957 = vpack.c.b16 %v2907, %v2905
      %v2958 = vpack.c.b16 %v2910, %v2908
      %v2959 = vpack.c.b16 %v2911, %v2909
      %v2960 = vpack.c.b16 %v2914, %v2912
      %v2961 = vpack.c.b16 %v2915, %v2913
      %v2962 = vpack.c.b16 %v2918, %v2916
      %v2963 = vpack.c.b16 %v2919, %v2917
      %v2964 = vpack.c.b16 %v2922, %v2920
      %v2965 = vpack.c.b16 %v2923, %v2921
      %v2966 = vpack.c.b16 %v2926, %v2924
      %v2967 = vpack.c.b16 %v2927, %v2925
      %v2968 = vpack.c.b16 %v2930, %v2928
      %v2969 = vpack.c.b16 %v2931, %v2929
      %v2970 = vpack.c.b16 %v2934, %v2932
      %v2971 = vpack.c.b16 %v2935, %v2933
      %v2972 = vpack.c.b16 %v2938, %v2936
      %v2973 = vpack.c.b16 %v2939, %v2937
      %v2974 = vpack.c.b16 %v2942, %v2940
      %v2975 = vpack.c.b16 %v2943, %v2941
      %3008 = vmatpush.bf16.msra.mxu0 %v2958
      %3009 = vmatpush.bf16.msra.mxu0 %v2956
      %3010 = vmatpush.bf16.msra.mxu0 %v2954
      %3011 = vmatpush.bf16.msra.mxu0 %v2952
      %3012 = vmatpush.bf16.msra.mxu0 %v2950
      %3013 = vmatpush.bf16.msra.mxu0 %v2948
      %3014 = vmatpush.bf16.msra.mxu0 %v2946
      %3015 = vmatpush.bf16.msra.mxu0 %v2944
      %3016 = vmatmul.bf16.gmra.mxu0 %v1108
      %v3017 = vpop.f32.mrf.mxu0
      %v3018 = vadd.f32 0.0, %v3017
      %v3019 = vpop.f32.mrf.mxu0
      %v3020 = vadd.f32 0.0, %v3019
      %3021 = vmatmul.bf16.gmra.mxu0 %v1110
      %v3022 = vpop.f32.mrf.mxu0
      %v3023 = vadd.f32 0.0, %v3022
      %v3024 = vpop.f32.mrf.mxu0
      %v3025 = vadd.f32 0.0, %v3024
      %3026 = vmatmul.bf16.gmra.mxu0 %v1112
      %v3027 = vpop.f32.mrf.mxu0
      %v3028 = vadd.f32 0.0, %v3027
      %v3029 = vpop.f32.mrf.mxu0
      %v3030 = vadd.f32 0.0, %v3029
      %3031 = vmatmul.bf16.gmra.mxu0 %v1114
      %v3032 = vpop.f32.mrf.mxu0
      %v3033 = vadd.f32 0.0, %v3032
      %v3034 = vpop.f32.mrf.mxu0
      %v3035 = vadd.f32 0.0, %v3034
      %3036 = vmatmul.bf16.gmra.mxu0 %v1116
      %v3037 = vpop.f32.mrf.mxu0
      %v3038 = vadd.f32 0.0, %v3037
      %v3039 = vpop.f32.mrf.mxu0
      %v3040 = vadd.f32 0.0, %v3039
      %3041 = vmatmul.bf16.gmra.mxu0 %v1118
      %v3042 = vpop.f32.mrf.mxu0
      %v3043 = vadd.f32 0.0, %v3042
      %v3044 = vpop.f32.mrf.mxu0
      %v3045 = vadd.f32 0.0, %v3044
      %3046 = vmatmul.bf16.gmra.mxu0 %v1120
      %v3047 = vpop.f32.mrf.mxu0
      %v3048 = vadd.f32 0.0, %v3047
      %v3049 = vpop.f32.mrf.mxu0
      %v3050 = vadd.f32 0.0, %v3049
      %3051 = vmatmul.bf16.gmra.mxu0 %v1122
      %v3052 = vpop.f32.mrf.mxu0
      %v3053 = vadd.f32 0.0, %v3052
      %v3054 = vpop.f32.mrf.mxu0
      %v3055 = vadd.f32 0.0, %v3054
      %3056 = vmatmul.bf16.gmra.mxu0 %v1124
      %v3057 = vpop.f32.mrf.mxu0
      %v3058 = vadd.f32 0.0, %v3057
      %v3059 = vpop.f32.mrf.mxu0
      %v3060 = vadd.f32 0.0, %v3059
      %3061 = vmatmul.bf16.gmra.mxu0 %v1126
      %v3062 = vpop.f32.mrf.mxu0
      %v3063 = vadd.f32 0.0, %v3062
      %v3064 = vpop.f32.mrf.mxu0
      %v3065 = vadd.f32 0.0, %v3064
      %3066 = vmatmul.bf16.gmra.mxu0 %v1128
      %v3067 = vpop.f32.mrf.mxu0
      %v3068 = vadd.f32 0.0, %v3067
      %v3069 = vpop.f32.mrf.mxu0
      %v3070 = vadd.f32 0.0, %v3069
      %3071 = vmatmul.bf16.gmra.mxu0 %v1130
      %v3072 = vpop.f32.mrf.mxu0
      %v3073 = vadd.f32 0.0, %v3072
      %v3074 = vpop.f32.mrf.mxu0
      %v3075 = vadd.f32 0.0, %v3074
      %3076 = vmatmul.bf16.gmra.mxu0 %v1132
      %v3077 = vpop.f32.mrf.mxu0
      %v3078 = vadd.f32 0.0, %v3077
      %v3079 = vpop.f32.mrf.mxu0
      %v3080 = vadd.f32 0.0, %v3079
      %3081 = vmatmul.bf16.gmra.mxu0 %v1134
      %v3082 = vpop.f32.mrf.mxu0
      %v3083 = vadd.f32 0.0, %v3082
      %v3084 = vpop.f32.mrf.mxu0
      %v3085 = vadd.f32 0.0, %v3084
      %3086 = vmatmul.bf16.gmra.mxu0 %v1136
      %v3087 = vpop.f32.mrf.mxu0
      %v3088 = vadd.f32 0.0, %v3087
      %v3089 = vpop.f32.mrf.mxu0
      %v3090 = vadd.f32 0.0, %v3089
      %3091 = vmatmul.bf16.gmra.mxu0 %v1138
      %v3092 = vpop.f32.mrf.mxu0
      %v3093 = vadd.f32 0.0, %v3092
      %v3094 = vpop.f32.mrf.mxu0
      %v3095 = vadd.f32 0.0, %v3094
      %3096 = vdwg.mxu0
      %3097 = vmatpush.bf16.msra.mxu0 %v2974
      %3098 = vmatpush.bf16.msra.mxu0 %v2972
      %3099 = vmatpush.bf16.msra.mxu0 %v2970
      %3100 = vmatpush.bf16.msra.mxu0 %v2968
      %3101 = vmatpush.bf16.msra.mxu0 %v2966
      %3102 = vmatpush.bf16.msra.mxu0 %v2964
      %3103 = vmatpush.bf16.msra.mxu0 %v2962
      %3104 = vmatpush.bf16.msra.mxu0 %v2960
      %3105 = vmatmul.bf16.gmra.mxu0 %v1109
      %v3106 = vpop.f32.mrf.mxu0
      %v3107 = vadd.f32 %v3018, %v3106
      %v3108 = vpop.f32.mrf.mxu0
      %v3109 = vadd.f32 %v3020, %v3108
      %3110 = vmatmul.bf16.gmra.mxu0 %v1111
      %v3111 = vpop.f32.mrf.mxu0
      %v3112 = vadd.f32 %v3023, %v3111
      %v3113 = vpop.f32.mrf.mxu0
      %v3114 = vadd.f32 %v3025, %v3113
      %3115 = vmatmul.bf16.gmra.mxu0 %v1113
      %v3116 = vpop.f32.mrf.mxu0
      %v3117 = vadd.f32 %v3028, %v3116
      %v3118 = vpop.f32.mrf.mxu0
      %v3119 = vadd.f32 %v3030, %v3118
      %3120 = vmatmul.bf16.gmra.mxu0 %v1115
      %v3121 = vpop.f32.mrf.mxu0
      %v3122 = vadd.f32 %v3033, %v3121
      %v3123 = vpop.f32.mrf.mxu0
      %v3124 = vadd.f32 %v3035, %v3123
      %3125 = vmatmul.bf16.gmra.mxu0 %v1117
      %v3126 = vpop.f32.mrf.mxu0
      %v3127 = vadd.f32 %v3038, %v3126
      %v3128 = vpop.f32.mrf.mxu0
      %v3129 = vadd.f32 %v3040, %v3128
      %3130 = vmatmul.bf16.gmra.mxu0 %v1119
      %v3131 = vpop.f32.mrf.mxu0
      %v3132 = vadd.f32 %v3043, %v3131
      %v3133 = vpop.f32.mrf.mxu0
      %v3134 = vadd.f32 %v3045, %v3133
      %3135 = vmatmul.bf16.gmra.mxu0 %v1121
      %v3136 = vpop.f32.mrf.mxu0
      %v3137 = vadd.f32 %v3048, %v3136
      %v3138 = vpop.f32.mrf.mxu0
      %v3139 = vadd.f32 %v3050, %v3138
      %3140 = vmatmul.bf16.gmra.mxu0 %v1123
      %v3141 = vpop.f32.mrf.mxu0
      %v3142 = vadd.f32 %v3053, %v3141
      %v3143 = vpop.f32.mrf.mxu0
      %v3144 = vadd.f32 %v3055, %v3143
      %3145 = vmatmul.bf16.gmra.mxu0 %v1125
      %v3146 = vpop.f32.mrf.mxu0
      %v3147 = vadd.f32 %v3058, %v3146
      %v3148 = vpop.f32.mrf.mxu0
      %v3149 = vadd.f32 %v3060, %v3148
      %3150 = vmatmul.bf16.gmra.mxu0 %v1127
      %v3151 = vpop.f32.mrf.mxu0
      %v3152 = vadd.f32 %v3063, %v3151
      %v3153 = vpop.f32.mrf.mxu0
      %v3154 = vadd.f32 %v3065, %v3153
      %3155 = vmatmul.bf16.gmra.mxu0 %v1129
      %v3156 = vpop.f32.mrf.mxu0
      %v3157 = vadd.f32 %v3068, %v3156
      %v3158 = vpop.f32.mrf.mxu0
      %v3159 = vadd.f32 %v3070, %v3158
      %3160 = vmatmul.bf16.gmra.mxu0 %v1131
      %v3161 = vpop.f32.mrf.mxu0
      %v3162 = vadd.f32 %v3073, %v3161
      %v3163 = vpop.f32.mrf.mxu0
      %v3164 = vadd.f32 %v3075, %v3163
      %3165 = vmatmul.bf16.gmra.mxu0 %v1133
      %v3166 = vpop.f32.mrf.mxu0
      %v3167 = vadd.f32 %v3078, %v3166
      %v3168 = vpop.f32.mrf.mxu0
      %v3169 = vadd.f32 %v3080, %v3168
      %3170 = vmatmul.bf16.gmra.mxu0 %v1135
      %v3171 = vpop.f32.mrf.mxu0
      %v3172 = vadd.f32 %v3083, %v3171
      %v3173 = vpop.f32.mrf.mxu0
      %v3174 = vadd.f32 %v3085, %v3173
      %3175 = vmatmul.bf16.gmra.mxu0 %v1137
      %v3176 = vpop.f32.mrf.mxu0
      %v3177 = vadd.f32 %v3088, %v3176
      %v3178 = vpop.f32.mrf.mxu0
      %v3179 = vadd.f32 %v3090, %v3178
      %3180 = vmatmul.bf16.gmra.mxu0 %v1139
      %v3181 = vpop.f32.mrf.mxu0
      %v3182 = vadd.f32 %v3093, %v3181
      %v3183 = vpop.f32.mrf.mxu0
      %v3184 = vadd.f32 %v3095, %v3183
      %3185 = vdwg.mxu0
      %3186 = vmatpush.bf16.msra.mxu0 %v2959
      %3187 = vmatpush.bf16.msra.mxu0 %v2957
      %3188 = vmatpush.bf16.msra.mxu0 %v2955
      %3189 = vmatpush.bf16.msra.mxu0 %v2953
      %3190 = vmatpush.bf16.msra.mxu0 %v2951
      %3191 = vmatpush.bf16.msra.mxu0 %v2949
      %3192 = vmatpush.bf16.msra.mxu0 %v2947
      %3193 = vmatpush.bf16.msra.mxu0 %v2945
      %3194 = vmatmul.bf16.gmra.mxu0 %v1108
      %v3195 = vpop.f32.mrf.mxu0
      %v3196 = vadd.f32 0.0, %v3195
      %v3197 = vpop.f32.mrf.mxu0
      %v3198 = vadd.f32 0.0, %v3197
      %3199 = vmatmul.bf16.gmra.mxu0 %v1110
      %v3200 = vpop.f32.mrf.mxu0
      %v3201 = vadd.f32 0.0, %v3200
      %v3202 = vpop.f32.mrf.mxu0
      %v3203 = vadd.f32 0.0, %v3202
      %3204 = vmatmul.bf16.gmra.mxu0 %v1112
      %v3205 = vpop.f32.mrf.mxu0
      %v3206 = vadd.f32 0.0, %v3205
      %v3207 = vpop.f32.mrf.mxu0
      %v3208 = vadd.f32 0.0, %v3207
      %3209 = vmatmul.bf16.gmra.mxu0 %v1114
      %v3210 = vpop.f32.mrf.mxu0
      %v3211 = vadd.f32 0.0, %v3210
      %v3212 = vpop.f32.mrf.mxu0
      %v3213 = vadd.f32 0.0, %v3212
      %3214 = vmatmul.bf16.gmra.mxu0 %v1116
      %v3215 = vpop.f32.mrf.mxu0
      %v3216 = vadd.f32 0.0, %v3215
      %v3217 = vpop.f32.mrf.mxu0
      %v3218 = vadd.f32 0.0, %v3217
      %3219 = vmatmul.bf16.gmra.mxu0 %v1118
      %v3220 = vpop.f32.mrf.mxu0
      %v3221 = vadd.f32 0.0, %v3220
      %v3222 = vpop.f32.mrf.mxu0
      %v3223 = vadd.f32 0.0, %v3222
      %3224 = vmatmul.bf16.gmra.mxu0 %v1120
      %v3225 = vpop.f32.mrf.mxu0
      %v3226 = vadd.f32 0.0, %v3225
      %v3227 = vpop.f32.mrf.mxu0
      %v3228 = vadd.f32 0.0, %v3227
      %3229 = vmatmul.bf16.gmra.mxu0 %v1122
      %v3230 = vpop.f32.mrf.mxu0
      %v3231 = vadd.f32 0.0, %v3230
      %v3232 = vpop.f32.mrf.mxu0
      %v3233 = vadd.f32 0.0, %v3232
      %3234 = vmatmul.bf16.gmra.mxu0 %v1124
      %v3235 = vpop.f32.mrf.mxu0
      %v3236 = vadd.f32 0.0, %v3235
      %v3237 = vpop.f32.mrf.mxu0
      %v3238 = vadd.f32 0.0, %v3237
      %3239 = vmatmul.bf16.gmra.mxu0 %v1126
      %v3240 = vpop.f32.mrf.mxu0
      %v3241 = vadd.f32 0.0, %v3240
      %v3242 = vpop.f32.mrf.mxu0
      %v3243 = vadd.f32 0.0, %v3242
      %3244 = vmatmul.bf16.gmra.mxu0 %v1128
      %v3245 = vpop.f32.mrf.mxu0
      %v3246 = vadd.f32 0.0, %v3245
      %v3247 = vpop.f32.mrf.mxu0
      %v3248 = vadd.f32 0.0, %v3247
      %3249 = vmatmul.bf16.gmra.mxu0 %v1130
      %v3250 = vpop.f32.mrf.mxu0
      %v3251 = vadd.f32 0.0, %v3250
      %v3252 = vpop.f32.mrf.mxu0
      %v3253 = vadd.f32 0.0, %v3252
      %3254 = vmatmul.bf16.gmra.mxu0 %v1132
      %v3255 = vpop.f32.mrf.mxu0
      %v3256 = vadd.f32 0.0, %v3255
      %v3257 = vpop.f32.mrf.mxu0
      %v3258 = vadd.f32 0.0, %v3257
      %3259 = vmatmul.bf16.gmra.mxu0 %v1134
      %v3260 = vpop.f32.mrf.mxu0
      %v3261 = vadd.f32 0.0, %v3260
      %v3262 = vpop.f32.mrf.mxu0
      %v3263 = vadd.f32 0.0, %v3262
      %3264 = vmatmul.bf16.gmra.mxu0 %v1136
      %v3265 = vpop.f32.mrf.mxu0
      %v3266 = vadd.f32 0.0, %v3265
      %v3267 = vpop.f32.mrf.mxu0
      %v3268 = vadd.f32 0.0, %v3267
      %3269 = vmatmul.bf16.gmra.mxu0 %v1138
      %v3270 = vpop.f32.mrf.mxu0
      %v3271 = vadd.f32 0.0, %v3270
      %v3272 = vpop.f32.mrf.mxu0
      %v3273 = vadd.f32 0.0, %v3272
      %3274 = vdwg.mxu0
      %3275 = vmatpush.bf16.msra.mxu0 %v2975
      %3276 = vmatpush.bf16.msra.mxu0 %v2973
      %3277 = vmatpush.bf16.msra.mxu0 %v2971
      %3278 = vmatpush.bf16.msra.mxu0 %v2969
      %3279 = vmatpush.bf16.msra.mxu0 %v2967
      %3280 = vmatpush.bf16.msra.mxu0 %v2965
      %3281 = vmatpush.bf16.msra.mxu0 %v2963
      %3282 = vmatpush.bf16.msra.mxu0 %v2961
      %3283 = vmatmul.bf16.gmra.mxu0 %v1109
      %v3284 = vpop.f32.mrf.mxu0
      %v3285 = vadd.f32 %v3196, %v3284
      %v3286 = vpop.f32.mrf.mxu0
      %v3287 = vadd.f32 %v3198, %v3286
      %3288 = vmatmul.bf16.gmra.mxu0 %v1111
      %v3289 = vpop.f32.mrf.mxu0
      %v3290 = vadd.f32 %v3201, %v3289
      %v3291 = vpop.f32.mrf.mxu0
      %v3292 = vadd.f32 %v3203, %v3291
      %3293 = vmatmul.bf16.gmra.mxu0 %v1113
      %v3294 = vpop.f32.mrf.mxu0
      %v3295 = vadd.f32 %v3206, %v3294
      %v3296 = vpop.f32.mrf.mxu0
      %v3297 = vadd.f32 %v3208, %v3296
      %3298 = vmatmul.bf16.gmra.mxu0 %v1115
      %v3299 = vpop.f32.mrf.mxu0
      %v3300 = vadd.f32 %v3211, %v3299
      %v3301 = vpop.f32.mrf.mxu0
      %v3302 = vadd.f32 %v3213, %v3301
      %3303 = vmatmul.bf16.gmra.mxu0 %v1117
      %v3304 = vpop.f32.mrf.mxu0
      %v3305 = vadd.f32 %v3216, %v3304
      %v3306 = vpop.f32.mrf.mxu0
      %v3307 = vadd.f32 %v3218, %v3306
      %3308 = vmatmul.bf16.gmra.mxu0 %v1119
      %v3309 = vpop.f32.mrf.mxu0
      %v3310 = vadd.f32 %v3221, %v3309
      %v3311 = vpop.f32.mrf.mxu0
      %v3312 = vadd.f32 %v3223, %v3311
      %3313 = vmatmul.bf16.gmra.mxu0 %v1121
      %v3314 = vpop.f32.mrf.mxu0
      %v3315 = vadd.f32 %v3226, %v3314
      %v3316 = vpop.f32.mrf.mxu0
      %v3317 = vadd.f32 %v3228, %v3316
      %3318 = vmatmul.bf16.gmra.mxu0 %v1123
      %v3319 = vpop.f32.mrf.mxu0
      %v3320 = vadd.f32 %v3231, %v3319
      %v3321 = vpop.f32.mrf.mxu0
      %v3322 = vadd.f32 %v3233, %v3321
      %3323 = vmatmul.bf16.gmra.mxu0 %v1125
      %v3324 = vpop.f32.mrf.mxu0
      %v3325 = vadd.f32 %v3236, %v3324
      %v3326 = vpop.f32.mrf.mxu0
      %v3327 = vadd.f32 %v3238, %v3326
      %3328 = vmatmul.bf16.gmra.mxu0 %v1127
      %v3329 = vpop.f32.mrf.mxu0
      %v3330 = vadd.f32 %v3241, %v3329
      %v3331 = vpop.f32.mrf.mxu0
      %v3332 = vadd.f32 %v3243, %v3331
      %3333 = vmatmul.bf16.gmra.mxu0 %v1129
      %v3334 = vpop.f32.mrf.mxu0
      %v3335 = vadd.f32 %v3246, %v3334
      %v3336 = vpop.f32.mrf.mxu0
      %v3337 = vadd.f32 %v3248, %v3336
      %3338 = vmatmul.bf16.gmra.mxu0 %v1131
      %v3339 = vpop.f32.mrf.mxu0
      %v3340 = vadd.f32 %v3251, %v3339
      %v3341 = vpop.f32.mrf.mxu0
      %v3342 = vadd.f32 %v3253, %v3341
      %3343 = vmatmul.bf16.gmra.mxu0 %v1133
      %v3344 = vpop.f32.mrf.mxu0
      %v3345 = vadd.f32 %v3256, %v3344
      %v3346 = vpop.f32.mrf.mxu0
      %v3347 = vadd.f32 %v3258, %v3346
      %3348 = vmatmul.bf16.gmra.mxu0 %v1135
      %v3349 = vpop.f32.mrf.mxu0
      %v3350 = vadd.f32 %v3261, %v3349
      %v3351 = vpop.f32.mrf.mxu0
      %v3352 = vadd.f32 %v3263, %v3351
      %3353 = vmatmul.bf16.gmra.mxu0 %v1137
      %v3354 = vpop.f32.mrf.mxu0
      %v3355 = vadd.f32 %v3266, %v3354
      %v3356 = vpop.f32.mrf.mxu0
      %v3357 = vadd.f32 %v3268, %v3356
      %3358 = vmatmul.bf16.gmra.mxu0 %v1139
      %v3359 = vpop.f32.mrf.mxu0
      %v3360 = vadd.f32 %v3271, %v3359
      %v3361 = vpop.f32.mrf.mxu0
      %v3362 = vadd.f32 %v3273, %v3361
      %3363 = vdwg.mxu0
      %v3364 = vadd.f32 %v2752, %v3107
      %v3365 = vadd.f32 %v2753, %v3285
      %v3366 = vadd.f32 %v2754, %v3109
      %v3367 = vadd.f32 %v2755, %v3287
      %v3368 = vadd.f32 %v2756, %v3112
      %v3369 = vadd.f32 %v2757, %v3290
      %v3370 = vadd.f32 %v2758, %v3114
      %v3371 = vadd.f32 %v2759, %v3292
      %v3372 = vadd.f32 %v2760, %v3117
      %v3373 = vadd.f32 %v2761, %v3295
      %v3374 = vadd.f32 %v2762, %v3119
      %v3375 = vadd.f32 %v2763, %v3297
      %v3376 = vadd.f32 %v2764, %v3122
      %v3377 = vadd.f32 %v2765, %v3300
      %v3378 = vadd.f32 %v2766, %v3124
      %v3379 = vadd.f32 %v2767, %v3302
      %v3380 = vadd.f32 %v2768, %v3127
      %v3381 = vadd.f32 %v2769, %v3305
      %v3382 = vadd.f32 %v2770, %v3129
      %v3383 = vadd.f32 %v2771, %v3307
      %v3384 = vadd.f32 %v2772, %v3132
      %v3385 = vadd.f32 %v2773, %v3310
      %v3386 = vadd.f32 %v2774, %v3134
      %v3387 = vadd.f32 %v2775, %v3312
      %v3388 = vadd.f32 %v2776, %v3137
      %v3389 = vadd.f32 %v2777, %v3315
      %v3390 = vadd.f32 %v2778, %v3139
      %v3391 = vadd.f32 %v2779, %v3317
      %v3392 = vadd.f32 %v2780, %v3142
      %v3393 = vadd.f32 %v2781, %v3320
      %v3394 = vadd.f32 %v2782, %v3144
      %v3395 = vadd.f32 %v2783, %v3322
      %v3396 = vadd.f32 %v2784, %v3147
      %v3397 = vadd.f32 %v2785, %v3325
      %v3398 = vadd.f32 %v2786, %v3149
      %v3399 = vadd.f32 %v2787, %v3327
      %v3400 = vadd.f32 %v2788, %v3152
      %v3401 = vadd.f32 %v2789, %v3330
      %v3402 = vadd.f32 %v2790, %v3154
      %v3403 = vadd.f32 %v2791, %v3332
      %v3404 = vadd.f32 %v2792, %v3157
      %v3405 = vadd.f32 %v2793, %v3335
      %v3406 = vadd.f32 %v2794, %v3159
      %v3407 = vadd.f32 %v2795, %v3337
      %v3408 = vadd.f32 %v2796, %v3162
      %v3409 = vadd.f32 %v2797, %v3340
      %v3410 = vadd.f32 %v2798, %v3164
      %v3411 = vadd.f32 %v2799, %v3342
      %v3412 = vadd.f32 %v2800, %v3167
      %v3413 = vadd.f32 %v2801, %v3345
      %v3414 = vadd.f32 %v2802, %v3169
      %v3415 = vadd.f32 %v2803, %v3347
      %v3416 = vadd.f32 %v2804, %v3172
      %v3417 = vadd.f32 %v2805, %v3350
      %v3418 = vadd.f32 %v2806, %v3174
      %v3419 = vadd.f32 %v2807, %v3352
      %v3420 = vadd.f32 %v2808, %v3177
      %v3421 = vadd.f32 %v2809, %v3355
      %v3422 = vadd.f32 %v2810, %v3179
      %v3423 = vadd.f32 %v2811, %v3357
      %v3424 = vadd.f32 %v2812, %v3182
      %v3425 = vadd.f32 %v2813, %v3360
      %v3426 = vadd.f32 %v2814, %v3184
      %v3427 = vadd.f32 %v2815, %v3362
      %v3428 = vrot.slane %v1044, 1
      %v3429 = vrot.slane %v1045, 1
      %v3430 = vrot.slane %v1046, 1
      %v3431 = vrot.slane %v1047, 1
      %v3432 = vrot.slane %v1048, 1
      %v3433 = vrot.slane %v1049, 1
      %v3434 = vrot.slane %v1050, 1
      %v3435 = vrot.slane %v1051, 1
      %v3436 = vrot.slane %v1052, 1
      %v3437 = vrot.slane %v1053, 1
      %v3438 = vrot.slane %v1054, 1
      %v3439 = vrot.slane %v1055, 1
      %v3440 = vrot.slane %v1056, 1
      %v3441 = vrot.slane %v1057, 1
      %v3442 = vrot.slane %v1058, 1
      %v3443 = vrot.slane %v1059, 1
      %v3444 = vrot.slane %v1060, 1
      %v3445 = vrot.slane %v1061, 1
      %v3446 = vrot.slane %v1062, 1
      %v3447 = vrot.slane %v1063, 1
      %v3448 = vrot.slane %v1064, 1
      %v3449 = vrot.slane %v1065, 1
      %v3450 = vrot.slane %v1066, 1
      %v3451 = vrot.slane %v1067, 1
      %v3452 = vrot.slane %v1068, 1
      %v3453 = vrot.slane %v1069, 1
      %v3454 = vrot.slane %v1070, 1
      %v3455 = vrot.slane %v1071, 1
      %v3456 = vrot.slane %v1072, 1
      %v3457 = vrot.slane %v1073, 1
      %v3458 = vrot.slane %v1074, 1
      %v3459 = vrot.slane %v1075, 1
      %v3460 = vrot.slane %v1076, 1
      %v3461 = vrot.slane %v1077, 1
      %v3462 = vrot.slane %v1078, 1
      %v3463 = vrot.slane %v1079, 1
      %v3464 = vrot.slane %v1080, 1
      %v3465 = vrot.slane %v1081, 1
      %v3466 = vrot.slane %v1082, 1
      %v3467 = vrot.slane %v1083, 1
      %v3468 = vrot.slane %v1084, 1
      %v3469 = vrot.slane %v1085, 1
      %v3470 = vrot.slane %v1086, 1
      %v3471 = vrot.slane %v1087, 1
      %v3472 = vrot.slane %v1088, 1
      %v3473 = vrot.slane %v1089, 1
      %v3474 = vrot.slane %v1090, 1
      %v3475 = vrot.slane %v1091, 1
      %v3476 = vrot.slane %v1092, 1
      %v3477 = vrot.slane %v1093, 1
      %v3478 = vrot.slane %v1094, 1
      %v3479 = vrot.slane %v1095, 1
      %v3480 = vrot.slane %v1096, 1
      %v3481 = vrot.slane %v1097, 1
      %v3482 = vrot.slane %v1098, 1
      %v3483 = vrot.slane %v1099, 1
      %v3484 = vrot.slane %v1100, 1
      %v3485 = vrot.slane %v1101, 1
      %v3486 = vrot.slane %v1102, 1
      %v3487 = vrot.slane %v1103, 1
      %v3488 = vrot.slane %v1104, 1
      %v3489 = vrot.slane %v1105, 1
      %v3490 = vrot.slane %v1106, 1
      %v3491 = vrot.slane %v1107, 1
      %vm3492 = vcmp.lt.s32.totalorder %v1141, 7
      %v3493 = vsel %vm3492, %v3488, %v3490
      %v3494 = vsel %vm3492, %v3489, %v3491
      %v3495 = vsel %vm3492, %v3486, %v3488
      %v3496 = vsel %vm3492, %v3487, %v3489
      %v3497 = vsel %vm3492, %v3484, %v3486
      %v3498 = vsel %vm3492, %v3485, %v3487
      %v3499 = vsel %vm3492, %v3482, %v3484
      %v3500 = vsel %vm3492, %v3483, %v3485
      %v3501 = vsel %vm3492, %v3480, %v3482
      %v3502 = vsel %vm3492, %v3481, %v3483
      %v3503 = vsel %vm3492, %v3478, %v3480
      %v3504 = vsel %vm3492, %v3479, %v3481
      %v3505 = vsel %vm3492, %v3476, %v3478
      %v3506 = vsel %vm3492, %v3477, %v3479
      %v3507 = vsel %vm3492, %v3474, %v3476
      %v3508 = vsel %vm3492, %v3475, %v3477
      %v3509 = vsel %vm3492, %v3472, %v3474
      %v3510 = vsel %vm3492, %v3473, %v3475
      %v3511 = vsel %vm3492, %v3470, %v3472
      %v3512 = vsel %vm3492, %v3471, %v3473
      %v3513 = vsel %vm3492, %v3468, %v3470
      %v3514 = vsel %vm3492, %v3469, %v3471
      %v3515 = vsel %vm3492, %v3466, %v3468
      %v3516 = vsel %vm3492, %v3467, %v3469
      %v3517 = vsel %vm3492, %v3464, %v3466
      %v3518 = vsel %vm3492, %v3465, %v3467
      %v3519 = vsel %vm3492, %v3462, %v3464
      %v3520 = vsel %vm3492, %v3463, %v3465
      %v3521 = vsel %vm3492, %v3460, %v3462
      %v3522 = vsel %vm3492, %v3461, %v3463
      %v3523 = vsel %vm3492, %v3458, %v3460
      %v3524 = vsel %vm3492, %v3459, %v3461
      %v3525 = vsel %vm3492, %v3456, %v3458
      %v3526 = vsel %vm3492, %v3457, %v3459
      %v3527 = vsel %vm3492, %v3454, %v3456
      %v3528 = vsel %vm3492, %v3455, %v3457
      %v3529 = vsel %vm3492, %v3452, %v3454
      %v3530 = vsel %vm3492, %v3453, %v3455
      %v3531 = vsel %vm3492, %v3450, %v3452
      %v3532 = vsel %vm3492, %v3451, %v3453
      %v3533 = vsel %vm3492, %v3448, %v3450
      %v3534 = vsel %vm3492, %v3449, %v3451
      %v3535 = vsel %vm3492, %v3446, %v3448
      %v3536 = vsel %vm3492, %v3447, %v3449
      %v3537 = vsel %vm3492, %v3444, %v3446
      %v3538 = vsel %vm3492, %v3445, %v3447
      %v3539 = vsel %vm3492, %v3442, %v3444
      %v3540 = vsel %vm3492, %v3443, %v3445
      %v3541 = vsel %vm3492, %v3440, %v3442
      %v3542 = vsel %vm3492, %v3441, %v3443
      %v3543 = vsel %vm3492, %v3438, %v3440
      %v3544 = vsel %vm3492, %v3439, %v3441
      %v3545 = vsel %vm3492, %v3436, %v3438
      %v3546 = vsel %vm3492, %v3437, %v3439
      %v3547 = vsel %vm3492, %v3434, %v3436
      %v3548 = vsel %vm3492, %v3435, %v3437
      %v3549 = vsel %vm3492, %v3432, %v3434
      %v3550 = vsel %vm3492, %v3433, %v3435
      %v3551 = vsel %vm3492, %v3430, %v3432
      %v3552 = vsel %vm3492, %v3431, %v3433
      %v3553 = vsel %vm3492, %v3428, %v3430
      %v3554 = vsel %vm3492, %v3429, %v3431
      %v3555 = vsel %vm3492, %v3490, %v3428
      %v3556 = vsel %vm3492, %v3491, %v3429
      %v3557 = vadd.s32 %v1525, 1
      %v3558 = vadd.s32 %v1526, 1
      %v3559 = vadd.s32 %v1527, 1
      %v3560 = vadd.s32 %v1528, 1
      %v3561 = vadd.s32 %v1529, 1
      %v3562 = vadd.s32 %v1530, 1
      %v3563 = vadd.s32 %v1531, 1
      %v3564 = vadd.s32 %v1532, 1
      %v3565 = vadd.s32 %v1533, 1
      %v3566 = vadd.s32 %v1534, 1
      %v3567 = vadd.s32 %v1535, 1
      %v3568 = vadd.s32 %v1536, 1
      %v3569 = vadd.s32 %v1537, 1
      %v3570 = vadd.s32 %v1538, 1
      %v3571 = vadd.s32 %v1539, 1
      %v3572 = vadd.s32 %v1540, 1
      %v3573 = vadd.s32 %v1541, 1
      %v3574 = vadd.s32 %v1542, 1
      %v3575 = vadd.s32 %v1543, 1
      %v3576 = vadd.s32 %v1544, 1
      %v3577 = vadd.s32 %v1545, 1
      %v3578 = vadd.s32 %v1546, 1
      %v3579 = vadd.s32 %v1547, 1
      %v3580 = vadd.s32 %v1548, 1
      %v3581 = vadd.s32 %v1549, 1
      %v3582 = vadd.s32 %v1550, 1
      %v3583 = vadd.s32 %v1551, 1
      %v3584 = vadd.s32 %v1552, 1
      %v3585 = vadd.s32 %v1553, 1
      %v3586 = vadd.s32 %v1554, 1
      %v3587 = vadd.s32 %v1555, 1
      %v3588 = vadd.s32 %v1556, 1
      %vm3589 = vcmp.ge.s32.totalorder %v3557, 0
      %vm3590 = vcmp.ge.s32.totalorder %v3558, 0
      %vm3591 = vcmp.ge.s32.totalorder %v3559, 0
      %vm3592 = vcmp.ge.s32.totalorder %v3560, 0
      %vm3593 = vcmp.ge.s32.totalorder %v3561, 0
      %vm3594 = vcmp.ge.s32.totalorder %v3562, 0
      %vm3595 = vcmp.ge.s32.totalorder %v3563, 0
      %vm3596 = vcmp.ge.s32.totalorder %v3564, 0
      %vm3597 = vcmp.ge.s32.totalorder %v3565, 0
      %vm3598 = vcmp.ge.s32.totalorder %v3566, 0
      %vm3599 = vcmp.ge.s32.totalorder %v3567, 0
      %vm3600 = vcmp.ge.s32.totalorder %v3568, 0
      %vm3601 = vcmp.ge.s32.totalorder %v3569, 0
      %vm3602 = vcmp.ge.s32.totalorder %v3570, 0
      %vm3603 = vcmp.ge.s32.totalorder %v3571, 0
      %vm3604 = vcmp.ge.s32.totalorder %v3572, 0
      %vm3605 = vcmp.ge.s32.totalorder %v3573, 0
      %vm3606 = vcmp.ge.s32.totalorder %v3574, 0
      %vm3607 = vcmp.ge.s32.totalorder %v3575, 0
      %vm3608 = vcmp.ge.s32.totalorder %v3576, 0
      %vm3609 = vcmp.ge.s32.totalorder %v3577, 0
      %vm3610 = vcmp.ge.s32.totalorder %v3578, 0
      %vm3611 = vcmp.ge.s32.totalorder %v3579, 0
      %vm3612 = vcmp.ge.s32.totalorder %v3580, 0
      %vm3613 = vcmp.ge.s32.totalorder %v3581, 0
      %vm3614 = vcmp.ge.s32.totalorder %v3582, 0
      %vm3615 = vcmp.ge.s32.totalorder %v3583, 0
      %vm3616 = vcmp.ge.s32.totalorder %v3584, 0
      %vm3617 = vcmp.ge.s32.totalorder %v3585, 0
      %vm3618 = vcmp.ge.s32.totalorder %v3586, 0
      %vm3619 = vcmp.ge.s32.totalorder %v3587, 0
      %vm3620 = vcmp.ge.s32.totalorder %v3588, 0
      %vm3621 = vcmp.lt.s32.totalorder %v3557, 64
      %vm3622 = vcmp.lt.s32.totalorder %v3558, 64
      %vm3623 = vcmp.lt.s32.totalorder %v3559, 64
      %vm3624 = vcmp.lt.s32.totalorder %v3560, 64
      %vm3625 = vcmp.lt.s32.totalorder %v3561, 64
      %vm3626 = vcmp.lt.s32.totalorder %v3562, 64
      %vm3627 = vcmp.lt.s32.totalorder %v3563, 64
      %vm3628 = vcmp.lt.s32.totalorder %v3564, 64
      %vm3629 = vcmp.lt.s32.totalorder %v3565, 64
      %vm3630 = vcmp.lt.s32.totalorder %v3566, 64
      %vm3631 = vcmp.lt.s32.totalorder %v3567, 64
      %vm3632 = vcmp.lt.s32.totalorder %v3568, 64
      %vm3633 = vcmp.lt.s32.totalorder %v3569, 64
      %vm3634 = vcmp.lt.s32.totalorder %v3570, 64
      %vm3635 = vcmp.lt.s32.totalorder %v3571, 64
      %vm3636 = vcmp.lt.s32.totalorder %v3572, 64
      %vm3637 = vcmp.lt.s32.totalorder %v3573, 64
      %vm3638 = vcmp.lt.s32.totalorder %v3574, 64
      %vm3639 = vcmp.lt.s32.totalorder %v3575, 64
      %vm3640 = vcmp.lt.s32.totalorder %v3576, 64
      %vm3641 = vcmp.lt.s32.totalorder %v3577, 64
      %vm3642 = vcmp.lt.s32.totalorder %v3578, 64
      %vm3643 = vcmp.lt.s32.totalorder %v3579, 64
      %vm3644 = vcmp.lt.s32.totalorder %v3580, 64
      %vm3645 = vcmp.lt.s32.totalorder %v3581, 64
      %vm3646 = vcmp.lt.s32.totalorder %v3582, 64
      %vm3647 = vcmp.lt.s32.totalorder %v3583, 64
      %vm3648 = vcmp.lt.s32.totalorder %v3584, 64
      %vm3649 = vcmp.lt.s32.totalorder %v3585, 64
      %vm3650 = vcmp.lt.s32.totalorder %v3586, 64
      %vm3651 = vcmp.lt.s32.totalorder %v3587, 64
      %vm3652 = vcmp.lt.s32.totalorder %v3588, 64
      %vm3653 = vmand %vm3589, %vm3621
      %vm3654 = vmand %vm3590, %vm3622
      %vm3655 = vmand %vm3591, %vm3623
      %vm3656 = vmand %vm3592, %vm3624
      %vm3657 = vmand %vm3593, %vm3625
      %vm3658 = vmand %vm3594, %vm3626
      %vm3659 = vmand %vm3595, %vm3627
      %vm3660 = vmand %vm3596, %vm3628
      %vm3661 = vmand %vm3597, %vm3629
      %vm3662 = vmand %vm3598, %vm3630
      %vm3663 = vmand %vm3599, %vm3631
      %vm3664 = vmand %vm3600, %vm3632
      %vm3665 = vmand %vm3601, %vm3633
      %vm3666 = vmand %vm3602, %vm3634
      %vm3667 = vmand %vm3603, %vm3635
      %vm3668 = vmand %vm3604, %vm3636
      %vm3669 = vmand %vm3605, %vm3637
      %vm3670 = vmand %vm3606, %vm3638
      %vm3671 = vmand %vm3607, %vm3639
      %vm3672 = vmand %vm3608, %vm3640
      %vm3673 = vmand %vm3609, %vm3641
      %vm3674 = vmand %vm3610, %vm3642
      %vm3675 = vmand %vm3611, %vm3643
      %vm3676 = vmand %vm3612, %vm3644
      %vm3677 = vmand %vm3613, %vm3645
      %vm3678 = vmand %vm3614, %vm3646
      %vm3679 = vmand %vm3615, %vm3647
      %vm3680 = vmand %vm3616, %vm3648
      %vm3681 = vmand %vm3617, %vm3649
      %vm3682 = vmand %vm3618, %vm3650
      %vm3683 = vmand %vm3619, %vm3651
      %vm3684 = vmand %vm3620, %vm3652
      %v3685 = vpack.c.bf16 %v3554, %v3553
      %v3686 = vpack.c.bf16 %v3552, %v3551
      %v3687 = vpack.c.bf16 %v3550, %v3549
      %v3688 = vpack.c.bf16 %v3548, %v3547
      %v3689 = vpack.c.bf16 %v3546, %v3545
      %v3690 = vpack.c.bf16 %v3544, %v3543
      %v3691 = vpack.c.bf16 %v3542, %v3541
      %v3692 = vpack.c.bf16 %v3540, %v3539
      %v3693 = vpack.c.bf16 %v3538, %v3537
      %v3694 = vpack.c.bf16 %v3536, %v3535
      %v3695 = vpack.c.bf16 %v3534, %v3533
      %v3696 = vpack.c.bf16 %v3532, %v3531
      %v3697 = vpack.c.bf16 %v3530, %v3529
      %v3698 = vpack.c.bf16 %v3528, %v3527
      %v3699 = vpack.c.bf16 %v3526, %v3525
      %v3700 = vpack.c.bf16 %v3524, %v3523
      %v3701 = vpack.c.bf16 %v3522, %v3521
      %v3702 = vpack.c.bf16 %v3520, %v3519
      %v3703 = vpack.c.bf16 %v3518, %v3517
      %v3704 = vpack.c.bf16 %v3516, %v3515
      %v3705 = vpack.c.bf16 %v3514, %v3513
      %v3706 = vpack.c.bf16 %v3512, %v3511
      %v3707 = vpack.c.bf16 %v3510, %v3509
      %v3708 = vpack.c.bf16 %v3508, %v3507
      %v3709 = vpack.c.bf16 %v3506, %v3505
      %v3710 = vpack.c.bf16 %v3504, %v3503
      %v3711 = vpack.c.bf16 %v3502, %v3501
      %v3712 = vpack.c.bf16 %v3500, %v3499
      %v3713 = vpack.c.bf16 %v3498, %v3497
      %v3714 = vpack.c.bf16 %v3496, %v3495
      %v3715 = vpack.c.bf16 %v3494, %v3493
      %v3716 = vpack.c.bf16 %v3556, %v3555
      %v3717 = vsel %vm3653, 1, 0
      %v3718 = vsel %vm3654, 1, 0
      %v3719 = vsel %vm3655, 1, 0
      %v3720 = vsel %vm3656, 1, 0
      %v3721 = vsel %vm3657, 1, 0
      %v3722 = vsel %vm3658, 1, 0
      %v3723 = vsel %vm3659, 1, 0
      %v3724 = vsel %vm3660, 1, 0
      %v3725 = vsel %vm3661, 1, 0
      %v3726 = vsel %vm3662, 1, 0
      %v3727 = vsel %vm3663, 1, 0
      %v3728 = vsel %vm3664, 1, 0
      %v3729 = vsel %vm3665, 1, 0
      %v3730 = vsel %vm3666, 1, 0
      %v3731 = vsel %vm3667, 1, 0
      %v3732 = vsel %vm3668, 1, 0
      %v3733 = vsel %vm3669, 1, 0
      %v3734 = vsel %vm3670, 1, 0
      %v3735 = vsel %vm3671, 1, 0
      %v3736 = vsel %vm3672, 1, 0
      %v3737 = vsel %vm3673, 1, 0
      %v3738 = vsel %vm3674, 1, 0
      %v3739 = vsel %vm3675, 1, 0
      %v3740 = vsel %vm3676, 1, 0
      %v3741 = vsel %vm3677, 1, 0
      %v3742 = vsel %vm3678, 1, 0
      %v3743 = vsel %vm3679, 1, 0
      %v3744 = vsel %vm3680, 1, 0
      %v3745 = vsel %vm3681, 1, 0
      %v3746 = vsel %vm3682, 1, 0
      %v3747 = vsel %vm3683, 1, 0
      %v3748 = vsel %vm3684, 1, 0
      %vm3749 = vcmp.eq.s32.totalorder %v3717, 1
      %vm3750 = vcmp.eq.s32.totalorder %v3718, 1
      %vm3751 = vcmp.eq.s32.totalorder %v3719, 1
      %vm3752 = vcmp.eq.s32.totalorder %v3720, 1
      %vm3753 = vcmp.eq.s32.totalorder %v3721, 1
      %vm3754 = vcmp.eq.s32.totalorder %v3722, 1
      %vm3755 = vcmp.eq.s32.totalorder %v3723, 1
      %vm3756 = vcmp.eq.s32.totalorder %v3724, 1
      %vm3757 = vcmp.eq.s32.totalorder %v3725, 1
      %vm3758 = vcmp.eq.s32.totalorder %v3726, 1
      %vm3759 = vcmp.eq.s32.totalorder %v3727, 1
      %vm3760 = vcmp.eq.s32.totalorder %v3728, 1
      %vm3761 = vcmp.eq.s32.totalorder %v3729, 1
      %vm3762 = vcmp.eq.s32.totalorder %v3730, 1
      %vm3763 = vcmp.eq.s32.totalorder %v3731, 1
      %vm3764 = vcmp.eq.s32.totalorder %v3732, 1
      %vm3765 = vcmp.eq.s32.totalorder %v3733, 1
      %vm3766 = vcmp.eq.s32.totalorder %v3734, 1
      %vm3767 = vcmp.eq.s32.totalorder %v3735, 1
      %vm3768 = vcmp.eq.s32.totalorder %v3736, 1
      %vm3769 = vcmp.eq.s32.totalorder %v3737, 1
      %vm3770 = vcmp.eq.s32.totalorder %v3738, 1
      %vm3771 = vcmp.eq.s32.totalorder %v3739, 1
      %vm3772 = vcmp.eq.s32.totalorder %v3740, 1
      %vm3773 = vcmp.eq.s32.totalorder %v3741, 1
      %vm3774 = vcmp.eq.s32.totalorder %v3742, 1
      %vm3775 = vcmp.eq.s32.totalorder %v3743, 1
      %vm3776 = vcmp.eq.s32.totalorder %v3744, 1
      %vm3777 = vcmp.eq.s32.totalorder %v3745, 1
      %vm3778 = vcmp.eq.s32.totalorder %v3746, 1
      %vm3779 = vcmp.eq.s32.totalorder %v3747, 1
      %vm3780 = vcmp.eq.s32.totalorder %v3748, 1
      %vm3781 = vmpackc.low %vm3749, %vm3749
      %vm3782 = vmpackc.low %vm3750, %vm3750
      %vm3783 = vmpackc.low %vm3751, %vm3751
      %vm3784 = vmpackc.low %vm3752, %vm3752
      %vm3785 = vmpackc.low %vm3753, %vm3753
      %vm3786 = vmpackc.low %vm3754, %vm3754
      %vm3787 = vmpackc.low %vm3755, %vm3755
      %vm3788 = vmpackc.low %vm3756, %vm3756
      %vm3789 = vmpackc.low %vm3757, %vm3757
      %vm3790 = vmpackc.low %vm3758, %vm3758
      %vm3791 = vmpackc.low %vm3759, %vm3759
      %vm3792 = vmpackc.low %vm3760, %vm3760
      %vm3793 = vmpackc.low %vm3761, %vm3761
      %vm3794 = vmpackc.low %vm3762, %vm3762
      %vm3795 = vmpackc.low %vm3763, %vm3763
      %vm3796 = vmpackc.low %vm3764, %vm3764
      %vm3797 = vmpackc.low %vm3765, %vm3765
      %vm3798 = vmpackc.low %vm3766, %vm3766
      %vm3799 = vmpackc.low %vm3767, %vm3767
      %vm3800 = vmpackc.low %vm3768, %vm3768
      %vm3801 = vmpackc.low %vm3769, %vm3769
      %vm3802 = vmpackc.low %vm3770, %vm3770
      %vm3803 = vmpackc.low %vm3771, %vm3771
      %vm3804 = vmpackc.low %vm3772, %vm3772
      %vm3805 = vmpackc.low %vm3773, %vm3773
      %vm3806 = vmpackc.low %vm3774, %vm3774
      %vm3807 = vmpackc.low %vm3775, %vm3775
      %vm3808 = vmpackc.low %vm3776, %vm3776
      %vm3809 = vmpackc.low %vm3777, %vm3777
      %vm3810 = vmpackc.low %vm3778, %vm3778
      %vm3811 = vmpackc.low %vm3779, %vm3779
      %vm3812 = vmpackc.low %vm3780, %vm3780
      %v3813 = vsel %vm3781, %v3685, 0
      %v3814 = vsel %vm3782, %v3686, 0
      %v3815 = vsel %vm3783, %v3687, 0
      %v3816 = vsel %vm3784, %v3688, 0
      %v3817 = vsel %vm3785, %v3689, 0
      %v3818 = vsel %vm3786, %v3690, 0
      %v3819 = vsel %vm3787, %v3691, 0
      %v3820 = vsel %vm3788, %v3692, 0
      %v3821 = vsel %vm3789, %v3693, 0
      %v3822 = vsel %vm3790, %v3694, 0
      %v3823 = vsel %vm3791, %v3695, 0
      %v3824 = vsel %vm3792, %v3696, 0
      %v3825 = vsel %vm3793, %v3697, 0
      %v3826 = vsel %vm3794, %v3698, 0
      %v3827 = vsel %vm3795, %v3699, 0
      %v3828 = vsel %vm3796, %v3700, 0
      %v3829 = vsel %vm3797, %v3701, 0
      %v3830 = vsel %vm3798, %v3702, 0
      %v3831 = vsel %vm3799, %v3703, 0
      %v3832 = vsel %vm3800, %v3704, 0
      %v3833 = vsel %vm3801, %v3705, 0
      %v3834 = vsel %vm3802, %v3706, 0
      %v3835 = vsel %vm3803, %v3707, 0
      %v3836 = vsel %vm3804, %v3708, 0
      %v3837 = vsel %vm3805, %v3709, 0
      %v3838 = vsel %vm3806, %v3710, 0
      %v3839 = vsel %vm3807, %v3711, 0
      %v3840 = vsel %vm3808, %v3712, 0
      %v3841 = vsel %vm3809, %v3713, 0
      %v3842 = vsel %vm3810, %v3714, 0
      %v3843 = vsel %vm3811, %v3715, 0
      %v3844 = vsel %vm3812, %v3716, 0
      %v3845 = vld [vmem:[%s3 + $0x200] sm:$0xff]
      %v3846 = vld [vmem:[%s3 + $0x208] sm:$0xff]
      %v3847 = vld [vmem:[%s3 + $0x210] sm:$0xff]
      %v3848 = vld [vmem:[%s3 + $0x218] sm:$0xff]
      %v3849 = vld [vmem:[%s3 + $0x220] sm:$0xff]
      %v3850 = vld [vmem:[%s3 + $0x228] sm:$0xff]
      %v3851 = vld [vmem:[%s3 + $0x230] sm:$0xff]
      %v3852 = vld [vmem:[%s3 + $0x238] sm:$0xff]
      %v3853 = vld [vmem:[%s3 + $0x240] sm:$0xff]
      %v3854 = vld [vmem:[%s3 + $0x248] sm:$0xff]
      %v3855 = vld [vmem:[%s3 + $0x250] sm:$0xff]
      %v3856 = vld [vmem:[%s3 + $0x258] sm:$0xff]
      %v3857 = vld [vmem:[%s3 + $0x260] sm:$0xff]
      %v3858 = vld [vmem:[%s3 + $0x268] sm:$0xff]
      %v3859 = vld [vmem:[%s3 + $0x270] sm:$0xff]
      %v3860 = vld [vmem:[%s3 + $0x278] sm:$0xff]
      %v3861 = vld [vmem:[%s3 + $0x280] sm:$0xff]
      %v3862 = vld [vmem:[%s3 + $0x288] sm:$0xff]
      %v3863 = vld [vmem:[%s3 + $0x290] sm:$0xff]
      %v3864 = vld [vmem:[%s3 + $0x298] sm:$0xff]
      %v3865 = vld [vmem:[%s3 + $0x2a0] sm:$0xff]
      %v3866 = vld [vmem:[%s3 + $0x2a8] sm:$0xff]
      %v3867 = vld [vmem:[%s3 + $0x2b0] sm:$0xff]
      %v3868 = vld [vmem:[%s3 + $0x2b8] sm:$0xff]
      %v3869 = vld [vmem:[%s3 + $0x2c0] sm:$0xff]
      %v3870 = vld [vmem:[%s3 + $0x2c8] sm:$0xff]
      %v3871 = vld [vmem:[%s3 + $0x2d0] sm:$0xff]
      %v3872 = vld [vmem:[%s3 + $0x2d8] sm:$0xff]
      %v3873 = vld [vmem:[%s3 + $0x2e0] sm:$0xff]
      %v3874 = vld [vmem:[%s3 + $0x2e8] sm:$0xff]
      %v3875 = vld [vmem:[%s3 + $0x2f0] sm:$0xff]
      %v3876 = vld [vmem:[%s3 + $0x2f8] sm:$0xff]
      %v3909 = vunpack.c.l.b16 %v3813
      %v3910 = vunpack.c.h.b16 %v3813
      %v3911 = vunpack.c.l.b16 %v3814
      %v3912 = vunpack.c.h.b16 %v3814
      %v3913 = vunpack.c.l.b16 %v3815
      %v3914 = vunpack.c.h.b16 %v3815
      %v3915 = vunpack.c.l.b16 %v3816
      %v3916 = vunpack.c.h.b16 %v3816
      %v3917 = vunpack.c.l.b16 %v3817
      %v3918 = vunpack.c.h.b16 %v3817
      %v3919 = vunpack.c.l.b16 %v3818
      %v3920 = vunpack.c.h.b16 %v3818
      %v3921 = vunpack.c.l.b16 %v3819
      %v3922 = vunpack.c.h.b16 %v3819
      %v3923 = vunpack.c.l.b16 %v3820
      %v3924 = vunpack.c.h.b16 %v3820
      %v3925 = vunpack.c.l.b16 %v3821
      %v3926 = vunpack.c.h.b16 %v3821
      %v3927 = vunpack.c.l.b16 %v3822
      %v3928 = vunpack.c.h.b16 %v3822
      %v3929 = vunpack.c.l.b16 %v3823
      %v3930 = vunpack.c.h.b16 %v3823
      %v3931 = vunpack.c.l.b16 %v3824
      %v3932 = vunpack.c.h.b16 %v3824
      %v3933 = vunpack.c.l.b16 %v3825
      %v3934 = vunpack.c.h.b16 %v3825
      %v3935 = vunpack.c.l.b16 %v3826
      %v3936 = vunpack.c.h.b16 %v3826
      %v3937 = vunpack.c.l.b16 %v3827
      %v3938 = vunpack.c.h.b16 %v3827
      %v3939 = vunpack.c.l.b16 %v3828
      %v3940 = vunpack.c.h.b16 %v3828
      %v3941 = vunpack.c.l.b16 %v3829
      %v3942 = vunpack.c.h.b16 %v3829
      %v3943 = vunpack.c.l.b16 %v3830
      %v3944 = vunpack.c.h.b16 %v3830
      %v3945 = vunpack.c.l.b16 %v3831
      %v3946 = vunpack.c.h.b16 %v3831
      %v3947 = vunpack.c.l.b16 %v3832
      %v3948 = vunpack.c.h.b16 %v3832
      %v3949 = vunpack.c.l.b16 %v3833
      %v3950 = vunpack.c.h.b16 %v3833
      %v3951 = vunpack.c.l.b16 %v3834
      %v3952 = vunpack.c.h.b16 %v3834
      %v3953 = vunpack.c.l.b16 %v3835
      %v3954 = vunpack.c.h.b16 %v3835
      %v3955 = vunpack.c.l.b16 %v3836
      %v3956 = vunpack.c.h.b16 %v3836
      %v3957 = vunpack.c.l.b16 %v3837
      %v3958 = vunpack.c.h.b16 %v3837
      %v3959 = vunpack.c.l.b16 %v3838
      %v3960 = vunpack.c.h.b16 %v3838
      %v3961 = vunpack.c.l.b16 %v3839
      %v3962 = vunpack.c.h.b16 %v3839
      %v3963 = vunpack.c.l.b16 %v3840
      %v3964 = vunpack.c.h.b16 %v3840
      %v3965 = vunpack.c.l.b16 %v3841
      %v3966 = vunpack.c.h.b16 %v3841
      %v3967 = vunpack.c.l.b16 %v3842
      %v3968 = vunpack.c.h.b16 %v3842
      %v3969 = vunpack.c.l.b16 %v3843
      %v3970 = vunpack.c.h.b16 %v3843
      %v3971 = vunpack.c.l.b16 %v3844
      %v3972 = vunpack.c.h.b16 %v3844
      %v3973 = vpack.c.b16 %v3911, %v3909
      %v3974 = vpack.c.b16 %v3912, %v3910
      %v3975 = vpack.c.b16 %v3915, %v3913
      %v3976 = vpack.c.b16 %v3916, %v3914
      %v3977 = vpack.c.b16 %v3919, %v3917
      %v3978 = vpack.c.b16 %v3920, %v3918
      %v3979 = vpack.c.b16 %v3923, %v3921
      %v3980 = vpack.c.b16 %v3924, %v3922
      %v3981 = vpack.c.b16 %v3927, %v3925
      %v3982 = vpack.c.b16 %v3928, %v3926
      %v3983 = vpack.c.b16 %v3931, %v3929
      %v3984 = vpack.c.b16 %v3932, %v3930
      %v3985 = vpack.c.b16 %v3935, %v3933
      %v3986 = vpack.c.b16 %v3936, %v3934
      %v3987 = vpack.c.b16 %v3939, %v3937
      %v3988 = vpack.c.b16 %v3940, %v3938
      %v3989 = vpack.c.b16 %v3943, %v3941
      %v3990 = vpack.c.b16 %v3944, %v3942
      %v3991 = vpack.c.b16 %v3947, %v3945
      %v3992 = vpack.c.b16 %v3948, %v3946
      %v3993 = vpack.c.b16 %v3951, %v3949
      %v3994 = vpack.c.b16 %v3952, %v3950
      %v3995 = vpack.c.b16 %v3955, %v3953
      %v3996 = vpack.c.b16 %v3956, %v3954
      %v3997 = vpack.c.b16 %v3959, %v3957
      %v3998 = vpack.c.b16 %v3960, %v3958
      %v3999 = vpack.c.b16 %v3963, %v3961
      %v4000 = vpack.c.b16 %v3964, %v3962
      %v4001 = vpack.c.b16 %v3967, %v3965
      %v4002 = vpack.c.b16 %v3968, %v3966
      %v4003 = vpack.c.b16 %v3971, %v3969
      %v4004 = vpack.c.b16 %v3972, %v3970
      %v4069 = vunpack.c.l.b16 %v3845
      %v4070 = vunpack.c.h.b16 %v3845
      %v4071 = vunpack.c.l.b16 %v3846
      %v4072 = vunpack.c.h.b16 %v3846
      %v4073 = vunpack.c.l.b16 %v3847
      %v4074 = vunpack.c.h.b16 %v3847
      %v4075 = vunpack.c.l.b16 %v3848
      %v4076 = vunpack.c.h.b16 %v3848
      %v4077 = vunpack.c.l.b16 %v3849
      %v4078 = vunpack.c.h.b16 %v3849
      %v4079 = vunpack.c.l.b16 %v3850
      %v4080 = vunpack.c.h.b16 %v3850
      %v4081 = vunpack.c.l.b16 %v3851
      %v4082 = vunpack.c.h.b16 %v3851
      %v4083 = vunpack.c.l.b16 %v3852
      %v4084 = vunpack.c.h.b16 %v3852
      %v4085 = vunpack.c.l.b16 %v3853
      %v4086 = vunpack.c.h.b16 %v3853
      %v4087 = vunpack.c.l.b16 %v3854
      %v4088 = vunpack.c.h.b16 %v3854
      %v4089 = vunpack.c.l.b16 %v3855
      %v4090 = vunpack.c.h.b16 %v3855
      %v4091 = vunpack.c.l.b16 %v3856
      %v4092 = vunpack.c.h.b16 %v3856
      %v4093 = vunpack.c.l.b16 %v3857
      %v4094 = vunpack.c.h.b16 %v3857
      %v4095 = vunpack.c.l.b16 %v3858
      %v4096 = vunpack.c.h.b16 %v3858
      %v4097 = vunpack.c.l.b16 %v3859
      %v4098 = vunpack.c.h.b16 %v3859
      %v4099 = vunpack.c.l.b16 %v3860
      %v4100 = vunpack.c.h.b16 %v3860
      %v4101 = vunpack.c.l.b16 %v3861
      %v4102 = vunpack.c.h.b16 %v3861
      %v4103 = vunpack.c.l.b16 %v3862
      %v4104 = vunpack.c.h.b16 %v3862
      %v4105 = vunpack.c.l.b16 %v3863
      %v4106 = vunpack.c.h.b16 %v3863
      %v4107 = vunpack.c.l.b16 %v3864
      %v4108 = vunpack.c.h.b16 %v3864
      %v4109 = vunpack.c.l.b16 %v3865
      %v4110 = vunpack.c.h.b16 %v3865
      %v4111 = vunpack.c.l.b16 %v3866
      %v4112 = vunpack.c.h.b16 %v3866
      %v4113 = vunpack.c.l.b16 %v3867
      %v4114 = vunpack.c.h.b16 %v3867
      %v4115 = vunpack.c.l.b16 %v3868
      %v4116 = vunpack.c.h.b16 %v3868
      %v4117 = vunpack.c.l.b16 %v3869
      %v4118 = vunpack.c.h.b16 %v3869
      %v4119 = vunpack.c.l.b16 %v3870
      %v4120 = vunpack.c.h.b16 %v3870
      %v4121 = vunpack.c.l.b16 %v3871
      %v4122 = vunpack.c.h.b16 %v3871
      %v4123 = vunpack.c.l.b16 %v3872
      %v4124 = vunpack.c.h.b16 %v3872
      %v4125 = vunpack.c.l.b16 %v3873
      %v4126 = vunpack.c.h.b16 %v3873
      %v4127 = vunpack.c.l.b16 %v3874
      %v4128 = vunpack.c.h.b16 %v3874
      %v4129 = vunpack.c.l.b16 %v3875
      %v4130 = vunpack.c.h.b16 %v3875
      %v4131 = vunpack.c.l.b16 %v3876
      %v4132 = vunpack.c.h.b16 %v3876
      %v4133 = vpack.c.b16 %v4071, %v4069
      %v4134 = vpack.c.b16 %v4072, %v4070
      %v4135 = vpack.c.b16 %v4075, %v4073
      %v4136 = vpack.c.b16 %v4076, %v4074
      %v4137 = vpack.c.b16 %v4079, %v4077
      %v4138 = vpack.c.b16 %v4080, %v4078
      %v4139 = vpack.c.b16 %v4083, %v4081
      %v4140 = vpack.c.b16 %v4084, %v4082
      %v4141 = vpack.c.b16 %v4087, %v4085
      %v4142 = vpack.c.b16 %v4088, %v4086
      %v4143 = vpack.c.b16 %v4091, %v4089
      %v4144 = vpack.c.b16 %v4092, %v4090
      %v4145 = vpack.c.b16 %v4095, %v4093
      %v4146 = vpack.c.b16 %v4096, %v4094
      %v4147 = vpack.c.b16 %v4099, %v4097
      %v4148 = vpack.c.b16 %v4100, %v4098
      %v4149 = vpack.c.b16 %v4103, %v4101
      %v4150 = vpack.c.b16 %v4104, %v4102
      %v4151 = vpack.c.b16 %v4107, %v4105
      %v4152 = vpack.c.b16 %v4108, %v4106
      %v4153 = vpack.c.b16 %v4111, %v4109
      %v4154 = vpack.c.b16 %v4112, %v4110
      %v4155 = vpack.c.b16 %v4115, %v4113
      %v4156 = vpack.c.b16 %v4116, %v4114
      %v4157 = vpack.c.b16 %v4119, %v4117
      %v4158 = vpack.c.b16 %v4120, %v4118
      %v4159 = vpack.c.b16 %v4123, %v4121
      %v4160 = vpack.c.b16 %v4124, %v4122
      %v4161 = vpack.c.b16 %v4127, %v4125
      %v4162 = vpack.c.b16 %v4128, %v4126
      %v4163 = vpack.c.b16 %v4131, %v4129
      %v4164 = vpack.c.b16 %v4132, %v4130
      %4197 = vmatpush.bf16.msra.mxu0 %v4147
      %4198 = vmatpush.bf16.msra.mxu0 %v4145
      %4199 = vmatpush.bf16.msra.mxu0 %v4143
      %4200 = vmatpush.bf16.msra.mxu0 %v4141
      %4201 = vmatpush.bf16.msra.mxu0 %v4139
      %4202 = vmatpush.bf16.msra.mxu0 %v4137
      %4203 = vmatpush.bf16.msra.mxu0 %v4135
      %4204 = vmatpush.bf16.msra.mxu0 %v4133
      %4205 = vmatmul.bf16.gmra.mxu0 %v3973
      %v4206 = vpop.f32.mrf.mxu0
      %v4207 = vadd.f32 0.0, %v4206
      %v4208 = vpop.f32.mrf.mxu0
      %v4209 = vadd.f32 0.0, %v4208
      %4210 = vmatmul.bf16.gmra.mxu0 %v3975
      %v4211 = vpop.f32.mrf.mxu0
      %v4212 = vadd.f32 0.0, %v4211
      %v4213 = vpop.f32.mrf.mxu0
      %v4214 = vadd.f32 0.0, %v4213
      %4215 = vmatmul.bf16.gmra.mxu0 %v3977
      %v4216 = vpop.f32.mrf.mxu0
      %v4217 = vadd.f32 0.0, %v4216
      %v4218 = vpop.f32.mrf.mxu0
      %v4219 = vadd.f32 0.0, %v4218
      %4220 = vmatmul.bf16.gmra.mxu0 %v3979
      %v4221 = vpop.f32.mrf.mxu0
      %v4222 = vadd.f32 0.0, %v4221
      %v4223 = vpop.f32.mrf.mxu0
      %v4224 = vadd.f32 0.0, %v4223
      %4225 = vmatmul.bf16.gmra.mxu0 %v3981
      %v4226 = vpop.f32.mrf.mxu0
      %v4227 = vadd.f32 0.0, %v4226
      %v4228 = vpop.f32.mrf.mxu0
      %v4229 = vadd.f32 0.0, %v4228
      %4230 = vmatmul.bf16.gmra.mxu0 %v3983
      %v4231 = vpop.f32.mrf.mxu0
      %v4232 = vadd.f32 0.0, %v4231
      %v4233 = vpop.f32.mrf.mxu0
      %v4234 = vadd.f32 0.0, %v4233
      %4235 = vmatmul.bf16.gmra.mxu0 %v3985
      %v4236 = vpop.f32.mrf.mxu0
      %v4237 = vadd.f32 0.0, %v4236
      %v4238 = vpop.f32.mrf.mxu0
      %v4239 = vadd.f32 0.0, %v4238
      %4240 = vmatmul.bf16.gmra.mxu0 %v3987
      %v4241 = vpop.f32.mrf.mxu0
      %v4242 = vadd.f32 0.0, %v4241
      %v4243 = vpop.f32.mrf.mxu0
      %v4244 = vadd.f32 0.0, %v4243
      %4245 = vmatmul.bf16.gmra.mxu0 %v3989
      %v4246 = vpop.f32.mrf.mxu0
      %v4247 = vadd.f32 0.0, %v4246
      %v4248 = vpop.f32.mrf.mxu0
      %v4249 = vadd.f32 0.0, %v4248
      %4250 = vmatmul.bf16.gmra.mxu0 %v3991
      %v4251 = vpop.f32.mrf.mxu0
      %v4252 = vadd.f32 0.0, %v4251
      %v4253 = vpop.f32.mrf.mxu0
      %v4254 = vadd.f32 0.0, %v4253
      %4255 = vmatmul.bf16.gmra.mxu0 %v3993
      %v4256 = vpop.f32.mrf.mxu0
      %v4257 = vadd.f32 0.0, %v4256
      %v4258 = vpop.f32.mrf.mxu0
      %v4259 = vadd.f32 0.0, %v4258
      %4260 = vmatmul.bf16.gmra.mxu0 %v3995
      %v4261 = vpop.f32.mrf.mxu0
      %v4262 = vadd.f32 0.0, %v4261
      %v4263 = vpop.f32.mrf.mxu0
      %v4264 = vadd.f32 0.0, %v4263
      %4265 = vmatmul.bf16.gmra.mxu0 %v3997
      %v4266 = vpop.f32.mrf.mxu0
      %v4267 = vadd.f32 0.0, %v4266
      %v4268 = vpop.f32.mrf.mxu0
      %v4269 = vadd.f32 0.0, %v4268
      %4270 = vmatmul.bf16.gmra.mxu0 %v3999
      %v4271 = vpop.f32.mrf.mxu0
      %v4272 = vadd.f32 0.0, %v4271
      %v4273 = vpop.f32.mrf.mxu0
      %v4274 = vadd.f32 0.0, %v4273
      %4275 = vmatmul.bf16.gmra.mxu0 %v4001
      %v4276 = vpop.f32.mrf.mxu0
      %v4277 = vadd.f32 0.0, %v4276
      %v4278 = vpop.f32.mrf.mxu0
      %v4279 = vadd.f32 0.0, %v4278
      %4280 = vmatmul.bf16.gmra.mxu0 %v4003
      %v4281 = vpop.f32.mrf.mxu0
      %v4282 = vadd.f32 0.0, %v4281
      %v4283 = vpop.f32.mrf.mxu0
      %v4284 = vadd.f32 0.0, %v4283
      %4285 = vdwg.mxu0
      %4286 = vmatpush.bf16.msra.mxu0 %v4163
      %4287 = vmatpush.bf16.msra.mxu0 %v4161
      %4288 = vmatpush.bf16.msra.mxu0 %v4159
      %4289 = vmatpush.bf16.msra.mxu0 %v4157
      %4290 = vmatpush.bf16.msra.mxu0 %v4155
      %4291 = vmatpush.bf16.msra.mxu0 %v4153
      %4292 = vmatpush.bf16.msra.mxu0 %v4151
      %4293 = vmatpush.bf16.msra.mxu0 %v4149
      %4294 = vmatmul.bf16.gmra.mxu0 %v3974
      %v4295 = vpop.f32.mrf.mxu0
      %v4296 = vadd.f32 %v4207, %v4295
      %v4297 = vpop.f32.mrf.mxu0
      %v4298 = vadd.f32 %v4209, %v4297
      %4299 = vmatmul.bf16.gmra.mxu0 %v3976
      %v4300 = vpop.f32.mrf.mxu0
      %v4301 = vadd.f32 %v4212, %v4300
      %v4302 = vpop.f32.mrf.mxu0
      %v4303 = vadd.f32 %v4214, %v4302
      %4304 = vmatmul.bf16.gmra.mxu0 %v3978
      %v4305 = vpop.f32.mrf.mxu0
      %v4306 = vadd.f32 %v4217, %v4305
      %v4307 = vpop.f32.mrf.mxu0
      %v4308 = vadd.f32 %v4219, %v4307
      %4309 = vmatmul.bf16.gmra.mxu0 %v3980
      %v4310 = vpop.f32.mrf.mxu0
      %v4311 = vadd.f32 %v4222, %v4310
      %v4312 = vpop.f32.mrf.mxu0
      %v4313 = vadd.f32 %v4224, %v4312
      %4314 = vmatmul.bf16.gmra.mxu0 %v3982
      %v4315 = vpop.f32.mrf.mxu0
      %v4316 = vadd.f32 %v4227, %v4315
      %v4317 = vpop.f32.mrf.mxu0
      %v4318 = vadd.f32 %v4229, %v4317
      %4319 = vmatmul.bf16.gmra.mxu0 %v3984
      %v4320 = vpop.f32.mrf.mxu0
      %v4321 = vadd.f32 %v4232, %v4320
      %v4322 = vpop.f32.mrf.mxu0
      %v4323 = vadd.f32 %v4234, %v4322
      %4324 = vmatmul.bf16.gmra.mxu0 %v3986
      %v4325 = vpop.f32.mrf.mxu0
      %v4326 = vadd.f32 %v4237, %v4325
      %v4327 = vpop.f32.mrf.mxu0
      %v4328 = vadd.f32 %v4239, %v4327
      %4329 = vmatmul.bf16.gmra.mxu0 %v3988
      %v4330 = vpop.f32.mrf.mxu0
      %v4331 = vadd.f32 %v4242, %v4330
      %v4332 = vpop.f32.mrf.mxu0
      %v4333 = vadd.f32 %v4244, %v4332
      %4334 = vmatmul.bf16.gmra.mxu0 %v3990
      %v4335 = vpop.f32.mrf.mxu0
      %v4336 = vadd.f32 %v4247, %v4335
      %v4337 = vpop.f32.mrf.mxu0
      %v4338 = vadd.f32 %v4249, %v4337
      %4339 = vmatmul.bf16.gmra.mxu0 %v3992
      %v4340 = vpop.f32.mrf.mxu0
      %v4341 = vadd.f32 %v4252, %v4340
      %v4342 = vpop.f32.mrf.mxu0
      %v4343 = vadd.f32 %v4254, %v4342
      %4344 = vmatmul.bf16.gmra.mxu0 %v3994
      %v4345 = vpop.f32.mrf.mxu0
      %v4346 = vadd.f32 %v4257, %v4345
      %v4347 = vpop.f32.mrf.mxu0
      %v4348 = vadd.f32 %v4259, %v4347
      %4349 = vmatmul.bf16.gmra.mxu0 %v3996
      %v4350 = vpop.f32.mrf.mxu0
      %v4351 = vadd.f32 %v4262, %v4350
      %v4352 = vpop.f32.mrf.mxu0
      %v4353 = vadd.f32 %v4264, %v4352
      %4354 = vmatmul.bf16.gmra.mxu0 %v3998
      %v4355 = vpop.f32.mrf.mxu0
      %v4356 = vadd.f32 %v4267, %v4355
      %v4357 = vpop.f32.mrf.mxu0
      %v4358 = vadd.f32 %v4269, %v4357
      %4359 = vmatmul.bf16.gmra.mxu0 %v4000
      %v4360 = vpop.f32.mrf.mxu0
      %v4361 = vadd.f32 %v4272, %v4360
      %v4362 = vpop.f32.mrf.mxu0
      %v4363 = vadd.f32 %v4274, %v4362
      %4364 = vmatmul.bf16.gmra.mxu0 %v4002
      %v4365 = vpop.f32.mrf.mxu0
      %v4366 = vadd.f32 %v4277, %v4365
      %v4367 = vpop.f32.mrf.mxu0
      %v4368 = vadd.f32 %v4279, %v4367
      %4369 = vmatmul.bf16.gmra.mxu0 %v4004
      %v4370 = vpop.f32.mrf.mxu0
      %v4371 = vadd.f32 %v4282, %v4370
      %v4372 = vpop.f32.mrf.mxu0
      %v4373 = vadd.f32 %v4284, %v4372
      %4374 = vdwg.mxu0
      %4375 = vmatpush.bf16.msra.mxu0 %v4148
      %4376 = vmatpush.bf16.msra.mxu0 %v4146
      %4377 = vmatpush.bf16.msra.mxu0 %v4144
      %4378 = vmatpush.bf16.msra.mxu0 %v4142
      %4379 = vmatpush.bf16.msra.mxu0 %v4140
      %4380 = vmatpush.bf16.msra.mxu0 %v4138
      %4381 = vmatpush.bf16.msra.mxu0 %v4136
      %4382 = vmatpush.bf16.msra.mxu0 %v4134
      %4383 = vmatmul.bf16.gmra.mxu0 %v3973
      %v4384 = vpop.f32.mrf.mxu0
      %v4385 = vadd.f32 0.0, %v4384
      %v4386 = vpop.f32.mrf.mxu0
      %v4387 = vadd.f32 0.0, %v4386
      %4388 = vmatmul.bf16.gmra.mxu0 %v3975
      %v4389 = vpop.f32.mrf.mxu0
      %v4390 = vadd.f32 0.0, %v4389
      %v4391 = vpop.f32.mrf.mxu0
      %v4392 = vadd.f32 0.0, %v4391
      %4393 = vmatmul.bf16.gmra.mxu0 %v3977
      %v4394 = vpop.f32.mrf.mxu0
      %v4395 = vadd.f32 0.0, %v4394
      %v4396 = vpop.f32.mrf.mxu0
      %v4397 = vadd.f32 0.0, %v4396
      %4398 = vmatmul.bf16.gmra.mxu0 %v3979
      %v4399 = vpop.f32.mrf.mxu0
      %v4400 = vadd.f32 0.0, %v4399
      %v4401 = vpop.f32.mrf.mxu0
      %v4402 = vadd.f32 0.0, %v4401
      %4403 = vmatmul.bf16.gmra.mxu0 %v3981
      %v4404 = vpop.f32.mrf.mxu0
      %v4405 = vadd.f32 0.0, %v4404
      %v4406 = vpop.f32.mrf.mxu0
      %v4407 = vadd.f32 0.0, %v4406
      %4408 = vmatmul.bf16.gmra.mxu0 %v3983
      %v4409 = vpop.f32.mrf.mxu0
      %v4410 = vadd.f32 0.0, %v4409
      %v4411 = vpop.f32.mrf.mxu0
      %v4412 = vadd.f32 0.0, %v4411
      %4413 = vmatmul.bf16.gmra.mxu0 %v3985
      %v4414 = vpop.f32.mrf.mxu0
      %v4415 = vadd.f32 0.0, %v4414
      %v4416 = vpop.f32.mrf.mxu0
      %v4417 = vadd.f32 0.0, %v4416
      %4418 = vmatmul.bf16.gmra.mxu0 %v3987
      %v4419 = vpop.f32.mrf.mxu0
      %v4420 = vadd.f32 0.0, %v4419
      %v4421 = vpop.f32.mrf.mxu0
      %v4422 = vadd.f32 0.0, %v4421
      %4423 = vmatmul.bf16.gmra.mxu0 %v3989
      %v4424 = vpop.f32.mrf.mxu0
      %v4425 = vadd.f32 0.0, %v4424
      %v4426 = vpop.f32.mrf.mxu0
      %v4427 = vadd.f32 0.0, %v4426
      %4428 = vmatmul.bf16.gmra.mxu0 %v3991
      %v4429 = vpop.f32.mrf.mxu0
      %v4430 = vadd.f32 0.0, %v4429
      %v4431 = vpop.f32.mrf.mxu0
      %v4432 = vadd.f32 0.0, %v4431
      %4433 = vmatmul.bf16.gmra.mxu0 %v3993
      %v4434 = vpop.f32.mrf.mxu0
      %v4435 = vadd.f32 0.0, %v4434
      %v4436 = vpop.f32.mrf.mxu0
      %v4437 = vadd.f32 0.0, %v4436
      %4438 = vmatmul.bf16.gmra.mxu0 %v3995
      %v4439 = vpop.f32.mrf.mxu0
      %v4440 = vadd.f32 0.0, %v4439
      %v4441 = vpop.f32.mrf.mxu0
      %v4442 = vadd.f32 0.0, %v4441
      %4443 = vmatmul.bf16.gmra.mxu0 %v3997
      %v4444 = vpop.f32.mrf.mxu0
      %v4445 = vadd.f32 0.0, %v4444
      %v4446 = vpop.f32.mrf.mxu0
      %v4447 = vadd.f32 0.0, %v4446
      %4448 = vmatmul.bf16.gmra.mxu0 %v3999
      %v4449 = vpop.f32.mrf.mxu0
      %v4450 = vadd.f32 0.0, %v4449
      %v4451 = vpop.f32.mrf.mxu0
      %v4452 = vadd.f32 0.0, %v4451
      %4453 = vmatmul.bf16.gmra.mxu0 %v4001
      %v4454 = vpop.f32.mrf.mxu0
      %v4455 = vadd.f32 0.0, %v4454
      %v4456 = vpop.f32.mrf.mxu0
      %v4457 = vadd.f32 0.0, %v4456
      %4458 = vmatmul.bf16.gmra.mxu0 %v4003
      %v4459 = vpop.f32.mrf.mxu0
      %v4460 = vadd.f32 0.0, %v4459
      %v4461 = vpop.f32.mrf.mxu0
      %v4462 = vadd.f32 0.0, %v4461
      %4463 = vdwg.mxu0
      %4464 = vmatpush.bf16.msra.mxu0 %v4164
      %4465 = vmatpush.bf16.msra.mxu0 %v4162
      %4466 = vmatpush.bf16.msra.mxu0 %v4160
      %4467 = vmatpush.bf16.msra.mxu0 %v4158
      %4468 = vmatpush.bf16.msra.mxu0 %v4156
      %4469 = vmatpush.bf16.msra.mxu0 %v4154
      %4470 = vmatpush.bf16.msra.mxu0 %v4152
      %4471 = vmatpush.bf16.msra.mxu0 %v4150
      %4472 = vmatmul.bf16.gmra.mxu0 %v3974
      %v4473 = vpop.f32.mrf.mxu0
      %v4474 = vadd.f32 %v4385, %v4473
      %v4475 = vpop.f32.mrf.mxu0
      %v4476 = vadd.f32 %v4387, %v4475
      %4477 = vmatmul.bf16.gmra.mxu0 %v3976
      %v4478 = vpop.f32.mrf.mxu0
      %v4479 = vadd.f32 %v4390, %v4478
      %v4480 = vpop.f32.mrf.mxu0
      %v4481 = vadd.f32 %v4392, %v4480
      %4482 = vmatmul.bf16.gmra.mxu0 %v3978
      %v4483 = vpop.f32.mrf.mxu0
      %v4484 = vadd.f32 %v4395, %v4483
      %v4485 = vpop.f32.mrf.mxu0
      %v4486 = vadd.f32 %v4397, %v4485
      %4487 = vmatmul.bf16.gmra.mxu0 %v3980
      %v4488 = vpop.f32.mrf.mxu0
      %v4489 = vadd.f32 %v4400, %v4488
      %v4490 = vpop.f32.mrf.mxu0
      %v4491 = vadd.f32 %v4402, %v4490
      %4492 = vmatmul.bf16.gmra.mxu0 %v3982
      %v4493 = vpop.f32.mrf.mxu0
      %v4494 = vadd.f32 %v4405, %v4493
      %v4495 = vpop.f32.mrf.mxu0
      %v4496 = vadd.f32 %v4407, %v4495
      %4497 = vmatmul.bf16.gmra.mxu0 %v3984
      %v4498 = vpop.f32.mrf.mxu0
      %v4499 = vadd.f32 %v4410, %v4498
      %v4500 = vpop.f32.mrf.mxu0
      %v4501 = vadd.f32 %v4412, %v4500
      %4502 = vmatmul.bf16.gmra.mxu0 %v3986
      %v4503 = vpop.f32.mrf.mxu0
      %v4504 = vadd.f32 %v4415, %v4503
      %v4505 = vpop.f32.mrf.mxu0
      %v4506 = vadd.f32 %v4417, %v4505
      %4507 = vmatmul.bf16.gmra.mxu0 %v3988
      %v4508 = vpop.f32.mrf.mxu0
      %v4509 = vadd.f32 %v4420, %v4508
      %v4510 = vpop.f32.mrf.mxu0
      %v4511 = vadd.f32 %v4422, %v4510
      %4512 = vmatmul.bf16.gmra.mxu0 %v3990
      %v4513 = vpop.f32.mrf.mxu0
      %v4514 = vadd.f32 %v4425, %v4513
      %v4515 = vpop.f32.mrf.mxu0
      %v4516 = vadd.f32 %v4427, %v4515
      %4517 = vmatmul.bf16.gmra.mxu0 %v3992
      %v4518 = vpop.f32.mrf.mxu0
      %v4519 = vadd.f32 %v4430, %v4518
      %v4520 = vpop.f32.mrf.mxu0
      %v4521 = vadd.f32 %v4432, %v4520
      %4522 = vmatmul.bf16.gmra.mxu0 %v3994
      %v4523 = vpop.f32.mrf.mxu0
      %v4524 = vadd.f32 %v4435, %v4523
      %v4525 = vpop.f32.mrf.mxu0
      %v4526 = vadd.f32 %v4437, %v4525
      %4527 = vmatmul.bf16.gmra.mxu0 %v3996
      %v4528 = vpop.f32.mrf.mxu0
      %v4529 = vadd.f32 %v4440, %v4528
      %v4530 = vpop.f32.mrf.mxu0
      %v4531 = vadd.f32 %v4442, %v4530
      %4532 = vmatmul.bf16.gmra.mxu0 %v3998
      %v4533 = vpop.f32.mrf.mxu0
      %v4534 = vadd.f32 %v4445, %v4533
      %v4535 = vpop.f32.mrf.mxu0
      %v4536 = vadd.f32 %v4447, %v4535
      %4537 = vmatmul.bf16.gmra.mxu0 %v4000
      %v4538 = vpop.f32.mrf.mxu0
      %v4539 = vadd.f32 %v4450, %v4538
      %v4540 = vpop.f32.mrf.mxu0
      %v4541 = vadd.f32 %v4452, %v4540
      %4542 = vmatmul.bf16.gmra.mxu0 %v4002
      %v4543 = vpop.f32.mrf.mxu0
      %v4544 = vadd.f32 %v4455, %v4543
      %v4545 = vpop.f32.mrf.mxu0
      %v4546 = vadd.f32 %v4457, %v4545
      %4547 = vmatmul.bf16.gmra.mxu0 %v4004
      %v4548 = vpop.f32.mrf.mxu0
      %v4549 = vadd.f32 %v4460, %v4548
      %v4550 = vpop.f32.mrf.mxu0
      %v4551 = vadd.f32 %v4462, %v4550
      %4552 = vdwg.mxu0
      %v4553 = vadd.f32 %v3364, %v4296
      %v4554 = vadd.f32 %v3365, %v4474
      %v4555 = vadd.f32 %v3366, %v4298
      %v4556 = vadd.f32 %v3367, %v4476
      %v4557 = vadd.f32 %v3368, %v4301
      %v4558 = vadd.f32 %v3369, %v4479
      %v4559 = vadd.f32 %v3370, %v4303
      %v4560 = vadd.f32 %v3371, %v4481
      %v4561 = vadd.f32 %v3372, %v4306
      %v4562 = vadd.f32 %v3373, %v4484
      %v4563 = vadd.f32 %v3374, %v4308
      %v4564 = vadd.f32 %v3375, %v4486
      %v4565 = vadd.f32 %v3376, %v4311
      %v4566 = vadd.f32 %v3377, %v4489
      %v4567 = vadd.f32 %v3378, %v4313
      %v4568 = vadd.f32 %v3379, %v4491
      %v4569 = vadd.f32 %v3380, %v4316
      %v4570 = vadd.f32 %v3381, %v4494
      %v4571 = vadd.f32 %v3382, %v4318
      %v4572 = vadd.f32 %v3383, %v4496
      %v4573 = vadd.f32 %v3384, %v4321
      %v4574 = vadd.f32 %v3385, %v4499
      %v4575 = vadd.f32 %v3386, %v4323
      %v4576 = vadd.f32 %v3387, %v4501
      %v4577 = vadd.f32 %v3388, %v4326
      %v4578 = vadd.f32 %v3389, %v4504
      %v4579 = vadd.f32 %v3390, %v4328
      %v4580 = vadd.f32 %v3391, %v4506
      %v4581 = vadd.f32 %v3392, %v4331
      %v4582 = vadd.f32 %v3393, %v4509
      %v4583 = vadd.f32 %v3394, %v4333
      %v4584 = vadd.f32 %v3395, %v4511
      %v4585 = vadd.f32 %v3396, %v4336
      %v4586 = vadd.f32 %v3397, %v4514
      %v4587 = vadd.f32 %v3398, %v4338
      %v4588 = vadd.f32 %v3399, %v4516
      %v4589 = vadd.f32 %v3400, %v4341
      %v4590 = vadd.f32 %v3401, %v4519
      %v4591 = vadd.f32 %v3402, %v4343
      %v4592 = vadd.f32 %v3403, %v4521
      %v4593 = vadd.f32 %v3404, %v4346
      %v4594 = vadd.f32 %v3405, %v4524
      %v4595 = vadd.f32 %v3406, %v4348
      %v4596 = vadd.f32 %v3407, %v4526
      %v4597 = vadd.f32 %v3408, %v4351
      %v4598 = vadd.f32 %v3409, %v4529
      %v4599 = vadd.f32 %v3410, %v4353
      %v4600 = vadd.f32 %v3411, %v4531
      %v4601 = vadd.f32 %v3412, %v4356
      %v4602 = vadd.f32 %v3413, %v4534
      %v4603 = vadd.f32 %v3414, %v4358
      %v4604 = vadd.f32 %v3415, %v4536
      %v4605 = vadd.f32 %v3416, %v4361
      %v4606 = vadd.f32 %v3417, %v4539
      %v4607 = vadd.f32 %v3418, %v4363
      %v4608 = vadd.f32 %v3419, %v4541
      %v4609 = vadd.f32 %v3420, %v4366
      %v4610 = vadd.f32 %v3421, %v4544
      %v4611 = vadd.f32 %v3422, %v4368
      %v4612 = vadd.f32 %v3423, %v4546
      %v4613 = vadd.f32 %v3424, %v4371
      %v4614 = vadd.f32 %v3425, %v4549
      %v4615 = vadd.f32 %v3426, %v4373
      %v4616 = vadd.f32 %v3427, %v4551
      %v4617 = vmax.f32 %v4553, 0.0
      %v4618 = vmax.f32 %v4554, 0.0
      %v4619 = vmax.f32 %v4555, 0.0
      %v4620 = vmax.f32 %v4556, 0.0
      %v4621 = vmax.f32 %v4557, 0.0
      %v4622 = vmax.f32 %v4558, 0.0
      %v4623 = vmax.f32 %v4559, 0.0
      %v4624 = vmax.f32 %v4560, 0.0
      %v4625 = vmax.f32 %v4561, 0.0
      %v4626 = vmax.f32 %v4562, 0.0
      %v4627 = vmax.f32 %v4563, 0.0
      %v4628 = vmax.f32 %v4564, 0.0
      %v4629 = vmax.f32 %v4565, 0.0
      %v4630 = vmax.f32 %v4566, 0.0
      %v4631 = vmax.f32 %v4567, 0.0
      %v4632 = vmax.f32 %v4568, 0.0
      %v4633 = vmax.f32 %v4569, 0.0
      %v4634 = vmax.f32 %v4570, 0.0
      %v4635 = vmax.f32 %v4571, 0.0
      %v4636 = vmax.f32 %v4572, 0.0
      %v4637 = vmax.f32 %v4573, 0.0
      %v4638 = vmax.f32 %v4574, 0.0
      %v4639 = vmax.f32 %v4575, 0.0
      %v4640 = vmax.f32 %v4576, 0.0
      %v4641 = vmax.f32 %v4577, 0.0
      %v4642 = vmax.f32 %v4578, 0.0
      %v4643 = vmax.f32 %v4579, 0.0
      %v4644 = vmax.f32 %v4580, 0.0
      %v4645 = vmax.f32 %v4581, 0.0
      %v4646 = vmax.f32 %v4582, 0.0
      %v4647 = vmax.f32 %v4583, 0.0
      %v4648 = vmax.f32 %v4584, 0.0
      %v4649 = vmax.f32 %v4585, 0.0
      %v4650 = vmax.f32 %v4586, 0.0
      %v4651 = vmax.f32 %v4587, 0.0
      %v4652 = vmax.f32 %v4588, 0.0
      %v4653 = vmax.f32 %v4589, 0.0
      %v4654 = vmax.f32 %v4590, 0.0
      %v4655 = vmax.f32 %v4591, 0.0
      %v4656 = vmax.f32 %v4592, 0.0
      %v4657 = vmax.f32 %v4593, 0.0
      %v4658 = vmax.f32 %v4594, 0.0
      %v4659 = vmax.f32 %v4595, 0.0
      %v4660 = vmax.f32 %v4596, 0.0
      %v4661 = vmax.f32 %v4597, 0.0
      %v4662 = vmax.f32 %v4598, 0.0
      %v4663 = vmax.f32 %v4599, 0.0
      %v4664 = vmax.f32 %v4600, 0.0
      %v4665 = vmax.f32 %v4601, 0.0
      %v4666 = vmax.f32 %v4602, 0.0
      %v4667 = vmax.f32 %v4603, 0.0
      %v4668 = vmax.f32 %v4604, 0.0
      %v4669 = vmax.f32 %v4605, 0.0
      %v4670 = vmax.f32 %v4606, 0.0
      %v4671 = vmax.f32 %v4607, 0.0
      %v4672 = vmax.f32 %v4608, 0.0
      %v4673 = vmax.f32 %v4609, 0.0
      %v4674 = vmax.f32 %v4610, 0.0
      %v4675 = vmax.f32 %v4611, 0.0
      %v4676 = vmax.f32 %v4612, 0.0
      %v4677 = vmax.f32 %v4613, 0.0
      %v4678 = vmax.f32 %v4614, 0.0
      %v4679 = vmax.f32 %v4615, 0.0
      %v4680 = vmax.f32 %v4616, 0.0
      %4681 = vst [vmem:[%s231] sm:$0xff] %v4617
      %4682 = vst [vmem:[%s231 + $0x8] sm:$0xff] %v4618
      %4683 = vst [vmem:[%s231 + $0x10] sm:$0xff] %v4619
      %4684 = vst [vmem:[%s231 + $0x18] sm:$0xff] %v4620
      %4685 = vst [vmem:[%s231 + $0x20] sm:$0xff] %v4621
      %4686 = vst [vmem:[%s231 + $0x28] sm:$0xff] %v4622
      %4687 = vst [vmem:[%s231 + $0x30] sm:$0xff] %v4623
      %4688 = vst [vmem:[%s231 + $0x38] sm:$0xff] %v4624
      %4689 = vst [vmem:[%s231 + $0x40] sm:$0xff] %v4625
      %4690 = vst [vmem:[%s231 + $0x48] sm:$0xff] %v4626
      %4691 = vst [vmem:[%s231 + $0x50] sm:$0xff] %v4627
      %4692 = vst [vmem:[%s231 + $0x58] sm:$0xff] %v4628
      %4693 = vst [vmem:[%s231 + $0x60] sm:$0xff] %v4629
      %4694 = vst [vmem:[%s231 + $0x68] sm:$0xff] %v4630
      %4695 = vst [vmem:[%s231 + $0x70] sm:$0xff] %v4631
      %4696 = vst [vmem:[%s231 + $0x78] sm:$0xff] %v4632
      %4697 = vst [vmem:[%s231 + $0x80] sm:$0xff] %v4633
      %4698 = vst [vmem:[%s231 + $0x88] sm:$0xff] %v4634
      %4699 = vst [vmem:[%s231 + $0x90] sm:$0xff] %v4635
      %4700 = vst [vmem:[%s231 + $0x98] sm:$0xff] %v4636
      %4701 = vst [vmem:[%s231 + $0xa0] sm:$0xff] %v4637
      %4702 = vst [vmem:[%s231 + $0xa8] sm:$0xff] %v4638
      %4703 = vst [vmem:[%s231 + $0xb0] sm:$0xff] %v4639
      %4704 = vst [vmem:[%s231 + $0xb8] sm:$0xff] %v4640
      %4705 = vst [vmem:[%s231 + $0xc0] sm:$0xff] %v4641
      %4706 = vst [vmem:[%s231 + $0xc8] sm:$0xff] %v4642
      %4707 = vst [vmem:[%s231 + $0xd0] sm:$0xff] %v4643
      %4708 = vst [vmem:[%s231 + $0xd8] sm:$0xff] %v4644
      %4709 = vst [vmem:[%s231 + $0xe0] sm:$0xff] %v4645
      %4710 = vst [vmem:[%s231 + $0xe8] sm:$0xff] %v4646
      %4711 = vst [vmem:[%s231 + $0xf0] sm:$0xff] %v4647
      %4712 = vst [vmem:[%s231 + $0xf8] sm:$0xff] %v4648
      %4713 = vst [vmem:[%s231 + $0x100] sm:$0xff] %v4649
      %4714 = vst [vmem:[%s231 + $0x108] sm:$0xff] %v4650
      %4715 = vst [vmem:[%s231 + $0x110] sm:$0xff] %v4651
      %4716 = vst [vmem:[%s231 + $0x118] sm:$0xff] %v4652
      %4717 = vst [vmem:[%s231 + $0x120] sm:$0xff] %v4653
      %4718 = vst [vmem:[%s231 + $0x128] sm:$0xff] %v4654
      %4719 = vst [vmem:[%s231 + $0x130] sm:$0xff] %v4655
      %4720 = vst [vmem:[%s231 + $0x138] sm:$0xff] %v4656
      %4721 = vst [vmem:[%s231 + $0x140] sm:$0xff] %v4657
      %4722 = vst [vmem:[%s231 + $0x148] sm:$0xff] %v4658
      %4723 = vst [vmem:[%s231 + $0x150] sm:$0xff] %v4659
      %4724 = vst [vmem:[%s231 + $0x158] sm:$0xff] %v4660
      %4725 = vst [vmem:[%s231 + $0x160] sm:$0xff] %v4661
      %4726 = vst [vmem:[%s231 + $0x168] sm:$0xff] %v4662
      %4727 = vst [vmem:[%s231 + $0x170] sm:$0xff] %v4663
      %4728 = vst [vmem:[%s231 + $0x178] sm:$0xff] %v4664
      %4729 = vst [vmem:[%s231 + $0x180] sm:$0xff] %v4665
      %4730 = vst [vmem:[%s231 + $0x188] sm:$0xff] %v4666
      %4731 = vst [vmem:[%s231 + $0x190] sm:$0xff] %v4667
      %4732 = vst [vmem:[%s231 + $0x198] sm:$0xff] %v4668
      %4733 = vst [vmem:[%s231 + $0x1a0] sm:$0xff] %v4669
      %4734 = vst [vmem:[%s231 + $0x1a8] sm:$0xff] %v4670
      %4735 = vst [vmem:[%s231 + $0x1b0] sm:$0xff] %v4671
      %4736 = vst [vmem:[%s231 + $0x1b8] sm:$0xff] %v4672
      %4737 = vst [vmem:[%s231 + $0x1c0] sm:$0xff] %v4673
      %4738 = vst [vmem:[%s231 + $0x1c8] sm:$0xff] %v4674
      %4739 = vst [vmem:[%s231 + $0x1d0] sm:$0xff] %v4675
      %4740 = vst [vmem:[%s231 + $0x1d8] sm:$0xff] %v4676
      %4741 = vst [vmem:[%s231 + $0x1e0] sm:$0xff] %v4677
      %4742 = vst [vmem:[%s231 + $0x1e8] sm:$0xff] %v4678
      %4743 = vst [vmem:[%s231 + $0x1f0] sm:$0xff] %v4679
      %4744 = vst [vmem:[%s231 + $0x1f8] sm:$0xff] %v4680
      %s4745 = smul.u32 32, %s16
      %p4746 = scmp.lt.s32.totalorder %s4745, 63
      %s4747 = scalar_select %p4746, %s4745, 63
      %s4748 = smul.addr %s4747, 2
      %s4749 = smul.addr %s4748, 8
      %s4750 = scalar_lea.vmem %s5, %s4749
      // Predicated region
      $region41: #{st_gcn_forward.1} parent=39 // pred_check
        %p4751 = pneg %p144
      $region42: #{st_gcn_forward.1} parent=39 // pred_check_branch
        %4753 = sbr.rel (%p4751) target = $region44
      $region43: #{st_gcn_forward.1} parent=39 // pred_region
        %s4754 = smul.u32 32, %s16
      $region44: #{st_gcn_forward.1} parent=39 // pred_fallthru
        _
    $region40: #{st_gcn_forward.1} parent=5 // pred_fallthru
      _
    %p4755 = scmp.le.s32.totalorder 2, %s11
    // Predicated region
    $region45: #{st_gcn_forward.1} parent=5 // pred_check
      %p4756 = pneg %p4755
    $region46: #{st_gcn_forward.1} parent=5 // pred_check_branch
      %4758 = sbr.rel (%p4756) target = $region48
    $region47: #{st_gcn_forward.1} parent=5 // pred_region
      %s4759 = ssub.s32 %s11, 2
      // Predicated region
      $region49: #{st_gcn_forward.1} parent=47 // pred_check
        %p4760 = pneg %p150
      $region50: #{st_gcn_forward.1} parent=47 // pred_check_branch
        %4762 = sbr.rel (%p4760) target = $region52
      $region51: #{st_gcn_forward.1} parent=47 // pred_region
        %s4763 = smul.u32 32, %s17
        %p4764 = scmp.lt.s32.totalorder %s4763, 63
        %s4765 = scalar_select %p4764, %s4763, 63
        %s4766 = smul.addr %s4765, 2
        %s4767 = smul.addr %s4766, 8
        %s4768 = scalar_lea.vmem %s5, %s4767
      $region52: #{st_gcn_forward.1} parent=47 // pred_fallthru
        _
    $region48: #{st_gcn_forward.1} parent=5 // pred_fallthru
      _
  $region6: #{st_gcn_forward.1} parent=0 // loop_footer
    %s15 = sadd.s32 1, %s11
  $region7: #{st_gcn_forward.1} parent=0 // loop_footer_branch
    %10 = sbr.rel target = $region3
  $region8: #{st_gcn_forward.1} parent=0 // loop_exit
    _

</llo_original>
